<compile_context>
chip_gen: v7x
topology: tpu7x:2x2x1
jax: 0.10.0
libtpu: 0.0.40
codegen_flags: <defaults>
</compile_context>

<pallas_src>
import jax
import jax.numpy as jnp
from jax.experimental import pallas as pl
from jax.experimental.pallas import tpu as pltpu

BN_EPS = 1e-5
NC_PAD = 128    # fc3 output padded to a full 128-lane width (lane-dense stores)


def predictor1_kernel(x_ref, w1_ref, s1_ref, g1_ref, beta1_ref,
                      w2_ref, s2_ref, g2_ref, beta2_ref,
                      w3_ref, b3_ref, out_ref):
    # ---- fc1: int8 weights -> bf16 (VPU), bf16 MXU matmul, f32 accumulation,
    #      per-output-column dequant on the tiny [B, 1024] result ----
    x_bf = x_ref[...].astype(jnp.bfloat16)
    z1 = jnp.dot(x_bf, w1_ref[...].astype(jnp.bfloat16),
                 preferred_element_type=jnp.float32) * s1_ref[...]
    # (fc1 bias omitted: exactly cancelled by training-mode BN mean subtraction)
    mu1 = jnp.mean(z1, axis=0, keepdims=True)
    var1 = jnp.mean((z1 - mu1) * (z1 - mu1), axis=0, keepdims=True)  # biased var
    h1 = g1_ref[...] * (z1 - mu1) * jax.lax.rsqrt(var1 + BN_EPS) + beta1_ref[...]
    h1 = jnp.maximum(h1, 0.0)

    # ---- fc2: same int8 -> bf16 recipe ----
    z2 = jnp.dot(h1.astype(jnp.bfloat16), w2_ref[...].astype(jnp.bfloat16),
                 preferred_element_type=jnp.float32) * s2_ref[...]
    mu2 = jnp.mean(z2, axis=0, keepdims=True)
    var2 = jnp.mean((z2 - mu2) * (z2 - mu2), axis=0, keepdims=True)
    h2 = g2_ref[...] * (z2 - mu2) * jax.lax.rsqrt(var2 + BN_EPS) + beta2_ref[...]
    h2 = jnp.maximum(h2, 0.0)

    # ---- fc3 (lane-padded to 128 output columns) ----
    out_ref[...] = jnp.dot(h2.astype(jnp.bfloat16), w3_ref[...],
                           preferred_element_type=jnp.float32) + b3_ref[...]


@jax.jit
def predictor1_forward(x, params):
    """x: [B, 2048] float32.  params: dict from init_params."""
    B, d_in = x.shape
    h1_dim = params["w1_q"].shape[1]          # 1024
    h2_dim = params["w2_q"].shape[1]          # 128
    num_class = params["b3"].shape[1]         # static (shape-derived)

    grid_spec = pltpu.PrefetchScalarGridSpec(
        num_scalar_prefetch=0,
        grid=(1,),                                            # single shot
        in_specs=[
            pl.BlockSpec((B, d_in), lambda i: (0, 0)),        # x (f32)
            pl.BlockSpec((d_in, h1_dim), lambda i: (0, 0)),   # w1 int8
            pl.BlockSpec((1, h1_dim), lambda i: (0, 0)),      # s1
            pl.BlockSpec((1, h1_dim), lambda i: (0, 0)),      # gamma1
            pl.BlockSpec((1, h1_dim), lambda i: (0, 0)),      # beta1
            pl.BlockSpec((h1_dim, h2_dim), lambda i: (0, 0)), # w2 int8
            pl.BlockSpec((1, h2_dim), lambda i: (0, 0)),      # s2
            pl.BlockSpec((1, h2_dim), lambda i: (0, 0)),      # gamma2
            pl.BlockSpec((1, h2_dim), lambda i: (0, 0)),      # beta2
            pl.BlockSpec((h2_dim, NC_PAD), lambda i: (0, 0)), # w3 (bf16, padded)
            pl.BlockSpec((1, NC_PAD), lambda i: (0, 0)),      # b3 (padded)
        ],
        out_specs=pl.BlockSpec((B, NC_PAD), lambda i: (0, 0)),
    )

    out_padded = pl.pallas_call(
        predictor1_kernel,
        out_shape=jax.ShapeDtypeStruct((B, NC_PAD), jnp.float32),
        grid_spec=grid_spec,
        compiler_params=pltpu.CompilerParams(
            dimension_semantics=("arbitrary",),
            vmem_limit_bytes=24 << 20,   # ~9 MiB actual; safe on v7x's 64 MiB
        ),
    )(x, params["w1_q"], params["s1"], params["g1"], params["beta1"],
      params["w2_q"], params["s2"], params["g2"], params["beta2"],
      params["w3_pad"], params["b3_pad"])

    return out_padded[:, :num_class]


def _quantize_per_col_int8(w):
    """Symmetric per-output-column int8 quantization of an [in, out] weight."""
    amax = jnp.max(jnp.abs(w), axis=0, keepdims=True)
    scale = jnp.where(amax == 0.0, 1.0, amax / 127.0).astype(jnp.float32)
    w_q = jnp.clip(jnp.round(w / scale), -127, 127).astype(jnp.int8)
    return w_q, scale


def init_params(key, num_class):
    """Deterministic synthetic parameters matching Predictor1.__init__ shapes.

    w1/w2 are stored transposed as [in, out] and int8-quantized per output
    column (dequant scale applied in-kernel on the matmul result).  The fc3
    weight/bias are pre-padded to 128 output lanes once here.  b1/b2 are kept
    for reference fidelity but unused by the kernel (training-mode BN cancels
    them exactly).
    """
    ks = jax.random.split(key, 6)

    def linear(kw, kb, fan_in, fan_out):
        bound = 1.0 / jnp.sqrt(fan_in)
        w = jax.random.uniform(kw, (fan_in, fan_out), jnp.float32, -bound, bound)
        b = jax.random.uniform(kb, (1, fan_out), jnp.float32, -bound, bound)
        return w, b

    w1, b1 = linear(ks[0], ks[1], 2048, 1024)
    w2, b2 = linear(ks[2], ks[3], 1024, 128)
    w3, b3 = linear(ks[4], ks[5], 128, num_class)

    w1_q, s1 = _quantize_per_col_int8(w1)
    w2_q, s2 = _quantize_per_col_int8(w2)

    w3_pad = jnp.zeros((128, NC_PAD), jnp.bfloat16).at[:, :num_class].set(
        w3.astype(jnp.bfloat16))
    b3_pad = jnp.zeros((1, NC_PAD), jnp.float32).at[:, :num_class].set(b3)

    return {
        "w1_q": w1_q, "s1": s1, "b1": b1,
        "g1": jnp.ones((1, 1024), jnp.float32), "beta1": jnp.zeros((1, 1024), jnp.float32),
        "w2_q": w2_q, "s2": s2, "b2": b2,
        "g2": jnp.ones((1, 128), jnp.float32), "beta2": jnp.zeros((1, 128), jnp.float32),
        "w3_pad": w3_pad, "b3_pad": b3_pad, "b3": b3,
    }


def predictor1_ref(x, p):
    """Pure-JAX reference (PyTorch semantics, incl. b1/b2 biases) using the same
    int8 weights / bf16-matmul / f32-accumulation recipe as the kernel."""
    num_class = p["b3"].shape[1]

    def bn(h):
        mu = jnp.mean(h, axis=0, keepdims=True)
        var = jnp.mean((h - mu) ** 2, axis=0, keepdims=True)
        return (h - mu) * jax.lax.rsqrt(var + BN_EPS)

    def mm_q(a, w_q, s):
        return jnp.dot(a.astype(jnp.bfloat16), w_q.astype(jnp.bfloat16),
                       preferred_element_type=jnp.float32) * s

    h = mm_q(x, p["w1_q"], p["s1"]) + p["b1"]     # bias kept: BN cancels it exactly
    h = jnp.maximum(p["g1"] * bn(h) + p["beta1"], 0.0)
    h = mm_q(h, p["w2_q"], p["s2"]) + p["b2"]
    h = jnp.maximum(p["g2"] * bn(h) + p["beta2"], 0.0)
    out = jnp.dot(h.astype(jnp.bfloat16), p["w3_pad"],
                  preferred_element_type=jnp.float32) + p["b3_pad"]
    return out[:, :num_class]


if __name__ == "__main__":
    key = jax.random.PRNGKey(0)
    k_x, k_p = jax.random.split(key)

    B = 8
    NUM_CLASS = 10
    x = jax.random.normal(k_x, (B, 2048), jnp.float32)
    params = init_params(k_p, NUM_CLASS)

    out = predictor1_forward(x, params)
    out = jax.block_until_ready(out)

    ref = predictor1_ref(x, params)
    assert out.shape == (B, NUM_CLASS)
    assert jnp.allclose(out, ref, atol=2e-3, rtol=2e-3), (
        f"mismatch vs JAX reference, max err {jnp.max(jnp.abs(out - ref))}")

    print("KERNEL_OK")
</pallas_src>

<mosaic_0001>
module attributes {stable_mosaic.version = 11 : i64} {
  func.func @predictor1_kernel(%arg0: i32, %arg1: memref<8x2048xf32, #tpu.memory_space<vmem>>, %arg2: memref<2048x1024xi8, #tpu.memory_space<vmem>>, %arg3: memref<1x1024xf32, #tpu.memory_space<vmem>>, %arg4: memref<1x1024xf32, #tpu.memory_space<vmem>>, %arg5: memref<1x1024xf32, #tpu.memory_space<vmem>>, %arg6: memref<1024x128xi8, #tpu.memory_space<vmem>>, %arg7: memref<1x128xf32, #tpu.memory_space<vmem>>, %arg8: memref<1x128xf32, #tpu.memory_space<vmem>>, %arg9: memref<1x128xf32, #tpu.memory_space<vmem>>, %arg10: memref<128x128xbf16, #tpu.memory_space<vmem>>, %arg11: memref<1x128xf32, #tpu.memory_space<vmem>>, %arg12: memref<8x128xf32, #tpu.memory_space<vmem>>) attributes {dimension_semantics = [#tpu.dimension_semantics<arbitrary>], iteration_bounds = array<i64: 1>, scalar_prefetch = 0 : i64, scratch_operands = 0 : i64, tpu.core_type = #tpu.core_type<tc>, window_params = [{pipeline_mode = #tpu.pipeline_mode<synchronous>, transform_indices = @transform_0, window_bounds = array<i64: 8, 2048>}, {pipeline_mode = #tpu.pipeline_mode<synchronous>, transform_indices = @transform_1, window_bounds = array<i64: 2048, 1024>}, {pipeline_mode = #tpu.pipeline_mode<synchronous>, transform_indices = @transform_2, window_bounds = array<i64: 1, 1024>}, {pipeline_mode = #tpu.pipeline_mode<synchronous>, transform_indices = @transform_3, window_bounds = array<i64: 1, 1024>}, {pipeline_mode = #tpu.pipeline_mode<synchronous>, transform_indices = @transform_4, window_bounds = array<i64: 1, 1024>}, {pipeline_mode = #tpu.pipeline_mode<synchronous>, transform_indices = @transform_5, window_bounds = array<i64: 1024, 128>}, {pipeline_mode = #tpu.pipeline_mode<synchronous>, transform_indices = @transform_6, window_bounds = array<i64: 1, 128>}, {pipeline_mode = #tpu.pipeline_mode<synchronous>, transform_indices = @transform_7, window_bounds = array<i64: 1, 128>}, {pipeline_mode = #tpu.pipeline_mode<synchronous>, transform_indices = @transform_8, window_bounds = array<i64: 1, 128>}, {pipeline_mode = #tpu.pipeline_mode<synchronous>, transform_indices = @transform_9, window_bounds = array<i64: 128, 128>}, {pipeline_mode = #tpu.pipeline_mode<synchronous>, transform_indices = @transform_10, window_bounds = array<i64: 1, 128>}, {pipeline_mode = #tpu.pipeline_mode<synchronous>, transform_indices = @transform_11, window_bounds = array<i64: 8, 128>}]} {
    %c0 = arith.constant 0 : index
    %c0_0 = arith.constant 0 : index
    %0 = vector.load %arg1[%c0, %c0_0] : memref<8x2048xf32, #tpu.memory_space<vmem>>, vector<8x2048xf32>
    %1 = arith.truncf %0 : vector<8x2048xf32> to vector<8x2048xbf16>
    %c0_1 = arith.constant 0 : index
    %c0_2 = arith.constant 0 : index
    %2 = vector.load %arg2[%c0_1, %c0_2] : memref<2048x1024xi8, #tpu.memory_space<vmem>>, vector<2048x1024xi8>
    %3 = arith.sitofp %2 : vector<2048x1024xi8> to vector<2048x1024xbf16>
    %cst = arith.constant dense<0.000000e+00> : vector<8x1024xf32>
    %4 = tpu.matmul %1, %3, %cst {dimension_numbers = #tpu.dot_dimension_numbers<[1], [0], [0], [1], [0, 0, 1, 1], [], []>} : vector<8x2048xbf16>, vector<2048x1024xbf16>, vector<8x1024xf32> -> vector<8x1024xf32>
    %c0_3 = arith.constant 0 : index
    %c0_4 = arith.constant 0 : index
    %5 = vector.load %arg3[%c0_3, %c0_4] : memref<1x1024xf32, #tpu.memory_space<vmem>>, vector<1x1024xf32>
    %6 = vector.broadcast %5 : vector<1x1024xf32> to vector<8x1024xf32>
    %7 = arith.mulf %4, %6 : vector<8x1024xf32>
    %cst_5 = arith.constant dense<0.000000e+00> : vector<1024xf32>
    %8 = vector.multi_reduction <add>, %7, %cst_5 [0] : vector<8x1024xf32> to vector<1024xf32>
    %9 = vector.shape_cast %8 : vector<1024xf32> to vector<1x1024xf32>
    %cst_6 = arith.constant 8.000000e+00 : f32
    %10 = vector.broadcast %cst_6 : f32 to vector<1x1024xf32>
    %11 = arith.divf %9, %10 : vector<1x1024xf32>
    %12 = vector.broadcast %11 : vector<1x1024xf32> to vector<8x1024xf32>
    %13 = arith.subf %7, %12 : vector<8x1024xf32>
    %14 = vector.broadcast %11 : vector<1x1024xf32> to vector<8x1024xf32>
    %15 = arith.subf %7, %14 : vector<8x1024xf32>
    %16 = arith.mulf %13, %15 : vector<8x1024xf32>
    %cst_7 = arith.constant dense<0.000000e+00> : vector<1024xf32>
    %17 = vector.multi_reduction <add>, %16, %cst_7 [0] : vector<8x1024xf32> to vector<1024xf32>
    %18 = vector.shape_cast %17 : vector<1024xf32> to vector<1x1024xf32>
    %cst_8 = arith.constant 8.000000e+00 : f32
    %19 = vector.broadcast %cst_8 : f32 to vector<1x1024xf32>
    %20 = arith.divf %18, %19 : vector<1x1024xf32>
    %c0_9 = arith.constant 0 : index
    %c0_10 = arith.constant 0 : index
    %21 = vector.load %arg4[%c0_9, %c0_10] : memref<1x1024xf32, #tpu.memory_space<vmem>>, vector<1x1024xf32>
    %22 = vector.broadcast %11 : vector<1x1024xf32> to vector<8x1024xf32>
    %23 = arith.subf %7, %22 : vector<8x1024xf32>
    %24 = vector.broadcast %21 : vector<1x1024xf32> to vector<8x1024xf32>
    %25 = arith.mulf %24, %23 : vector<8x1024xf32>
    %cst_11 = arith.constant 9.99999974E-6 : f32
    %26 = vector.broadcast %cst_11 : f32 to vector<1x1024xf32>
    %27 = arith.addf %20, %26 : vector<1x1024xf32>
    %28 = math.rsqrt %27 : vector<1x1024xf32>
    %29 = vector.broadcast %28 : vector<1x1024xf32> to vector<8x1024xf32>
    %30 = arith.mulf %25, %29 : vector<8x1024xf32>
    %c0_12 = arith.constant 0 : index
    %c0_13 = arith.constant 0 : index
    %31 = vector.load %arg5[%c0_12, %c0_13] : memref<1x1024xf32, #tpu.memory_space<vmem>>, vector<1x1024xf32>
    %32 = vector.broadcast %31 : vector<1x1024xf32> to vector<8x1024xf32>
    %33 = arith.addf %30, %32 : vector<8x1024xf32>
    %cst_14 = arith.constant 0.000000e+00 : f32
    %34 = vector.broadcast %cst_14 : f32 to vector<8x1024xf32>
    %35 = arith.maximumf %33, %34 : vector<8x1024xf32>
    %36 = arith.truncf %35 : vector<8x1024xf32> to vector<8x1024xbf16>
    %c0_15 = arith.constant 0 : index
    %c0_16 = arith.constant 0 : index
    %37 = vector.load %arg6[%c0_15, %c0_16] : memref<1024x128xi8, #tpu.memory_space<vmem>>, vector<1024x128xi8>
    %38 = arith.sitofp %37 : vector<1024x128xi8> to vector<1024x128xbf16>
    %cst_17 = arith.constant dense<0.000000e+00> : vector<8x128xf32>
    %39 = tpu.matmul %36, %38, %cst_17 {dimension_numbers = #tpu.dot_dimension_numbers<[1], [0], [0], [1], [0, 0, 1, 1], [], []>} : vector<8x1024xbf16>, vector<1024x128xbf16>, vector<8x128xf32> -> vector<8x128xf32>
    %c0_18 = arith.constant 0 : index
    %c0_19 = arith.constant 0 : index
    %40 = vector.load %arg7[%c0_18, %c0_19] : memref<1x128xf32, #tpu.memory_space<vmem>>, vector<1x128xf32>
    %41 = vector.broadcast %40 : vector<1x128xf32> to vector<8x128xf32>
    %42 = arith.mulf %39, %41 : vector<8x128xf32>
    %cst_20 = arith.constant dense<0.000000e+00> : vector<128xf32>
    %43 = vector.multi_reduction <add>, %42, %cst_20 [0] : vector<8x128xf32> to vector<128xf32>
    %44 = vector.shape_cast %43 : vector<128xf32> to vector<1x128xf32>
    %cst_21 = arith.constant 8.000000e+00 : f32
    %45 = vector.broadcast %cst_21 : f32 to vector<1x128xf32>
    %46 = arith.divf %44, %45 : vector<1x128xf32>
    %47 = vector.broadcast %46 : vector<1x128xf32> to vector<8x128xf32>
    %48 = arith.subf %42, %47 : vector<8x128xf32>
    %49 = vector.broadcast %46 : vector<1x128xf32> to vector<8x128xf32>
    %50 = arith.subf %42, %49 : vector<8x128xf32>
    %51 = arith.mulf %48, %50 : vector<8x128xf32>
    %cst_22 = arith.constant dense<0.000000e+00> : vector<128xf32>
    %52 = vector.multi_reduction <add>, %51, %cst_22 [0] : vector<8x128xf32> to vector<128xf32>
    %53 = vector.shape_cast %52 : vector<128xf32> to vector<1x128xf32>
    %cst_23 = arith.constant 8.000000e+00 : f32
    %54 = vector.broadcast %cst_23 : f32 to vector<1x128xf32>
    %55 = arith.divf %53, %54 : vector<1x128xf32>
    %c0_24 = arith.constant 0 : index
    %c0_25 = arith.constant 0 : index
    %56 = vector.load %arg8[%c0_24, %c0_25] : memref<1x128xf32, #tpu.memory_space<vmem>>, vector<1x128xf32>
    %57 = vector.broadcast %46 : vector<1x128xf32> to vector<8x128xf32>
    %58 = arith.subf %42, %57 : vector<8x128xf32>
    %59 = vector.broadcast %56 : vector<1x128xf32> to vector<8x128xf32>
    %60 = arith.mulf %59, %58 : vector<8x128xf32>
    %cst_26 = arith.constant 9.99999974E-6 : f32
    %61 = vector.broadcast %cst_26 : f32 to vector<1x128xf32>
    %62 = arith.addf %55, %61 : vector<1x128xf32>
    %63 = math.rsqrt %62 : vector<1x128xf32>
    %64 = vector.broadcast %63 : vector<1x128xf32> to vector<8x128xf32>
    %65 = arith.mulf %60, %64 : vector<8x128xf32>
    %c0_27 = arith.constant 0 : index
    %c0_28 = arith.constant 0 : index
    %66 = vector.load %arg9[%c0_27, %c0_28] : memref<1x128xf32, #tpu.memory_space<vmem>>, vector<1x128xf32>
    %67 = vector.broadcast %66 : vector<1x128xf32> to vector<8x128xf32>
    %68 = arith.addf %65, %67 : vector<8x128xf32>
    %cst_29 = arith.constant 0.000000e+00 : f32
    %69 = vector.broadcast %cst_29 : f32 to vector<8x128xf32>
    %70 = arith.maximumf %68, %69 : vector<8x128xf32>
    %71 = arith.truncf %70 : vector<8x128xf32> to vector<8x128xbf16>
    %c0_30 = arith.constant 0 : index
    %c0_31 = arith.constant 0 : index
    %72 = vector.load %arg10[%c0_30, %c0_31] : memref<128x128xbf16, #tpu.memory_space<vmem>>, vector<128x128xbf16>
    %cst_32 = arith.constant dense<0.000000e+00> : vector<8x128xf32>
    %73 = tpu.matmul %71, %72, %cst_32 {dimension_numbers = #tpu.dot_dimension_numbers<[1], [0], [0], [1], [0, 0, 1, 1], [], []>} : vector<8x128xbf16>, vector<128x128xbf16>, vector<8x128xf32> -> vector<8x128xf32>
    %c0_33 = arith.constant 0 : index
    %c0_34 = arith.constant 0 : index
    %74 = vector.load %arg11[%c0_33, %c0_34] : memref<1x128xf32, #tpu.memory_space<vmem>>, vector<1x128xf32>
    %75 = vector.broadcast %74 : vector<1x128xf32> to vector<8x128xf32>
    %76 = arith.addf %73, %75 : vector<8x128xf32>
    %c0_35 = arith.constant 0 : index
    %c0_36 = arith.constant 0 : index
    %77 = vector.load %arg12[%c0_35, %c0_36] : memref<8x128xf32, #tpu.memory_space<vmem>>, vector<8x128xf32>
    tpu.vector_store %arg12[%c0_35, %c0_36], %76 {strides = array<i32>} : memref<8x128xf32, #tpu.memory_space<vmem>>, vector<8x128xf32>,
    return
  }
  func.func @transform_0(%arg0: i32) -> (i32, i32) {
    %c0_i32 = arith.constant 0 : i32
    %c0_i32_0 = arith.constant 0 : i32
    %c0_i32_1 = arith.constant 0 : i32
    return %c0_i32, %c0_i32_0 : i32, i32
  }
  func.func @transform_1(%arg0: i32) -> (i32, i32) {
    %c0_i32 = arith.constant 0 : i32
    %c0_i32_0 = arith.constant 0 : i32
    %c0_i32_1 = arith.constant 0 : i32
    return %c0_i32, %c0_i32_0 : i32, i32
  }
  func.func @transform_2(%arg0: i32) -> (i32, i32) {
    %c0_i32 = arith.constant 0 : i32
    %c0_i32_0 = arith.constant 0 : i32
    %c0_i32_1 = arith.constant 0 : i32
    return %c0_i32, %c0_i32_0 : i32, i32
  }
  func.func @transform_3(%arg0: i32) -> (i32, i32) {
    %c0_i32 = arith.constant 0 : i32
    %c0_i32_0 = arith.constant 0 : i32
    %c0_i32_1 = arith.constant 0 : i32
    return %c0_i32, %c0_i32_0 : i32, i32
  }
  func.func @transform_4(%arg0: i32) -> (i32, i32) {
    %c0_i32 = arith.constant 0 : i32
    %c0_i32_0 = arith.constant 0 : i32
    %c0_i32_1 = arith.constant 0 : i32
    return %c0_i32, %c0_i32_0 : i32, i32
  }
  func.func @transform_5(%arg0: i32) -> (i32, i32) {
    %c0_i32 = arith.constant 0 : i32
    %c0_i32_0 = arith.constant 0 : i32
    %c0_i32_1 = arith.constant 0 : i32
    return %c0_i32, %c0_i32_0 : i32, i32
  }
  func.func @transform_6(%arg0: i32) -> (i32, i32) {
    %c0_i32 = arith.constant 0 : i32
    %c0_i32_0 = arith.constant 0 : i32
    %c0_i32_1 = arith.constant 0 : i32
    return %c0_i32, %c0_i32_0 : i32, i32
  }
  func.func @transform_7(%arg0: i32) -> (i32, i32) {
    %c0_i32 = arith.constant 0 : i32
    %c0_i32_0 = arith.constant 0 : i32
    %c0_i32_1 = arith.constant 0 : i32
    return %c0_i32, %c0_i32_0 : i32, i32
  }
  func.func @transform_8(%arg0: i32) -> (i32, i32) {
    %c0_i32 = arith.constant 0 : i32
    %c0_i32_0 = arith.constant 0 : i32
    %c0_i32_1 = arith.constant 0 : i32
    return %c0_i32, %c0_i32_0 : i32, i32
  }
  func.func @transform_9(%arg0: i32) -> (i32, i32) {
    %c0_i32 = arith.constant 0 : i32
    %c0_i32_0 = arith.constant 0 : i32
    %c0_i32_1 = arith.constant 0 : i32
    return %c0_i32, %c0_i32_0 : i32, i32
  }
  func.func @transform_10(%arg0: i32) -> (i32, i32) {
    %c0_i32 = arith.constant 0 : i32
    %c0_i32_0 = arith.constant 0 : i32
    %c0_i32_1 = arith.constant 0 : i32
    return %c0_i32, %c0_i32_0 : i32, i32
  }
  func.func @transform_11(%arg0: i32) -> (i32, i32) {
    %c0_i32 = arith.constant 0 : i32
    %c0_i32_0 = arith.constant 0 : i32
    %c0_i32_1 = arith.constant 0 : i32
    return %c0_i32, %c0_i32_0 : i32, i32
  }
}

</mosaic_0001>

<llo_original>
// kernel: predictor1_forward.1
$region0: #{predictor1_forward.1}
  #allocation0 [shape = 'u32[]', space=smem, size = 0x4, offset = 0x4, fixed_abs, tag = 'smem constant byte address 0x4 - core index']
  #allocation1 [shape = 'u32[144,128]{1,0:T(1,128)}', space=vmem, size = 0x12000, scoped, tag = 'internal scratch']
  %s0 = inlined_call_operand.hbm [shape: f32[8,2048], index: 0, kind: input, shape index: {}]
  %s1 = inlined_call_operand.hbm [shape: s8[2048,1024], index: 1, kind: input, shape index: {}]
  %s2 = inlined_call_operand.hbm [shape: f32[1,1024], index: 2, kind: input, shape index: {}]
  %s3 = inlined_call_operand.hbm [shape: f32[1,1024], index: 3, kind: input, shape index: {}]
  %s4 = inlined_call_operand.hbm [shape: f32[1,1024], index: 4, kind: input, shape index: {}]
  %s5 = inlined_call_operand.hbm [shape: s8[1024,128], index: 5, kind: input, shape index: {}]
  %s6 = inlined_call_operand.hbm [shape: f32[1,128], index: 6, kind: input, shape index: {}]
  %s7 = inlined_call_operand.hbm [shape: f32[1,128], index: 7, kind: input, shape index: {}]
  %s8 = inlined_call_operand.hbm [shape: f32[1,128], index: 8, kind: input, shape index: {}]
  %s9 = inlined_call_operand.hbm [shape: bf16[128,128], index: 9, kind: input, shape index: {}]
  %s10 = inlined_call_operand.hbm [shape: f32[1,128], index: 10, kind: input, shape index: {}]
  %s11 = inlined_call_operand.hbm [shape: f32[8,128], index: 11, kind: output, shape index: {}]
  %s12 = sld [smem:[#allocation0]]
  $region98: #{predictor1_forward.1} parent=0
    _
  %s14 = ssub.s32 1, %s12
  %s15 = scalar_select 0, %s14, %s12
  $region1: #{predictor1_forward.1} parent=0
    #allocation2 [shape = 'u8[65536]{0}', space=vmem, size = 0x10000, scoped, tag = 'input window, operand 0, single buffered']
    #allocation3 [shape = 's32[1]{0}', space=sflag, size = 0x4, scoped, tag = 'scoped memory for predictor1_forward.1']
    #allocation4 [shape = 's32[1]{0}', space=sflag, size = 0x4, scoped, tag = 'scoped memory for predictor1_forward.1']
    #allocation5 [shape = 'u8[2097152]{0}', space=vmem, size = 0x200000, scoped, tag = 'input window, operand 1, single buffered']
    #allocation6 [shape = 's32[1]{0}', space=sflag, size = 0x4, scoped, tag = 'scoped memory for predictor1_forward.1']
    #allocation7 [shape = 'u8[4096]{0}', space=vmem, size = 0x1000, scoped, tag = 'input window, operand 2, single buffered']
    #allocation8 [shape = 'u8[4096]{0}', space=vmem, size = 0x1000, scoped, tag = 'input window, operand 3, single buffered']
    #allocation9 [shape = 's32[1]{0}', space=sflag, size = 0x4, scoped, tag = 'scoped memory for predictor1_forward.1']
    #allocation10 [shape = 'u8[4096]{0}', space=vmem, size = 0x1000, scoped, tag = 'input window, operand 4, single buffered']
    #allocation11 [shape = 'u8[131072]{0}', space=vmem, size = 0x20000, scoped, tag = 'input window, operand 5, single buffered']
    #allocation12 [shape = 's32[1]{0}', space=sflag, size = 0x4, scoped, tag = 'scoped memory for predictor1_forward.1']
    #allocation13 [shape = 'u8[512]{0}', space=vmem, size = 0x400, scoped, tag = 'input window, operand 6, single buffered']
    #allocation14 [shape = 'u8[512]{0}', space=vmem, size = 0x400, scoped, tag = 'input window, operand 7, single buffered']
    #allocation15 [shape = 's32[1]{0}', space=sflag, size = 0x4, scoped, tag = 'scoped memory for predictor1_forward.1']
    #allocation16 [shape = 'u8[512]{0}', space=vmem, size = 0x400, scoped, tag = 'input window, operand 8, single buffered']
    #allocation17 [shape = 'u8[32768]{0}', space=vmem, size = 0x8000, scoped, tag = 'input window, operand 9, single buffered']
    #allocation18 [shape = 's32[1]{0}', space=sflag, size = 0x4, scoped, tag = 'scoped memory for predictor1_forward.1']
    #allocation19 [shape = 'u8[512]{0}', space=vmem, size = 0x400, scoped, tag = 'input window, operand 10, single buffered']
    #allocation20 [shape = 'u8[4096]{0}', space=vmem, size = 0x1000, scoped, tag = 'output window, operand 0, single buffered']
    %16 = vsyncpa [#allocation3], 0
    %17 = vsyncpa [#allocation6], 0
    %18 = vsyncpa [#allocation9], 0
    %19 = vsyncpa [#allocation12], 0
    %20 = vsyncpa [#allocation15], 0
    %21 = vsyncpa [#allocation18], 0
    %22 = vsyncpa [#allocation4], 0
    // Predicated region
    $region2: #{predictor1_forward.1} parent=1 // pred_check
      _
    $region3: #{predictor1_forward.1} parent=1 // pred_check_branch
      %24 = sbr.rel (0) target = $region5
    $region4: #{predictor1_forward.1} parent=1 // pred_region
      %s26 = ssub.s32 2048, 2048
      %27 = vsyncadd [#allocation3], %s26
      %s29 = sshll.u32 [#allocation2], 4
      %s30 = int_to_ptr.vmem [resolvable:$true] %s29
      %32 = dma.hbm_to_vmem [thread:$0]  %s0, 2048, %s30, [#allocation3]
    $region5: #{predictor1_forward.1} parent=1 // pred_fallthru
      _
    // Predicated region
    $region6: #{predictor1_forward.1} parent=1 // pred_check
      _
    $region7: #{predictor1_forward.1} parent=1 // pred_check_branch
      %34 = sbr.rel (0) target = $region9
    $region8: #{predictor1_forward.1} parent=1 // pred_region
      %s36 = ssub.s32 65536, 65536
      %37 = vsyncadd [#allocation6], %s36
      %s38 = sshll.u32 [#allocation5], 4
      %s39 = int_to_ptr.vmem [resolvable:$true] %s38
      %44 = dma.hbm_to_vmem [thread:$0]  %s1, 65536, %s39, [#allocation6], 1024, 1024, 64
    $region9: #{predictor1_forward.1} parent=1 // pred_fallthru
      _
    // Predicated region
    $region10: #{predictor1_forward.1} parent=1 // pred_check
      _
    $region11: #{predictor1_forward.1} parent=1 // pred_check_branch
      %46 = sbr.rel (0) target = $region13
    $region12: #{predictor1_forward.1} parent=1 // pred_region
      %s48 = ssub.s32 128, 128
      %49 = vsyncadd [#allocation6], %s48
      %s51 = sshll.u32 [#allocation7], 4
      %s52 = int_to_ptr.vmem [resolvable:$true] %s51
      %54 = dma.hbm_to_vmem [thread:$0]  %s2, 128, %s52, [#allocation6]
    $region13: #{predictor1_forward.1} parent=1 // pred_fallthru
      _
    // Predicated region
    $region14: #{predictor1_forward.1} parent=1 // pred_check
      _
    $region15: #{predictor1_forward.1} parent=1 // pred_check_branch
      %56 = sbr.rel (0) target = $region17
    $region16: #{predictor1_forward.1} parent=1 // pred_region
      %s58 = ssub.s32 128, 128
      %59 = vsyncadd [#allocation9], %s58
      %s61 = sshll.u32 [#allocation8], 4
      %s62 = int_to_ptr.vmem [resolvable:$true] %s61
      %64 = dma.hbm_to_vmem [thread:$0]  %s3, 128, %s62, [#allocation9]
    $region17: #{predictor1_forward.1} parent=1 // pred_fallthru
      _
    // Predicated region
    $region18: #{predictor1_forward.1} parent=1 // pred_check
      _
    $region19: #{predictor1_forward.1} parent=1 // pred_check_branch
      %66 = sbr.rel (0) target = $region21
    $region20: #{predictor1_forward.1} parent=1 // pred_region
      %s68 = ssub.s32 128, 128
      %69 = vsyncadd [#allocation9], %s68
      %s71 = sshll.u32 [#allocation10], 4
      %s72 = int_to_ptr.vmem [resolvable:$true] %s71
      %74 = dma.hbm_to_vmem [thread:$0]  %s4, 128, %s72, [#allocation9]
    $region21: #{predictor1_forward.1} parent=1 // pred_fallthru
      _
    // Predicated region
    $region22: #{predictor1_forward.1} parent=1 // pred_check
      _
    $region23: #{predictor1_forward.1} parent=1 // pred_check_branch
      %76 = sbr.rel (0) target = $region25
    $region24: #{predictor1_forward.1} parent=1 // pred_region
      %s78 = ssub.s32 4096, 4096
      %79 = vsyncadd [#allocation12], %s78
      %s80 = sshll.u32 [#allocation11], 4
      %s81 = int_to_ptr.vmem [resolvable:$true] %s80
      %86 = dma.hbm_to_vmem [thread:$0]  %s5, 4096, %s81, [#allocation12], 128, 128, 8
    $region25: #{predictor1_forward.1} parent=1 // pred_fallthru
      _
    // Predicated region
    $region26: #{predictor1_forward.1} parent=1 // pred_check
      _
    $region27: #{predictor1_forward.1} parent=1 // pred_check_branch
      %88 = sbr.rel (0) target = $region29
    $region28: #{predictor1_forward.1} parent=1 // pred_region
      %s90 = ssub.s32 16, 16
      %91 = vsyncadd [#allocation12], %s90
      %s93 = sshll.u32 [#allocation13], 4
      %s94 = int_to_ptr.vmem [resolvable:$true] %s93
      %96 = dma.hbm_to_vmem [thread:$0]  %s6, 16, %s94, [#allocation12]
    $region29: #{predictor1_forward.1} parent=1 // pred_fallthru
      _
    // Predicated region
    $region30: #{predictor1_forward.1} parent=1 // pred_check
      _
    $region31: #{predictor1_forward.1} parent=1 // pred_check_branch
      %98 = sbr.rel (0) target = $region33
    $region32: #{predictor1_forward.1} parent=1 // pred_region
      %s100 = ssub.s32 16, 16
      %101 = vsyncadd [#allocation15], %s100
      %s103 = sshll.u32 [#allocation14], 4
      %s104 = int_to_ptr.vmem [resolvable:$true] %s103
      %106 = dma.hbm_to_vmem [thread:$0]  %s7, 16, %s104, [#allocation15]
    $region33: #{predictor1_forward.1} parent=1 // pred_fallthru
      _
    // Predicated region
    $region34: #{predictor1_forward.1} parent=1 // pred_check
      _
    $region35: #{predictor1_forward.1} parent=1 // pred_check_branch
      %108 = sbr.rel (0) target = $region37
    $region36: #{predictor1_forward.1} parent=1 // pred_region
      %s110 = ssub.s32 16, 16
      %111 = vsyncadd [#allocation15], %s110
      %s113 = sshll.u32 [#allocation16], 4
      %s114 = int_to_ptr.vmem [resolvable:$true] %s113
      %116 = dma.hbm_to_vmem [thread:$0]  %s8, 16, %s114, [#allocation15]
    $region37: #{predictor1_forward.1} parent=1 // pred_fallthru
      _
    // Predicated region
    $region38: #{predictor1_forward.1} parent=1 // pred_check
      _
    $region39: #{predictor1_forward.1} parent=1 // pred_check_branch
      %118 = sbr.rel (0) target = $region41
    $region40: #{predictor1_forward.1} parent=1 // pred_region
      %s120 = ssub.s32 1024, 1024
      %121 = vsyncadd [#allocation18], %s120
      %s122 = sshll.u32 [#allocation17], 4
      %s123 = int_to_ptr.vmem [resolvable:$true] %s122
      %128 = dma.hbm_to_vmem [thread:$0]  %s9, 1024, %s123, [#allocation18], 64, 64, 4
    $region41: #{predictor1_forward.1} parent=1 // pred_fallthru
      _
    // Predicated region
    $region42: #{predictor1_forward.1} parent=1 // pred_check
      _
    $region43: #{predictor1_forward.1} parent=1 // pred_check_branch
      %130 = sbr.rel (0) target = $region45
    $region44: #{predictor1_forward.1} parent=1 // pred_region
      %s132 = ssub.s32 16, 16
      %133 = vsyncadd [#allocation18], %s132
      %s135 = sshll.u32 [#allocation19], 4
      %s136 = int_to_ptr.vmem [resolvable:$true] %s135
      %138 = dma.hbm_to_vmem [thread:$0]  %s10, 16, %s136, [#allocation18]
    $region45: #{predictor1_forward.1} parent=1 // pred_fallthru
      _
    // Predicated region
    $region46: #{predictor1_forward.1} parent=1 // pred_check
      _
    $region47: #{predictor1_forward.1} parent=1 // pred_check_branch
      %140 = sbr.rel (0) target = $region49
    $region48: #{predictor1_forward.1} parent=1 // pred_region
      %141 = dma.done [#allocation3], 2048
    $region49: #{predictor1_forward.1} parent=1 // pred_fallthru
      _
    // Predicated region
    $region50: #{predictor1_forward.1} parent=1 // pred_check
      _
    $region51: #{predictor1_forward.1} parent=1 // pred_check_branch
      %143 = sbr.rel (0) target = $region53
    $region52: #{predictor1_forward.1} parent=1 // pred_region
      %144 = dma.done [#allocation6], 65536
    $region53: #{predictor1_forward.1} parent=1 // pred_fallthru
      _
    // Predicated region
    $region54: #{predictor1_forward.1} parent=1 // pred_check
      _
    $region55: #{predictor1_forward.1} parent=1 // pred_check_branch
      %146 = sbr.rel (0) target = $region57
    $region56: #{predictor1_forward.1} parent=1 // pred_region
      %147 = dma.done [#allocation6], 128
    $region57: #{predictor1_forward.1} parent=1 // pred_fallthru
      _
    // Predicated region
    $region58: #{predictor1_forward.1} parent=1 // pred_check
      _
    $region59: #{predictor1_forward.1} parent=1 // pred_check_branch
      %149 = sbr.rel (0) target = $region61
    $region60: #{predictor1_forward.1} parent=1 // pred_region
      %150 = dma.done [#allocation9], 128
    $region61: #{predictor1_forward.1} parent=1 // pred_fallthru
      _
    // Predicated region
    $region62: #{predictor1_forward.1} parent=1 // pred_check
      _
    $region63: #{predictor1_forward.1} parent=1 // pred_check_branch
      %152 = sbr.rel (0) target = $region65
    $region64: #{predictor1_forward.1} parent=1 // pred_region
      %153 = dma.done [#allocation9], 128
    $region65: #{predictor1_forward.1} parent=1 // pred_fallthru
      _
    // Predicated region
    $region66: #{predictor1_forward.1} parent=1 // pred_check
      _
    $region67: #{predictor1_forward.1} parent=1 // pred_check_branch
      %155 = sbr.rel (0) target = $region69
    $region68: #{predictor1_forward.1} parent=1 // pred_region
      %156 = dma.done [#allocation12], 4096
    $region69: #{predictor1_forward.1} parent=1 // pred_fallthru
      _
    // Predicated region
    $region70: #{predictor1_forward.1} parent=1 // pred_check
      _
    $region71: #{predictor1_forward.1} parent=1 // pred_check_branch
      %158 = sbr.rel (0) target = $region73
    $region72: #{predictor1_forward.1} parent=1 // pred_region
      %159 = dma.done [#allocation12], 16
    $region73: #{predictor1_forward.1} parent=1 // pred_fallthru
      _
    // Predicated region
    $region74: #{predictor1_forward.1} parent=1 // pred_check
      _
    $region75: #{predictor1_forward.1} parent=1 // pred_check_branch
      %161 = sbr.rel (0) target = $region77
    $region76: #{predictor1_forward.1} parent=1 // pred_region
      %162 = dma.done [#allocation15], 16
    $region77: #{predictor1_forward.1} parent=1 // pred_fallthru
      _
    // Predicated region
    $region78: #{predictor1_forward.1} parent=1 // pred_check
      _
    $region79: #{predictor1_forward.1} parent=1 // pred_check_branch
      %164 = sbr.rel (0) target = $region81
    $region80: #{predictor1_forward.1} parent=1 // pred_region
      %165 = dma.done [#allocation15], 16
    $region81: #{predictor1_forward.1} parent=1 // pred_fallthru
      _
    // Predicated region
    $region82: #{predictor1_forward.1} parent=1 // pred_check
      _
    $region83: #{predictor1_forward.1} parent=1 // pred_check_branch
      %167 = sbr.rel (0) target = $region85
    $region84: #{predictor1_forward.1} parent=1 // pred_region
      %168 = dma.done [#allocation18], 1024
    $region85: #{predictor1_forward.1} parent=1 // pred_fallthru
      _
    // Predicated region
    $region86: #{predictor1_forward.1} parent=1 // pred_check
      _
    $region87: #{predictor1_forward.1} parent=1 // pred_check_branch
      %170 = sbr.rel (0) target = $region89
    $region88: #{predictor1_forward.1} parent=1 // pred_region
      %171 = dma.done [#allocation18], 16
    $region89: #{predictor1_forward.1} parent=1 // pred_fallthru
      _
    %v173 = vld [vmem:[#allocation2] sm:$0xff]
    %v174 = vld [vmem:[#allocation2 + $0x8] sm:$0xff]
    %v175 = vld [vmem:[#allocation2 + $0x10] sm:$0xff]
    %v176 = vld [vmem:[#allocation2 + $0x18] sm:$0xff]
    %v177 = vld [vmem:[#allocation2 + $0x20] sm:$0xff]
    %v178 = vld [vmem:[#allocation2 + $0x28] sm:$0xff]
    %v179 = vld [vmem:[#allocation2 + $0x30] sm:$0xff]
    %v180 = vld [vmem:[#allocation2 + $0x38] sm:$0xff]
    %v181 = vld [vmem:[#allocation2 + $0x40] sm:$0xff]
    %v182 = vld [vmem:[#allocation2 + $0x48] sm:$0xff]
    %v183 = vld [vmem:[#allocation2 + $0x50] sm:$0xff]
    %v184 = vld [vmem:[#allocation2 + $0x58] sm:$0xff]
    %v185 = vld [vmem:[#allocation2 + $0x60] sm:$0xff]
    %v186 = vld [vmem:[#allocation2 + $0x68] sm:$0xff]
    %v187 = vld [vmem:[#allocation2 + $0x70] sm:$0xff]
    %v188 = vld [vmem:[#allocation2 + $0x78] sm:$0xff]
    %v189 = vpack.c.bf16 %v173, %v173
    %v190 = vpack.c.bf16 %v174, %v174
    %v191 = vpack.c.bf16 %v175, %v175
    %v192 = vpack.c.bf16 %v176, %v176
    %v193 = vpack.c.bf16 %v177, %v177
    %v194 = vpack.c.bf16 %v178, %v178
    %v195 = vpack.c.bf16 %v179, %v179
    %v196 = vpack.c.bf16 %v180, %v180
    %v197 = vpack.c.bf16 %v181, %v181
    %v198 = vpack.c.bf16 %v182, %v182
    %v199 = vpack.c.bf16 %v183, %v183
    %v200 = vpack.c.bf16 %v184, %v184
    %v201 = vpack.c.bf16 %v185, %v185
    %v202 = vpack.c.bf16 %v186, %v186
    %v203 = vpack.c.bf16 %v187, %v187
    %v204 = vpack.c.bf16 %v188, %v188
    %v205 = vld [vmem:[#allocation5] sm:$0xff]
    %v206 = vld [vmem:[#allocation5 + $0x8] sm:$0xff]
    %v207 = vld [vmem:[#allocation5 + $0x10] sm:$0xff]
    %v208 = vld [vmem:[#allocation5 + $0x18] sm:$0xff]
    %v209 = vld [vmem:[#allocation5 + $0x20] sm:$0xff]
    %v210 = vld [vmem:[#allocation5 + $0x28] sm:$0xff]
    %v211 = vld [vmem:[#allocation5 + $0x30] sm:$0xff]
    %v212 = vld [vmem:[#allocation5 + $0x38] sm:$0xff]
    %v213 = vld [vmem:[#allocation5 + $0x40] sm:$0xff]
    %v214 = vld [vmem:[#allocation5 + $0x48] sm:$0xff]
    %v215 = vld [vmem:[#allocation5 + $0x50] sm:$0xff]
    %v216 = vld [vmem:[#allocation5 + $0x58] sm:$0xff]
    %v217 = vld [vmem:[#allocation5 + $0x60] sm:$0xff]
    %v218 = vld [vmem:[#allocation5 + $0x68] sm:$0xff]
    %v219 = vld [vmem:[#allocation5 + $0x70] sm:$0xff]
    %v220 = vld [vmem:[#allocation5 + $0x78] sm:$0xff]
    %v221 = vld [vmem:[#allocation5 + $0x80] sm:$0xff]
    %v222 = vld [vmem:[#allocation5 + $0x88] sm:$0xff]
    %v223 = vld [vmem:[#allocation5 + $0x90] sm:$0xff]
    %v224 = vld [vmem:[#allocation5 + $0x98] sm:$0xff]
    %v225 = vld [vmem:[#allocation5 + $0xa0] sm:$0xff]
    %v226 = vld [vmem:[#allocation5 + $0xa8] sm:$0xff]
    %v227 = vld [vmem:[#allocation5 + $0xb0] sm:$0xff]
    %v228 = vld [vmem:[#allocation5 + $0xb8] sm:$0xff]
    %v229 = vld [vmem:[#allocation5 + $0xc0] sm:$0xff]
    %v230 = vld [vmem:[#allocation5 + $0xc8] sm:$0xff]
    %v231 = vld [vmem:[#allocation5 + $0xd0] sm:$0xff]
    %v232 = vld [vmem:[#allocation5 + $0xd8] sm:$0xff]
    %v233 = vld [vmem:[#allocation5 + $0xe0] sm:$0xff]
    %v234 = vld [vmem:[#allocation5 + $0xe8] sm:$0xff]
    %v235 = vld [vmem:[#allocation5 + $0xf0] sm:$0xff]
    %v236 = vld [vmem:[#allocation5 + $0xf8] sm:$0xff]
    %v237 = vld [vmem:[#allocation5 + $0x100] sm:$0xff]
    %v238 = vld [vmem:[#allocation5 + $0x108] sm:$0xff]
    %v239 = vld [vmem:[#allocation5 + $0x110] sm:$0xff]
    %v240 = vld [vmem:[#allocation5 + $0x118] sm:$0xff]
    %v241 = vld [vmem:[#allocation5 + $0x120] sm:$0xff]
    %v242 = vld [vmem:[#allocation5 + $0x128] sm:$0xff]
    %v243 = vld [vmem:[#allocation5 + $0x130] sm:$0xff]
    %v244 = vld [vmem:[#allocation5 + $0x138] sm:$0xff]
    %v245 = vld [vmem:[#allocation5 + $0x140] sm:$0xff]
    %v246 = vld [vmem:[#allocation5 + $0x148] sm:$0xff]
    %v247 = vld [vmem:[#allocation5 + $0x150] sm:$0xff]
    %v248 = vld [vmem:[#allocation5 + $0x158] sm:$0xff]
    %v249 = vld [vmem:[#allocation5 + $0x160] sm:$0xff]
    %v250 = vld [vmem:[#allocation5 + $0x168] sm:$0xff]
    %v251 = vld [vmem:[#allocation5 + $0x170] sm:$0xff]
    %v252 = vld [vmem:[#allocation5 + $0x178] sm:$0xff]
    %v253 = vld [vmem:[#allocation5 + $0x180] sm:$0xff]
    %v254 = vld [vmem:[#allocation5 + $0x188] sm:$0xff]
    %v255 = vld [vmem:[#allocation5 + $0x190] sm:$0xff]
    %v256 = vld [vmem:[#allocation5 + $0x198] sm:$0xff]
    %v257 = vld [vmem:[#allocation5 + $0x1a0] sm:$0xff]
    %v258 = vld [vmem:[#allocation5 + $0x1a8] sm:$0xff]
    %v259 = vld [vmem:[#allocation5 + $0x1b0] sm:$0xff]
    %v260 = vld [vmem:[#allocation5 + $0x1b8] sm:$0xff]
    %v261 = vld [vmem:[#allocation5 + $0x1c0] sm:$0xff]
    %v262 = vld [vmem:[#allocation5 + $0x1c8] sm:$0xff]
    %v263 = vld [vmem:[#allocation5 + $0x1d0] sm:$0xff]
    %v264 = vld [vmem:[#allocation5 + $0x1d8] sm:$0xff]
    %v265 = vld [vmem:[#allocation5 + $0x1e0] sm:$0xff]
    %v266 = vld [vmem:[#allocation5 + $0x1e8] sm:$0xff]
    %v267 = vld [vmem:[#allocation5 + $0x1f0] sm:$0xff]
    %v268 = vld [vmem:[#allocation5 + $0x1f8] sm:$0xff]
    %v269 = vld [vmem:[#allocation5 + $0x200] sm:$0xff]
    %v270 = vld [vmem:[#allocation5 + $0x208] sm:$0xff]
    %v271 = vld [vmem:[#allocation5 + $0x210] sm:$0xff]
    %v272 = vld [vmem:[#allocation5 + $0x218] sm:$0xff]
    %v273 = vld [vmem:[#allocation5 + $0x220] sm:$0xff]
    %v274 = vld [vmem:[#allocation5 + $0x228] sm:$0xff]
    %v275 = vld [vmem:[#allocation5 + $0x230] sm:$0xff]
    %v276 = vld [vmem:[#allocation5 + $0x238] sm:$0xff]
    %v277 = vld [vmem:[#allocation5 + $0x240] sm:$0xff]
    %v278 = vld [vmem:[#allocation5 + $0x248] sm:$0xff]
    %v279 = vld [vmem:[#allocation5 + $0x250] sm:$0xff]
    %v280 = vld [vmem:[#allocation5 + $0x258] sm:$0xff]
    %v281 = vld [vmem:[#allocation5 + $0x260] sm:$0xff]
    %v282 = vld [vmem:[#allocation5 + $0x268] sm:$0xff]
    %v283 = vld [vmem:[#allocation5 + $0x270] sm:$0xff]
    %v284 = vld [vmem:[#allocation5 + $0x278] sm:$0xff]
    %v285 = vld [vmem:[#allocation5 + $0x280] sm:$0xff]
    %v286 = vld [vmem:[#allocation5 + $0x288] sm:$0xff]
    %v287 = vld [vmem:[#allocation5 + $0x290] sm:$0xff]
    %v288 = vld [vmem:[#allocation5 + $0x298] sm:$0xff]
    %v289 = vld [vmem:[#allocation5 + $0x2a0] sm:$0xff]
    %v290 = vld [vmem:[#allocation5 + $0x2a8] sm:$0xff]
    %v291 = vld [vmem:[#allocation5 + $0x2b0] sm:$0xff]
    %v292 = vld [vmem:[#allocation5 + $0x2b8] sm:$0xff]
    %v293 = vld [vmem:[#allocation5 + $0x2c0] sm:$0xff]
    %v294 = vld [vmem:[#allocation5 + $0x2c8] sm:$0xff]
    %v295 = vld [vmem:[#allocation5 + $0x2d0] sm:$0xff]
    %v296 = vld [vmem:[#allocation5 + $0x2d8] sm:$0xff]
    %v297 = vld [vmem:[#allocation5 + $0x2e0] sm:$0xff]
    %v298 = vld [vmem:[#allocation5 + $0x2e8] sm:$0xff]
    %v299 = vld [vmem:[#allocation5 + $0x2f0] sm:$0xff]
    %v300 = vld [vmem:[#allocation5 + $0x2f8] sm:$0xff]
    %v301 = vld [vmem:[#allocation5 + $0x300] sm:$0xff]
    %v302 = vld [vmem:[#allocation5 + $0x308] sm:$0xff]
    %v303 = vld [vmem:[#allocation5 + $0x310] sm:$0xff]
    %v304 = vld [vmem:[#allocation5 + $0x318] sm:$0xff]
    %v305 = vld [vmem:[#allocation5 + $0x320] sm:$0xff]
    %v306 = vld [vmem:[#allocation5 + $0x328] sm:$0xff]
    %v307 = vld [vmem:[#allocation5 + $0x330] sm:$0xff]
    %v308 = vld [vmem:[#allocation5 + $0x338] sm:$0xff]
    %v309 = vld [vmem:[#allocation5 + $0x340] sm:$0xff]
    %v310 = vld [vmem:[#allocation5 + $0x348] sm:$0xff]
    %v311 = vld [vmem:[#allocation5 + $0x350] sm:$0xff]
    %v312 = vld [vmem:[#allocation5 + $0x358] sm:$0xff]
    %v313 = vld [vmem:[#allocation5 + $0x360] sm:$0xff]
    %v314 = vld [vmem:[#allocation5 + $0x368] sm:$0xff]
    %v315 = vld [vmem:[#allocation5 + $0x370] sm:$0xff]
    %v316 = vld [vmem:[#allocation5 + $0x378] sm:$0xff]
    %v317 = vld [vmem:[#allocation5 + $0x380] sm:$0xff]
    %v318 = vld [vmem:[#allocation5 + $0x388] sm:$0xff]
    %v319 = vld [vmem:[#allocation5 + $0x390] sm:$0xff]
    %v320 = vld [vmem:[#allocation5 + $0x398] sm:$0xff]
    %v321 = vld [vmem:[#allocation5 + $0x3a0] sm:$0xff]
    %v322 = vld [vmem:[#allocation5 + $0x3a8] sm:$0xff]
    %v323 = vld [vmem:[#allocation5 + $0x3b0] sm:$0xff]
    %v324 = vld [vmem:[#allocation5 + $0x3b8] sm:$0xff]
    %v325 = vld [vmem:[#allocation5 + $0x3c0] sm:$0xff]
    %v326 = vld [vmem:[#allocation5 + $0x3c8] sm:$0xff]
    %v327 = vld [vmem:[#allocation5 + $0x3d0] sm:$0xff]
    %v328 = vld [vmem:[#allocation5 + $0x3d8] sm:$0xff]
    %v329 = vld [vmem:[#allocation5 + $0x3e0] sm:$0xff]
    %v330 = vld [vmem:[#allocation5 + $0x3e8] sm:$0xff]
    %v331 = vld [vmem:[#allocation5 + $0x3f0] sm:$0xff]
    %v332 = vld [vmem:[#allocation5 + $0x3f8] sm:$0xff]
    %v333 = vld [vmem:[#allocation5 + $0x400] sm:$0xff]
    %v334 = vld [vmem:[#allocation5 + $0x408] sm:$0xff]
    %v335 = vld [vmem:[#allocation5 + $0x410] sm:$0xff]
    %v336 = vld [vmem:[#allocation5 + $0x418] sm:$0xff]
    %v337 = vld [vmem:[#allocation5 + $0x420] sm:$0xff]
    %v338 = vld [vmem:[#allocation5 + $0x428] sm:$0xff]
    %v339 = vld [vmem:[#allocation5 + $0x430] sm:$0xff]
    %v340 = vld [vmem:[#allocation5 + $0x438] sm:$0xff]
    %v341 = vld [vmem:[#allocation5 + $0x440] sm:$0xff]
    %v342 = vld [vmem:[#allocation5 + $0x448] sm:$0xff]
    %v343 = vld [vmem:[#allocation5 + $0x450] sm:$0xff]
    %v344 = vld [vmem:[#allocation5 + $0x458] sm:$0xff]
    %v345 = vld [vmem:[#allocation5 + $0x460] sm:$0xff]
    %v346 = vld [vmem:[#allocation5 + $0x468] sm:$0xff]
    %v347 = vld [vmem:[#allocation5 + $0x470] sm:$0xff]
    %v348 = vld [vmem:[#allocation5 + $0x478] sm:$0xff]
    %v349 = vld [vmem:[#allocation5 + $0x480] sm:$0xff]
    %v350 = vld [vmem:[#allocation5 + $0x488] sm:$0xff]
    %v351 = vld [vmem:[#allocation5 + $0x490] sm:$0xff]
    %v352 = vld [vmem:[#allocation5 + $0x498] sm:$0xff]
    %v353 = vld [vmem:[#allocation5 + $0x4a0] sm:$0xff]
    %v354 = vld [vmem:[#allocation5 + $0x4a8] sm:$0xff]
    %v355 = vld [vmem:[#allocation5 + $0x4b0] sm:$0xff]
    %v356 = vld [vmem:[#allocation5 + $0x4b8] sm:$0xff]
    %v357 = vld [vmem:[#allocation5 + $0x4c0] sm:$0xff]
    %v358 = vld [vmem:[#allocation5 + $0x4c8] sm:$0xff]
    %v359 = vld [vmem:[#allocation5 + $0x4d0] sm:$0xff]
    %v360 = vld [vmem:[#allocation5 + $0x4d8] sm:$0xff]
    %v361 = vld [vmem:[#allocation5 + $0x4e0] sm:$0xff]
    %v362 = vld [vmem:[#allocation5 + $0x4e8] sm:$0xff]
    %v363 = vld [vmem:[#allocation5 + $0x4f0] sm:$0xff]
    %v364 = vld [vmem:[#allocation5 + $0x4f8] sm:$0xff]
    %v365 = vld [vmem:[#allocation5 + $0x500] sm:$0xff]
    %v366 = vld [vmem:[#allocation5 + $0x508] sm:$0xff]
    %v367 = vld [vmem:[#allocation5 + $0x510] sm:$0xff]
    %v368 = vld [vmem:[#allocation5 + $0x518] sm:$0xff]
    %v369 = vld [vmem:[#allocation5 + $0x520] sm:$0xff]
    %v370 = vld [vmem:[#allocation5 + $0x528] sm:$0xff]
    %v371 = vld [vmem:[#allocation5 + $0x530] sm:$0xff]
    %v372 = vld [vmem:[#allocation5 + $0x538] sm:$0xff]
    %v373 = vld [vmem:[#allocation5 + $0x540] sm:$0xff]
    %v374 = vld [vmem:[#allocation5 + $0x548] sm:$0xff]
    %v375 = vld [vmem:[#allocation5 + $0x550] sm:$0xff]
    %v376 = vld [vmem:[#allocation5 + $0x558] sm:$0xff]
    %v377 = vld [vmem:[#allocation5 + $0x560] sm:$0xff]
    %v378 = vld [vmem:[#allocation5 + $0x568] sm:$0xff]
    %v379 = vld [vmem:[#allocation5 + $0x570] sm:$0xff]
    %v380 = vld [vmem:[#allocation5 + $0x578] sm:$0xff]
    %v381 = vld [vmem:[#allocation5 + $0x580] sm:$0xff]
    %v382 = vld [vmem:[#allocation5 + $0x588] sm:$0xff]
    %v383 = vld [vmem:[#allocation5 + $0x590] sm:$0xff]
    %v384 = vld [vmem:[#allocation5 + $0x598] sm:$0xff]
    %v385 = vld [vmem:[#allocation5 + $0x5a0] sm:$0xff]
    %v386 = vld [vmem:[#allocation5 + $0x5a8] sm:$0xff]
    %v387 = vld [vmem:[#allocation5 + $0x5b0] sm:$0xff]
    %v388 = vld [vmem:[#allocation5 + $0x5b8] sm:$0xff]
    %v389 = vld [vmem:[#allocation5 + $0x5c0] sm:$0xff]
    %v390 = vld [vmem:[#allocation5 + $0x5c8] sm:$0xff]
    %v391 = vld [vmem:[#allocation5 + $0x5d0] sm:$0xff]
    %v392 = vld [vmem:[#allocation5 + $0x5d8] sm:$0xff]
    %v393 = vld [vmem:[#allocation5 + $0x5e0] sm:$0xff]
    %v394 = vld [vmem:[#allocation5 + $0x5e8] sm:$0xff]
    %v395 = vld [vmem:[#allocation5 + $0x5f0] sm:$0xff]
    %v396 = vld [vmem:[#allocation5 + $0x5f8] sm:$0xff]
    %v397 = vld [vmem:[#allocation5 + $0x600] sm:$0xff]
    %v398 = vld [vmem:[#allocation5 + $0x608] sm:$0xff]
    %v399 = vld [vmem:[#allocation5 + $0x610] sm:$0xff]
    %v400 = vld [vmem:[#allocation5 + $0x618] sm:$0xff]
    %v401 = vld [vmem:[#allocation5 + $0x620] sm:$0xff]
    %v402 = vld [vmem:[#allocation5 + $0x628] sm:$0xff]
    %v403 = vld [vmem:[#allocation5 + $0x630] sm:$0xff]
    %v404 = vld [vmem:[#allocation5 + $0x638] sm:$0xff]
    %v405 = vld [vmem:[#allocation5 + $0x640] sm:$0xff]
    %v406 = vld [vmem:[#allocation5 + $0x648] sm:$0xff]
    %v407 = vld [vmem:[#allocation5 + $0x650] sm:$0xff]
    %v408 = vld [vmem:[#allocation5 + $0x658] sm:$0xff]
    %v409 = vld [vmem:[#allocation5 + $0x660] sm:$0xff]
    %v410 = vld [vmem:[#allocation5 + $0x668] sm:$0xff]
    %v411 = vld [vmem:[#allocation5 + $0x670] sm:$0xff]
    %v412 = vld [vmem:[#allocation5 + $0x678] sm:$0xff]
    %v413 = vld [vmem:[#allocation5 + $0x680] sm:$0xff]
    %v414 = vld [vmem:[#allocation5 + $0x688] sm:$0xff]
    %v415 = vld [vmem:[#allocation5 + $0x690] sm:$0xff]
    %v416 = vld [vmem:[#allocation5 + $0x698] sm:$0xff]
    %v417 = vld [vmem:[#allocation5 + $0x6a0] sm:$0xff]
    %v418 = vld [vmem:[#allocation5 + $0x6a8] sm:$0xff]
    %v419 = vld [vmem:[#allocation5 + $0x6b0] sm:$0xff]
    %v420 = vld [vmem:[#allocation5 + $0x6b8] sm:$0xff]
    %v421 = vld [vmem:[#allocation5 + $0x6c0] sm:$0xff]
    %v422 = vld [vmem:[#allocation5 + $0x6c8] sm:$0xff]
    %v423 = vld [vmem:[#allocation5 + $0x6d0] sm:$0xff]
    %v424 = vld [vmem:[#allocation5 + $0x6d8] sm:$0xff]
    %v425 = vld [vmem:[#allocation5 + $0x6e0] sm:$0xff]
    %v426 = vld [vmem:[#allocation5 + $0x6e8] sm:$0xff]
    %v427 = vld [vmem:[#allocation5 + $0x6f0] sm:$0xff]
    %v428 = vld [vmem:[#allocation5 + $0x6f8] sm:$0xff]
    %v429 = vld [vmem:[#allocation5 + $0x700] sm:$0xff]
    %v430 = vld [vmem:[#allocation5 + $0x708] sm:$0xff]
    %v431 = vld [vmem:[#allocation5 + $0x710] sm:$0xff]
    %v432 = vld [vmem:[#allocation5 + $0x718] sm:$0xff]
    %v433 = vld [vmem:[#allocation5 + $0x720] sm:$0xff]
    %v434 = vld [vmem:[#allocation5 + $0x728] sm:$0xff]
    %v435 = vld [vmem:[#allocation5 + $0x730] sm:$0xff]
    %v436 = vld [vmem:[#allocation5 + $0x738] sm:$0xff]
    %v437 = vld [vmem:[#allocation5 + $0x740] sm:$0xff]
    %v438 = vld [vmem:[#allocation5 + $0x748] sm:$0xff]
    %v439 = vld [vmem:[#allocation5 + $0x750] sm:$0xff]
    %v440 = vld [vmem:[#allocation5 + $0x758] sm:$0xff]
    %v441 = vld [vmem:[#allocation5 + $0x760] sm:$0xff]
    %v442 = vld [vmem:[#allocation5 + $0x768] sm:$0xff]
    %v443 = vld [vmem:[#allocation5 + $0x770] sm:$0xff]
    %v444 = vld [vmem:[#allocation5 + $0x778] sm:$0xff]
    %v445 = vld [vmem:[#allocation5 + $0x780] sm:$0xff]
    %v446 = vld [vmem:[#allocation5 + $0x788] sm:$0xff]
    %v447 = vld [vmem:[#allocation5 + $0x790] sm:$0xff]
    %v448 = vld [vmem:[#allocation5 + $0x798] sm:$0xff]
    %v449 = vld [vmem:[#allocation5 + $0x7a0] sm:$0xff]
    %v450 = vld [vmem:[#allocation5 + $0x7a8] sm:$0xff]
    %v451 = vld [vmem:[#allocation5 + $0x7b0] sm:$0xff]
    %v452 = vld [vmem:[#allocation5 + $0x7b8] sm:$0xff]
    %v453 = vld [vmem:[#allocation5 + $0x7c0] sm:$0xff]
    %v454 = vld [vmem:[#allocation5 + $0x7c8] sm:$0xff]
    %v455 = vld [vmem:[#allocation5 + $0x7d0] sm:$0xff]
    %v456 = vld [vmem:[#allocation5 + $0x7d8] sm:$0xff]
    %v457 = vld [vmem:[#allocation5 + $0x7e0] sm:$0xff]
    %v458 = vld [vmem:[#allocation5 + $0x7e8] sm:$0xff]
    %v459 = vld [vmem:[#allocation5 + $0x7f0] sm:$0xff]
    %v460 = vld [vmem:[#allocation5 + $0x7f8] sm:$0xff]
    %v461 = vld [vmem:[#allocation5 + $0x800] sm:$0xff]
    %v462 = vld [vmem:[#allocation5 + $0x808] sm:$0xff]
    %v463 = vld [vmem:[#allocation5 + $0x810] sm:$0xff]
    %v464 = vld [vmem:[#allocation5 + $0x818] sm:$0xff]
    %v465 = vld [vmem:[#allocation5 + $0x820] sm:$0xff]
    %v466 = vld [vmem:[#allocation5 + $0x828] sm:$0xff]
    %v467 = vld [vmem:[#allocation5 + $0x830] sm:$0xff]
    %v468 = vld [vmem:[#allocation5 + $0x838] sm:$0xff]
    %v469 = vld [vmem:[#allocation5 + $0x840] sm:$0xff]
    %v470 = vld [vmem:[#allocation5 + $0x848] sm:$0xff]
    %v471 = vld [vmem:[#allocation5 + $0x850] sm:$0xff]
    %v472 = vld [vmem:[#allocation5 + $0x858] sm:$0xff]
    %v473 = vld [vmem:[#allocation5 + $0x860] sm:$0xff]
    %v474 = vld [vmem:[#allocation5 + $0x868] sm:$0xff]
    %v475 = vld [vmem:[#allocation5 + $0x870] sm:$0xff]
    %v476 = vld [vmem:[#allocation5 + $0x878] sm:$0xff]
    %v477 = vld [vmem:[#allocation5 + $0x880] sm:$0xff]
    %v478 = vld [vmem:[#allocation5 + $0x888] sm:$0xff]
    %v479 = vld [vmem:[#allocation5 + $0x890] sm:$0xff]
    %v480 = vld [vmem:[#allocation5 + $0x898] sm:$0xff]
    %v481 = vld [vmem:[#allocation5 + $0x8a0] sm:$0xff]
    %v482 = vld [vmem:[#allocation5 + $0x8a8] sm:$0xff]
    %v483 = vld [vmem:[#allocation5 + $0x8b0] sm:$0xff]
    %v484 = vld [vmem:[#allocation5 + $0x8b8] sm:$0xff]
    %v485 = vld [vmem:[#allocation5 + $0x8c0] sm:$0xff]
    %v486 = vld [vmem:[#allocation5 + $0x8c8] sm:$0xff]
    %v487 = vld [vmem:[#allocation5 + $0x8d0] sm:$0xff]
    %v488 = vld [vmem:[#allocation5 + $0x8d8] sm:$0xff]
    %v489 = vld [vmem:[#allocation5 + $0x8e0] sm:$0xff]
    %v490 = vld [vmem:[#allocation5 + $0x8e8] sm:$0xff]
    %v491 = vld [vmem:[#allocation5 + $0x8f0] sm:$0xff]
    %v492 = vld [vmem:[#allocation5 + $0x8f8] sm:$0xff]
    %v493 = vld [vmem:[#allocation5 + $0x900] sm:$0xff]
    %v494 = vld [vmem:[#allocation5 + $0x908] sm:$0xff]
    %v495 = vld [vmem:[#allocation5 + $0x910] sm:$0xff]
    %v496 = vld [vmem:[#allocation5 + $0x918] sm:$0xff]
    %v497 = vld [vmem:[#allocation5 + $0x920] sm:$0xff]
    %v498 = vld [vmem:[#allocation5 + $0x928] sm:$0xff]
    %v499 = vld [vmem:[#allocation5 + $0x930] sm:$0xff]
    %v500 = vld [vmem:[#allocation5 + $0x938] sm:$0xff]
    %v501 = vld [vmem:[#allocation5 + $0x940] sm:$0xff]
    %v502 = vld [vmem:[#allocation5 + $0x948] sm:$0xff]
    %v503 = vld [vmem:[#allocation5 + $0x950] sm:$0xff]
    %v504 = vld [vmem:[#allocation5 + $0x958] sm:$0xff]
    %v505 = vld [vmem:[#allocation5 + $0x960] sm:$0xff]
    %v506 = vld [vmem:[#allocation5 + $0x968] sm:$0xff]
    %v507 = vld [vmem:[#allocation5 + $0x970] sm:$0xff]
    %v508 = vld [vmem:[#allocation5 + $0x978] sm:$0xff]
    %v509 = vld [vmem:[#allocation5 + $0x980] sm:$0xff]
    %v510 = vld [vmem:[#allocation5 + $0x988] sm:$0xff]
    %v511 = vld [vmem:[#allocation5 + $0x990] sm:$0xff]
    %v512 = vld [vmem:[#allocation5 + $0x998] sm:$0xff]
    %v513 = vld [vmem:[#allocation5 + $0x9a0] sm:$0xff]
    %v514 = vld [vmem:[#allocation5 + $0x9a8] sm:$0xff]
    %v515 = vld [vmem:[#allocation5 + $0x9b0] sm:$0xff]
    %v516 = vld [vmem:[#allocation5 + $0x9b8] sm:$0xff]
    %v517 = vld [vmem:[#allocation5 + $0x9c0] sm:$0xff]
    %v518 = vld [vmem:[#allocation5 + $0x9c8] sm:$0xff]
    %v519 = vld [vmem:[#allocation5 + $0x9d0] sm:$0xff]
    %v520 = vld [vmem:[#allocation5 + $0x9d8] sm:$0xff]
    %v521 = vld [vmem:[#allocation5 + $0x9e0] sm:$0xff]
    %v522 = vld [vmem:[#allocation5 + $0x9e8] sm:$0xff]
    %v523 = vld [vmem:[#allocation5 + $0x9f0] sm:$0xff]
    %v524 = vld [vmem:[#allocation5 + $0x9f8] sm:$0xff]
    %v525 = vld [vmem:[#allocation5 + $0xa00] sm:$0xff]
    %v526 = vld [vmem:[#allocation5 + $0xa08] sm:$0xff]
    %v527 = vld [vmem:[#allocation5 + $0xa10] sm:$0xff]
    %v528 = vld [vmem:[#allocation5 + $0xa18] sm:$0xff]
    %v529 = vld [vmem:[#allocation5 + $0xa20] sm:$0xff]
    %v530 = vld [vmem:[#allocation5 + $0xa28] sm:$0xff]
    %v531 = vld [vmem:[#allocation5 + $0xa30] sm:$0xff]
    %v532 = vld [vmem:[#allocation5 + $0xa38] sm:$0xff]
    %v533 = vld [vmem:[#allocation5 + $0xa40] sm:$0xff]
    %v534 = vld [vmem:[#allocation5 + $0xa48] sm:$0xff]
    %v535 = vld [vmem:[#allocation5 + $0xa50] sm:$0xff]
    %v536 = vld [vmem:[#allocation5 + $0xa58] sm:$0xff]
    %v537 = vld [vmem:[#allocation5 + $0xa60] sm:$0xff]
    %v538 = vld [vmem:[#allocation5 + $0xa68] sm:$0xff]
    %v539 = vld [vmem:[#allocation5 + $0xa70] sm:$0xff]
    %v540 = vld [vmem:[#allocation5 + $0xa78] sm:$0xff]
    %v541 = vld [vmem:[#allocation5 + $0xa80] sm:$0xff]
    %v542 = vld [vmem:[#allocation5 + $0xa88] sm:$0xff]
    %v543 = vld [vmem:[#allocation5 + $0xa90] sm:$0xff]
    %v544 = vld [vmem:[#allocation5 + $0xa98] sm:$0xff]
    %v545 = vld [vmem:[#allocation5 + $0xaa0] sm:$0xff]
    %v546 = vld [vmem:[#allocation5 + $0xaa8] sm:$0xff]
    %v547 = vld [vmem:[#allocation5 + $0xab0] sm:$0xff]
    %v548 = vld [vmem:[#allocation5 + $0xab8] sm:$0xff]
    %v549 = vld [vmem:[#allocation5 + $0xac0] sm:$0xff]
    %v550 = vld [vmem:[#allocation5 + $0xac8] sm:$0xff]
    %v551 = vld [vmem:[#allocation5 + $0xad0] sm:$0xff]
    %v552 = vld [vmem:[#allocation5 + $0xad8] sm:$0xff]
    %v553 = vld [vmem:[#allocation5 + $0xae0] sm:$0xff]
    %v554 = vld [vmem:[#allocation5 + $0xae8] sm:$0xff]
    %v555 = vld [vmem:[#allocation5 + $0xaf0] sm:$0xff]
    %v556 = vld [vmem:[#allocation5 + $0xaf8] sm:$0xff]
    %v557 = vld [vmem:[#allocation5 + $0xb00] sm:$0xff]
    %v558 = vld [vmem:[#allocation5 + $0xb08] sm:$0xff]
    %v559 = vld [vmem:[#allocation5 + $0xb10] sm:$0xff]
    %v560 = vld [vmem:[#allocation5 + $0xb18] sm:$0xff]
    %v561 = vld [vmem:[#allocation5 + $0xb20] sm:$0xff]
    %v562 = vld [vmem:[#allocation5 + $0xb28] sm:$0xff]
    %v563 = vld [vmem:[#allocation5 + $0xb30] sm:$0xff]
    %v564 = vld [vmem:[#allocation5 + $0xb38] sm:$0xff]
    %v565 = vld [vmem:[#allocation5 + $0xb40] sm:$0xff]
    %v566 = vld [vmem:[#allocation5 + $0xb48] sm:$0xff]
    %v567 = vld [vmem:[#allocation5 + $0xb50] sm:$0xff]
    %v568 = vld [vmem:[#allocation5 + $0xb58] sm:$0xff]
    %v569 = vld [vmem:[#allocation5 + $0xb60] sm:$0xff]
    %v570 = vld [vmem:[#allocation5 + $0xb68] sm:$0xff]
    %v571 = vld [vmem:[#allocation5 + $0xb70] sm:$0xff]
    %v572 = vld [vmem:[#allocation5 + $0xb78] sm:$0xff]
    %v573 = vld [vmem:[#allocation5 + $0xb80] sm:$0xff]
    %v574 = vld [vmem:[#allocation5 + $0xb88] sm:$0xff]
    %v575 = vld [vmem:[#allocation5 + $0xb90] sm:$0xff]
    %v576 = vld [vmem:[#allocation5 + $0xb98] sm:$0xff]
    %v577 = vld [vmem:[#allocation5 + $0xba0] sm:$0xff]
    %v578 = vld [vmem:[#allocation5 + $0xba8] sm:$0xff]
    %v579 = vld [vmem:[#allocation5 + $0xbb0] sm:$0xff]
    %v580 = vld [vmem:[#allocation5 + $0xbb8] sm:$0xff]
    %v581 = vld [vmem:[#allocation5 + $0xbc0] sm:$0xff]
    %v582 = vld [vmem:[#allocation5 + $0xbc8] sm:$0xff]
    %v583 = vld [vmem:[#allocation5 + $0xbd0] sm:$0xff]
    %v584 = vld [vmem:[#allocation5 + $0xbd8] sm:$0xff]
    %v585 = vld [vmem:[#allocation5 + $0xbe0] sm:$0xff]
    %v586 = vld [vmem:[#allocation5 + $0xbe8] sm:$0xff]
    %v587 = vld [vmem:[#allocation5 + $0xbf0] sm:$0xff]
    %v588 = vld [vmem:[#allocation5 + $0xbf8] sm:$0xff]
    %v589 = vld [vmem:[#allocation5 + $0xc00] sm:$0xff]
    %v590 = vld [vmem:[#allocation5 + $0xc08] sm:$0xff]
    %v591 = vld [vmem:[#allocation5 + $0xc10] sm:$0xff]
    %v592 = vld [vmem:[#allocation5 + $0xc18] sm:$0xff]
    %v593 = vld [vmem:[#allocation5 + $0xc20] sm:$0xff]
    %v594 = vld [vmem:[#allocation5 + $0xc28] sm:$0xff]
    %v595 = vld [vmem:[#allocation5 + $0xc30] sm:$0xff]
    %v596 = vld [vmem:[#allocation5 + $0xc38] sm:$0xff]
    %v597 = vld [vmem:[#allocation5 + $0xc40] sm:$0xff]
    %v598 = vld [vmem:[#allocation5 + $0xc48] sm:$0xff]
    %v599 = vld [vmem:[#allocation5 + $0xc50] sm:$0xff]
    %v600 = vld [vmem:[#allocation5 + $0xc58] sm:$0xff]
    %v601 = vld [vmem:[#allocation5 + $0xc60] sm:$0xff]
    %v602 = vld [vmem:[#allocation5 + $0xc68] sm:$0xff]
    %v603 = vld [vmem:[#allocation5 + $0xc70] sm:$0xff]
    %v604 = vld [vmem:[#allocation5 + $0xc78] sm:$0xff]
    %v605 = vld [vmem:[#allocation5 + $0xc80] sm:$0xff]
    %v606 = vld [vmem:[#allocation5 + $0xc88] sm:$0xff]
    %v607 = vld [vmem:[#allocation5 + $0xc90] sm:$0xff]
    %v608 = vld [vmem:[#allocation5 + $0xc98] sm:$0xff]
    %v609 = vld [vmem:[#allocation5 + $0xca0] sm:$0xff]
    %v610 = vld [vmem:[#allocation5 + $0xca8] sm:$0xff]
    %v611 = vld [vmem:[#allocation5 + $0xcb0] sm:$0xff]
    %v612 = vld [vmem:[#allocation5 + $0xcb8] sm:$0xff]
    %v613 = vld [vmem:[#allocation5 + $0xcc0] sm:$0xff]
    %v614 = vld [vmem:[#allocation5 + $0xcc8] sm:$0xff]
    %v615 = vld [vmem:[#allocation5 + $0xcd0] sm:$0xff]
    %v616 = vld [vmem:[#allocation5 + $0xcd8] sm:$0xff]
    %v617 = vld [vmem:[#allocation5 + $0xce0] sm:$0xff]
    %v618 = vld [vmem:[#allocation5 + $0xce8] sm:$0xff]
    %v619 = vld [vmem:[#allocation5 + $0xcf0] sm:$0xff]
    %v620 = vld [vmem:[#allocation5 + $0xcf8] sm:$0xff]
    %v621 = vld [vmem:[#allocation5 + $0xd00] sm:$0xff]
    %v622 = vld [vmem:[#allocation5 + $0xd08] sm:$0xff]
    %v623 = vld [vmem:[#allocation5 + $0xd10] sm:$0xff]
    %v624 = vld [vmem:[#allocation5 + $0xd18] sm:$0xff]
    %v625 = vld [vmem:[#allocation5 + $0xd20] sm:$0xff]
    %v626 = vld [vmem:[#allocation5 + $0xd28] sm:$0xff]
    %v627 = vld [vmem:[#allocation5 + $0xd30] sm:$0xff]
    %v628 = vld [vmem:[#allocation5 + $0xd38] sm:$0xff]
    %v629 = vld [vmem:[#allocation5 + $0xd40] sm:$0xff]
    %v630 = vld [vmem:[#allocation5 + $0xd48] sm:$0xff]
    %v631 = vld [vmem:[#allocation5 + $0xd50] sm:$0xff]
    %v632 = vld [vmem:[#allocation5 + $0xd58] sm:$0xff]
    %v633 = vld [vmem:[#allocation5 + $0xd60] sm:$0xff]
    %v634 = vld [vmem:[#allocation5 + $0xd68] sm:$0xff]
    %v635 = vld [vmem:[#allocation5 + $0xd70] sm:$0xff]
    %v636 = vld [vmem:[#allocation5 + $0xd78] sm:$0xff]
    %v637 = vld [vmem:[#allocation5 + $0xd80] sm:$0xff]
    %v638 = vld [vmem:[#allocation5 + $0xd88] sm:$0xff]
    %v639 = vld [vmem:[#allocation5 + $0xd90] sm:$0xff]
    %v640 = vld [vmem:[#allocation5 + $0xd98] sm:$0xff]
    %v641 = vld [vmem:[#allocation5 + $0xda0] sm:$0xff]
    %v642 = vld [vmem:[#allocation5 + $0xda8] sm:$0xff]
    %v643 = vld [vmem:[#allocation5 + $0xdb0] sm:$0xff]
    %v644 = vld [vmem:[#allocation5 + $0xdb8] sm:$0xff]
    %v645 = vld [vmem:[#allocation5 + $0xdc0] sm:$0xff]
    %v646 = vld [vmem:[#allocation5 + $0xdc8] sm:$0xff]
    %v647 = vld [vmem:[#allocation5 + $0xdd0] sm:$0xff]
    %v648 = vld [vmem:[#allocation5 + $0xdd8] sm:$0xff]
    %v649 = vld [vmem:[#allocation5 + $0xde0] sm:$0xff]
    %v650 = vld [vmem:[#allocation5 + $0xde8] sm:$0xff]
    %v651 = vld [vmem:[#allocation5 + $0xdf0] sm:$0xff]
    %v652 = vld [vmem:[#allocation5 + $0xdf8] sm:$0xff]
    %v653 = vld [vmem:[#allocation5 + $0xe00] sm:$0xff]
    %v654 = vld [vmem:[#allocation5 + $0xe08] sm:$0xff]
    %v655 = vld [vmem:[#allocation5 + $0xe10] sm:$0xff]
    %v656 = vld [vmem:[#allocation5 + $0xe18] sm:$0xff]
    %v657 = vld [vmem:[#allocation5 + $0xe20] sm:$0xff]
    %v658 = vld [vmem:[#allocation5 + $0xe28] sm:$0xff]
    %v659 = vld [vmem:[#allocation5 + $0xe30] sm:$0xff]
    %v660 = vld [vmem:[#allocation5 + $0xe38] sm:$0xff]
    %v661 = vld [vmem:[#allocation5 + $0xe40] sm:$0xff]
    %v662 = vld [vmem:[#allocation5 + $0xe48] sm:$0xff]
    %v663 = vld [vmem:[#allocation5 + $0xe50] sm:$0xff]
    %v664 = vld [vmem:[#allocation5 + $0xe58] sm:$0xff]
    %v665 = vld [vmem:[#allocation5 + $0xe60] sm:$0xff]
    %v666 = vld [vmem:[#allocation5 + $0xe68] sm:$0xff]
    %v667 = vld [vmem:[#allocation5 + $0xe70] sm:$0xff]
    %v668 = vld [vmem:[#allocation5 + $0xe78] sm:$0xff]
    %v669 = vld [vmem:[#allocation5 + $0xe80] sm:$0xff]
    %v670 = vld [vmem:[#allocation5 + $0xe88] sm:$0xff]
    %v671 = vld [vmem:[#allocation5 + $0xe90] sm:$0xff]
    %v672 = vld [vmem:[#allocation5 + $0xe98] sm:$0xff]
    %v673 = vld [vmem:[#allocation5 + $0xea0] sm:$0xff]
    %v674 = vld [vmem:[#allocation5 + $0xea8] sm:$0xff]
    %v675 = vld [vmem:[#allocation5 + $0xeb0] sm:$0xff]
    %v676 = vld [vmem:[#allocation5 + $0xeb8] sm:$0xff]
    %v677 = vld [vmem:[#allocation5 + $0xec0] sm:$0xff]
    %v678 = vld [vmem:[#allocation5 + $0xec8] sm:$0xff]
    %v679 = vld [vmem:[#allocation5 + $0xed0] sm:$0xff]
    %v680 = vld [vmem:[#allocation5 + $0xed8] sm:$0xff]
    %v681 = vld [vmem:[#allocation5 + $0xee0] sm:$0xff]
    %v682 = vld [vmem:[#allocation5 + $0xee8] sm:$0xff]
    %v683 = vld [vmem:[#allocation5 + $0xef0] sm:$0xff]
    %v684 = vld [vmem:[#allocation5 + $0xef8] sm:$0xff]
    %v685 = vld [vmem:[#allocation5 + $0xf00] sm:$0xff]
    %v686 = vld [vmem:[#allocation5 + $0xf08] sm:$0xff]
    %v687 = vld [vmem:[#allocation5 + $0xf10] sm:$0xff]
    %v688 = vld [vmem:[#allocation5 + $0xf18] sm:$0xff]
    %v689 = vld [vmem:[#allocation5 + $0xf20] sm:$0xff]
    %v690 = vld [vmem:[#allocation5 + $0xf28] sm:$0xff]
    %v691 = vld [vmem:[#allocation5 + $0xf30] sm:$0xff]
    %v692 = vld [vmem:[#allocation5 + $0xf38] sm:$0xff]
    %v693 = vld [vmem:[#allocation5 + $0xf40] sm:$0xff]
    %v694 = vld [vmem:[#allocation5 + $0xf48] sm:$0xff]
    %v695 = vld [vmem:[#allocation5 + $0xf50] sm:$0xff]
    %v696 = vld [vmem:[#allocation5 + $0xf58] sm:$0xff]
    %v697 = vld [vmem:[#allocation5 + $0xf60] sm:$0xff]
    %v698 = vld [vmem:[#allocation5 + $0xf68] sm:$0xff]
    %v699 = vld [vmem:[#allocation5 + $0xf70] sm:$0xff]
    %v700 = vld [vmem:[#allocation5 + $0xf78] sm:$0xff]
    %v701 = vld [vmem:[#allocation5 + $0xf80] sm:$0xff]
    %v702 = vld [vmem:[#allocation5 + $0xf88] sm:$0xff]
    %v703 = vld [vmem:[#allocation5 + $0xf90] sm:$0xff]
    %v704 = vld [vmem:[#allocation5 + $0xf98] sm:$0xff]
    %v705 = vld [vmem:[#allocation5 + $0xfa0] sm:$0xff]
    %v706 = vld [vmem:[#allocation5 + $0xfa8] sm:$0xff]
    %v707 = vld [vmem:[#allocation5 + $0xfb0] sm:$0xff]
    %v708 = vld [vmem:[#allocation5 + $0xfb8] sm:$0xff]
    %v709 = vld [vmem:[#allocation5 + $0xfc0] sm:$0xff]
    %v710 = vld [vmem:[#allocation5 + $0xfc8] sm:$0xff]
    %v711 = vld [vmem:[#allocation5 + $0xfd0] sm:$0xff]
    %v712 = vld [vmem:[#allocation5 + $0xfd8] sm:$0xff]
    %v713 = vld [vmem:[#allocation5 + $0xfe0] sm:$0xff]
    %v714 = vld [vmem:[#allocation5 + $0xfe8] sm:$0xff]
    %v715 = vld [vmem:[#allocation5 + $0xff0] sm:$0xff]
    %v716 = vld [vmem:[#allocation5 + $0xff8] sm:$0xff]
    %v717 = vunpack.c.l.s8.bf16 %v205
    %v718 = vunpack.c.l.s8.bf16 %v206
    %v719 = vunpack.c.l.s8.bf16 %v207
    %v720 = vunpack.c.l.s8.bf16 %v208
    %v721 = vunpack.c.l.s8.bf16 %v209
    %v722 = vunpack.c.l.s8.bf16 %v210
    %v723 = vunpack.c.l.s8.bf16 %v211
    %v724 = vunpack.c.l.s8.bf16 %v212
    %v725 = vunpack.c.h.s8.bf16 %v205
    %v726 = vunpack.c.h.s8.bf16 %v206
    %v727 = vunpack.c.h.s8.bf16 %v207
    %v728 = vunpack.c.h.s8.bf16 %v208
    %v729 = vunpack.c.h.s8.bf16 %v209
    %v730 = vunpack.c.h.s8.bf16 %v210
    %v731 = vunpack.c.h.s8.bf16 %v211
    %v732 = vunpack.c.h.s8.bf16 %v212
    %v733 = vunpack.c.l.s8.bf16 %v213
    %v734 = vunpack.c.l.s8.bf16 %v214
    %v735 = vunpack.c.l.s8.bf16 %v215
    %v736 = vunpack.c.l.s8.bf16 %v216
    %v737 = vunpack.c.l.s8.bf16 %v217
    %v738 = vunpack.c.l.s8.bf16 %v218
    %v739 = vunpack.c.l.s8.bf16 %v219
    %v740 = vunpack.c.l.s8.bf16 %v220
    %v741 = vunpack.c.h.s8.bf16 %v213
    %v742 = vunpack.c.h.s8.bf16 %v214
    %v743 = vunpack.c.h.s8.bf16 %v215
    %v744 = vunpack.c.h.s8.bf16 %v216
    %v745 = vunpack.c.h.s8.bf16 %v217
    %v746 = vunpack.c.h.s8.bf16 %v218
    %v747 = vunpack.c.h.s8.bf16 %v219
    %v748 = vunpack.c.h.s8.bf16 %v220
    %v749 = vunpack.c.l.s8.bf16 %v221
    %v750 = vunpack.c.l.s8.bf16 %v222
    %v751 = vunpack.c.l.s8.bf16 %v223
    %v752 = vunpack.c.l.s8.bf16 %v224
    %v753 = vunpack.c.l.s8.bf16 %v225
    %v754 = vunpack.c.l.s8.bf16 %v226
    %v755 = vunpack.c.l.s8.bf16 %v227
    %v756 = vunpack.c.l.s8.bf16 %v228
    %v757 = vunpack.c.h.s8.bf16 %v221
    %v758 = vunpack.c.h.s8.bf16 %v222
    %v759 = vunpack.c.h.s8.bf16 %v223
    %v760 = vunpack.c.h.s8.bf16 %v224
    %v761 = vunpack.c.h.s8.bf16 %v225
    %v762 = vunpack.c.h.s8.bf16 %v226
    %v763 = vunpack.c.h.s8.bf16 %v227
    %v764 = vunpack.c.h.s8.bf16 %v228
    %v765 = vunpack.c.l.s8.bf16 %v229
    %v766 = vunpack.c.l.s8.bf16 %v230
    %v767 = vunpack.c.l.s8.bf16 %v231
    %v768 = vunpack.c.l.s8.bf16 %v232
    %v769 = vunpack.c.l.s8.bf16 %v233
    %v770 = vunpack.c.l.s8.bf16 %v234
    %v771 = vunpack.c.l.s8.bf16 %v235
    %v772 = vunpack.c.l.s8.bf16 %v236
    %v773 = vunpack.c.h.s8.bf16 %v229
    %v774 = vunpack.c.h.s8.bf16 %v230
    %v775 = vunpack.c.h.s8.bf16 %v231
    %v776 = vunpack.c.h.s8.bf16 %v232
    %v777 = vunpack.c.h.s8.bf16 %v233
    %v778 = vunpack.c.h.s8.bf16 %v234
    %v779 = vunpack.c.h.s8.bf16 %v235
    %v780 = vunpack.c.h.s8.bf16 %v236
    %v781 = vunpack.c.l.s8.bf16 %v237
    %v782 = vunpack.c.l.s8.bf16 %v238
    %v783 = vunpack.c.l.s8.bf16 %v239
    %v784 = vunpack.c.l.s8.bf16 %v240
    %v785 = vunpack.c.l.s8.bf16 %v241
    %v786 = vunpack.c.l.s8.bf16 %v242
    %v787 = vunpack.c.l.s8.bf16 %v243
    %v788 = vunpack.c.l.s8.bf16 %v244
    %v789 = vunpack.c.h.s8.bf16 %v237
    %v790 = vunpack.c.h.s8.bf16 %v238
    %v791 = vunpack.c.h.s8.bf16 %v239
    %v792 = vunpack.c.h.s8.bf16 %v240
    %v793 = vunpack.c.h.s8.bf16 %v241
    %v794 = vunpack.c.h.s8.bf16 %v242
    %v795 = vunpack.c.h.s8.bf16 %v243
    %v796 = vunpack.c.h.s8.bf16 %v244
    %v797 = vunpack.c.l.s8.bf16 %v245
    %v798 = vunpack.c.l.s8.bf16 %v246
    %v799 = vunpack.c.l.s8.bf16 %v247
    %v800 = vunpack.c.l.s8.bf16 %v248
    %v801 = vunpack.c.l.s8.bf16 %v249
    %v802 = vunpack.c.l.s8.bf16 %v250
    %v803 = vunpack.c.l.s8.bf16 %v251
    %v804 = vunpack.c.l.s8.bf16 %v252
    %v805 = vunpack.c.h.s8.bf16 %v245
    %v806 = vunpack.c.h.s8.bf16 %v246
    %v807 = vunpack.c.h.s8.bf16 %v247
    %v808 = vunpack.c.h.s8.bf16 %v248
    %v809 = vunpack.c.h.s8.bf16 %v249
    %v810 = vunpack.c.h.s8.bf16 %v250
    %v811 = vunpack.c.h.s8.bf16 %v251
    %v812 = vunpack.c.h.s8.bf16 %v252
    %v813 = vunpack.c.l.s8.bf16 %v253
    %v814 = vunpack.c.l.s8.bf16 %v254
    %v815 = vunpack.c.l.s8.bf16 %v255
    %v816 = vunpack.c.l.s8.bf16 %v256
    %v817 = vunpack.c.l.s8.bf16 %v257
    %v818 = vunpack.c.l.s8.bf16 %v258
    %v819 = vunpack.c.l.s8.bf16 %v259
    %v820 = vunpack.c.l.s8.bf16 %v260
    %v821 = vunpack.c.h.s8.bf16 %v253
    %v822 = vunpack.c.h.s8.bf16 %v254
    %v823 = vunpack.c.h.s8.bf16 %v255
    %v824 = vunpack.c.h.s8.bf16 %v256
    %v825 = vunpack.c.h.s8.bf16 %v257
    %v826 = vunpack.c.h.s8.bf16 %v258
    %v827 = vunpack.c.h.s8.bf16 %v259
    %v828 = vunpack.c.h.s8.bf16 %v260
    %v829 = vunpack.c.l.s8.bf16 %v261
    %v830 = vunpack.c.l.s8.bf16 %v262
    %v831 = vunpack.c.l.s8.bf16 %v263
    %v832 = vunpack.c.l.s8.bf16 %v264
    %v833 = vunpack.c.l.s8.bf16 %v265
    %v834 = vunpack.c.l.s8.bf16 %v266
    %v835 = vunpack.c.l.s8.bf16 %v267
    %v836 = vunpack.c.l.s8.bf16 %v268
    %v837 = vunpack.c.h.s8.bf16 %v261
    %v838 = vunpack.c.h.s8.bf16 %v262
    %v839 = vunpack.c.h.s8.bf16 %v263
    %v840 = vunpack.c.h.s8.bf16 %v264
    %v841 = vunpack.c.h.s8.bf16 %v265
    %v842 = vunpack.c.h.s8.bf16 %v266
    %v843 = vunpack.c.h.s8.bf16 %v267
    %v844 = vunpack.c.h.s8.bf16 %v268
    %v845 = vunpack.c.l.s8.bf16 %v269
    %v846 = vunpack.c.l.s8.bf16 %v270
    %v847 = vunpack.c.l.s8.bf16 %v271
    %v848 = vunpack.c.l.s8.bf16 %v272
    %v849 = vunpack.c.l.s8.bf16 %v273
    %v850 = vunpack.c.l.s8.bf16 %v274
    %v851 = vunpack.c.l.s8.bf16 %v275
    %v852 = vunpack.c.l.s8.bf16 %v276
    %v853 = vunpack.c.h.s8.bf16 %v269
    %v854 = vunpack.c.h.s8.bf16 %v270
    %v855 = vunpack.c.h.s8.bf16 %v271
    %v856 = vunpack.c.h.s8.bf16 %v272
    %v857 = vunpack.c.h.s8.bf16 %v273
    %v858 = vunpack.c.h.s8.bf16 %v274
    %v859 = vunpack.c.h.s8.bf16 %v275
    %v860 = vunpack.c.h.s8.bf16 %v276
    %v861 = vunpack.c.l.s8.bf16 %v277
    %v862 = vunpack.c.l.s8.bf16 %v278
    %v863 = vunpack.c.l.s8.bf16 %v279
    %v864 = vunpack.c.l.s8.bf16 %v280
    %v865 = vunpack.c.l.s8.bf16 %v281
    %v866 = vunpack.c.l.s8.bf16 %v282
    %v867 = vunpack.c.l.s8.bf16 %v283
    %v868 = vunpack.c.l.s8.bf16 %v284
    %v869 = vunpack.c.h.s8.bf16 %v277
    %v870 = vunpack.c.h.s8.bf16 %v278
    %v871 = vunpack.c.h.s8.bf16 %v279
    %v872 = vunpack.c.h.s8.bf16 %v280
    %v873 = vunpack.c.h.s8.bf16 %v281
    %v874 = vunpack.c.h.s8.bf16 %v282
    %v875 = vunpack.c.h.s8.bf16 %v283
    %v876 = vunpack.c.h.s8.bf16 %v284
    %v877 = vunpack.c.l.s8.bf16 %v285
    %v878 = vunpack.c.l.s8.bf16 %v286
    %v879 = vunpack.c.l.s8.bf16 %v287
    %v880 = vunpack.c.l.s8.bf16 %v288
    %v881 = vunpack.c.l.s8.bf16 %v289
    %v882 = vunpack.c.l.s8.bf16 %v290
    %v883 = vunpack.c.l.s8.bf16 %v291
    %v884 = vunpack.c.l.s8.bf16 %v292
    %v885 = vunpack.c.h.s8.bf16 %v285
    %v886 = vunpack.c.h.s8.bf16 %v286
    %v887 = vunpack.c.h.s8.bf16 %v287
    %v888 = vunpack.c.h.s8.bf16 %v288
    %v889 = vunpack.c.h.s8.bf16 %v289
    %v890 = vunpack.c.h.s8.bf16 %v290
    %v891 = vunpack.c.h.s8.bf16 %v291
    %v892 = vunpack.c.h.s8.bf16 %v292
    %v893 = vunpack.c.l.s8.bf16 %v293
    %v894 = vunpack.c.l.s8.bf16 %v294
    %v895 = vunpack.c.l.s8.bf16 %v295
    %v896 = vunpack.c.l.s8.bf16 %v296
    %v897 = vunpack.c.l.s8.bf16 %v297
    %v898 = vunpack.c.l.s8.bf16 %v298
    %v899 = vunpack.c.l.s8.bf16 %v299
    %v900 = vunpack.c.l.s8.bf16 %v300
    %v901 = vunpack.c.h.s8.bf16 %v293
    %v902 = vunpack.c.h.s8.bf16 %v294
    %v903 = vunpack.c.h.s8.bf16 %v295
    %v904 = vunpack.c.h.s8.bf16 %v296
    %v905 = vunpack.c.h.s8.bf16 %v297
    %v906 = vunpack.c.h.s8.bf16 %v298
    %v907 = vunpack.c.h.s8.bf16 %v299
    %v908 = vunpack.c.h.s8.bf16 %v300
    %v909 = vunpack.c.l.s8.bf16 %v301
    %v910 = vunpack.c.l.s8.bf16 %v302
    %v911 = vunpack.c.l.s8.bf16 %v303
    %v912 = vunpack.c.l.s8.bf16 %v304
    %v913 = vunpack.c.l.s8.bf16 %v305
    %v914 = vunpack.c.l.s8.bf16 %v306
    %v915 = vunpack.c.l.s8.bf16 %v307
    %v916 = vunpack.c.l.s8.bf16 %v308
    %v917 = vunpack.c.h.s8.bf16 %v301
    %v918 = vunpack.c.h.s8.bf16 %v302
    %v919 = vunpack.c.h.s8.bf16 %v303
    %v920 = vunpack.c.h.s8.bf16 %v304
    %v921 = vunpack.c.h.s8.bf16 %v305
    %v922 = vunpack.c.h.s8.bf16 %v306
    %v923 = vunpack.c.h.s8.bf16 %v307
    %v924 = vunpack.c.h.s8.bf16 %v308
    %v925 = vunpack.c.l.s8.bf16 %v309
    %v926 = vunpack.c.l.s8.bf16 %v310
    %v927 = vunpack.c.l.s8.bf16 %v311
    %v928 = vunpack.c.l.s8.bf16 %v312
    %v929 = vunpack.c.l.s8.bf16 %v313
    %v930 = vunpack.c.l.s8.bf16 %v314
    %v931 = vunpack.c.l.s8.bf16 %v315
    %v932 = vunpack.c.l.s8.bf16 %v316
    %v933 = vunpack.c.h.s8.bf16 %v309
    %v934 = vunpack.c.h.s8.bf16 %v310
    %v935 = vunpack.c.h.s8.bf16 %v311
    %v936 = vunpack.c.h.s8.bf16 %v312
    %v937 = vunpack.c.h.s8.bf16 %v313
    %v938 = vunpack.c.h.s8.bf16 %v314
    %v939 = vunpack.c.h.s8.bf16 %v315
    %v940 = vunpack.c.h.s8.bf16 %v316
    %v941 = vunpack.c.l.s8.bf16 %v317
    %v942 = vunpack.c.l.s8.bf16 %v318
    %v943 = vunpack.c.l.s8.bf16 %v319
    %v944 = vunpack.c.l.s8.bf16 %v320
    %v945 = vunpack.c.l.s8.bf16 %v321
    %v946 = vunpack.c.l.s8.bf16 %v322
    %v947 = vunpack.c.l.s8.bf16 %v323
    %v948 = vunpack.c.l.s8.bf16 %v324
    %v949 = vunpack.c.h.s8.bf16 %v317
    %v950 = vunpack.c.h.s8.bf16 %v318
    %v951 = vunpack.c.h.s8.bf16 %v319
    %v952 = vunpack.c.h.s8.bf16 %v320
    %v953 = vunpack.c.h.s8.bf16 %v321
    %v954 = vunpack.c.h.s8.bf16 %v322
    %v955 = vunpack.c.h.s8.bf16 %v323
    %v956 = vunpack.c.h.s8.bf16 %v324
    %v957 = vunpack.c.l.s8.bf16 %v325
    %v958 = vunpack.c.l.s8.bf16 %v326
    %v959 = vunpack.c.l.s8.bf16 %v327
    %v960 = vunpack.c.l.s8.bf16 %v328
    %v961 = vunpack.c.l.s8.bf16 %v329
    %v962 = vunpack.c.l.s8.bf16 %v330
    %v963 = vunpack.c.l.s8.bf16 %v331
    %v964 = vunpack.c.l.s8.bf16 %v332
    %v965 = vunpack.c.h.s8.bf16 %v325
    %v966 = vunpack.c.h.s8.bf16 %v326
    %v967 = vunpack.c.h.s8.bf16 %v327
    %v968 = vunpack.c.h.s8.bf16 %v328
    %v969 = vunpack.c.h.s8.bf16 %v329
    %v970 = vunpack.c.h.s8.bf16 %v330
    %v971 = vunpack.c.h.s8.bf16 %v331
    %v972 = vunpack.c.h.s8.bf16 %v332
    %v973 = vunpack.c.l.s8.bf16 %v333
    %v974 = vunpack.c.l.s8.bf16 %v334
    %v975 = vunpack.c.l.s8.bf16 %v335
    %v976 = vunpack.c.l.s8.bf16 %v336
    %v977 = vunpack.c.l.s8.bf16 %v337
    %v978 = vunpack.c.l.s8.bf16 %v338
    %v979 = vunpack.c.l.s8.bf16 %v339
    %v980 = vunpack.c.l.s8.bf16 %v340
    %v981 = vunpack.c.h.s8.bf16 %v333
    %v982 = vunpack.c.h.s8.bf16 %v334
    %v983 = vunpack.c.h.s8.bf16 %v335
    %v984 = vunpack.c.h.s8.bf16 %v336
    %v985 = vunpack.c.h.s8.bf16 %v337
    %v986 = vunpack.c.h.s8.bf16 %v338
    %v987 = vunpack.c.h.s8.bf16 %v339
    %v988 = vunpack.c.h.s8.bf16 %v340
    %v989 = vunpack.c.l.s8.bf16 %v341
    %v990 = vunpack.c.l.s8.bf16 %v342
    %v991 = vunpack.c.l.s8.bf16 %v343
    %v992 = vunpack.c.l.s8.bf16 %v344
    %v993 = vunpack.c.l.s8.bf16 %v345
    %v994 = vunpack.c.l.s8.bf16 %v346
    %v995 = vunpack.c.l.s8.bf16 %v347
    %v996 = vunpack.c.l.s8.bf16 %v348
    %v997 = vunpack.c.h.s8.bf16 %v341
    %v998 = vunpack.c.h.s8.bf16 %v342
    %v999 = vunpack.c.h.s8.bf16 %v343
    %v1000 = vunpack.c.h.s8.bf16 %v344
    %v1001 = vunpack.c.h.s8.bf16 %v345
    %v1002 = vunpack.c.h.s8.bf16 %v346
    %v1003 = vunpack.c.h.s8.bf16 %v347
    %v1004 = vunpack.c.h.s8.bf16 %v348
    %v1005 = vunpack.c.l.s8.bf16 %v349
    %v1006 = vunpack.c.l.s8.bf16 %v350
    %v1007 = vunpack.c.l.s8.bf16 %v351
    %v1008 = vunpack.c.l.s8.bf16 %v352
    %v1009 = vunpack.c.l.s8.bf16 %v353
    %v1010 = vunpack.c.l.s8.bf16 %v354
    %v1011 = vunpack.c.l.s8.bf16 %v355
    %v1012 = vunpack.c.l.s8.bf16 %v356
    %v1013 = vunpack.c.h.s8.bf16 %v349
    %v1014 = vunpack.c.h.s8.bf16 %v350
    %v1015 = vunpack.c.h.s8.bf16 %v351
    %v1016 = vunpack.c.h.s8.bf16 %v352
    %v1017 = vunpack.c.h.s8.bf16 %v353
    %v1018 = vunpack.c.h.s8.bf16 %v354
    %v1019 = vunpack.c.h.s8.bf16 %v355
    %v1020 = vunpack.c.h.s8.bf16 %v356
    %v1021 = vunpack.c.l.s8.bf16 %v357
    %v1022 = vunpack.c.l.s8.bf16 %v358
    %v1023 = vunpack.c.l.s8.bf16 %v359
    %v1024 = vunpack.c.l.s8.bf16 %v360
    %v1025 = vunpack.c.l.s8.bf16 %v361
    %v1026 = vunpack.c.l.s8.bf16 %v362
    %v1027 = vunpack.c.l.s8.bf16 %v363
    %v1028 = vunpack.c.l.s8.bf16 %v364
    %v1029 = vunpack.c.h.s8.bf16 %v357
    %v1030 = vunpack.c.h.s8.bf16 %v358
    %v1031 = vunpack.c.h.s8.bf16 %v359
    %v1032 = vunpack.c.h.s8.bf16 %v360
    %v1033 = vunpack.c.h.s8.bf16 %v361
    %v1034 = vunpack.c.h.s8.bf16 %v362
    %v1035 = vunpack.c.h.s8.bf16 %v363
    %v1036 = vunpack.c.h.s8.bf16 %v364
    %v1037 = vunpack.c.l.s8.bf16 %v365
    %v1038 = vunpack.c.l.s8.bf16 %v366
    %v1039 = vunpack.c.l.s8.bf16 %v367
    %v1040 = vunpack.c.l.s8.bf16 %v368
    %v1041 = vunpack.c.l.s8.bf16 %v369
    %v1042 = vunpack.c.l.s8.bf16 %v370
    %v1043 = vunpack.c.l.s8.bf16 %v371
    %v1044 = vunpack.c.l.s8.bf16 %v372
    %v1045 = vunpack.c.h.s8.bf16 %v365
    %v1046 = vunpack.c.h.s8.bf16 %v366
    %v1047 = vunpack.c.h.s8.bf16 %v367
    %v1048 = vunpack.c.h.s8.bf16 %v368
    %v1049 = vunpack.c.h.s8.bf16 %v369
    %v1050 = vunpack.c.h.s8.bf16 %v370
    %v1051 = vunpack.c.h.s8.bf16 %v371
    %v1052 = vunpack.c.h.s8.bf16 %v372
    %v1053 = vunpack.c.l.s8.bf16 %v373
    %v1054 = vunpack.c.l.s8.bf16 %v374
    %v1055 = vunpack.c.l.s8.bf16 %v375
    %v1056 = vunpack.c.l.s8.bf16 %v376
    %v1057 = vunpack.c.l.s8.bf16 %v377
    %v1058 = vunpack.c.l.s8.bf16 %v378
    %v1059 = vunpack.c.l.s8.bf16 %v379
    %v1060 = vunpack.c.l.s8.bf16 %v380
    %v1061 = vunpack.c.h.s8.bf16 %v373
    %v1062 = vunpack.c.h.s8.bf16 %v374
    %v1063 = vunpack.c.h.s8.bf16 %v375
    %v1064 = vunpack.c.h.s8.bf16 %v376
    %v1065 = vunpack.c.h.s8.bf16 %v377
    %v1066 = vunpack.c.h.s8.bf16 %v378
    %v1067 = vunpack.c.h.s8.bf16 %v379
    %v1068 = vunpack.c.h.s8.bf16 %v380
    %v1069 = vunpack.c.l.s8.bf16 %v381
    %v1070 = vunpack.c.l.s8.bf16 %v382
    %v1071 = vunpack.c.l.s8.bf16 %v383
    %v1072 = vunpack.c.l.s8.bf16 %v384
    %v1073 = vunpack.c.l.s8.bf16 %v385
    %v1074 = vunpack.c.l.s8.bf16 %v386
    %v1075 = vunpack.c.l.s8.bf16 %v387
    %v1076 = vunpack.c.l.s8.bf16 %v388
    %v1077 = vunpack.c.h.s8.bf16 %v381
    %v1078 = vunpack.c.h.s8.bf16 %v382
    %v1079 = vunpack.c.h.s8.bf16 %v383
    %v1080 = vunpack.c.h.s8.bf16 %v384
    %v1081 = vunpack.c.h.s8.bf16 %v385
    %v1082 = vunpack.c.h.s8.bf16 %v386
    %v1083 = vunpack.c.h.s8.bf16 %v387
    %v1084 = vunpack.c.h.s8.bf16 %v388
    %v1085 = vunpack.c.l.s8.bf16 %v389
    %v1086 = vunpack.c.l.s8.bf16 %v390
    %v1087 = vunpack.c.l.s8.bf16 %v391
    %v1088 = vunpack.c.l.s8.bf16 %v392
    %v1089 = vunpack.c.l.s8.bf16 %v393
    %v1090 = vunpack.c.l.s8.bf16 %v394
    %v1091 = vunpack.c.l.s8.bf16 %v395
    %v1092 = vunpack.c.l.s8.bf16 %v396
    %v1093 = vunpack.c.h.s8.bf16 %v389
    %v1094 = vunpack.c.h.s8.bf16 %v390
    %v1095 = vunpack.c.h.s8.bf16 %v391
    %v1096 = vunpack.c.h.s8.bf16 %v392
    %v1097 = vunpack.c.h.s8.bf16 %v393
    %v1098 = vunpack.c.h.s8.bf16 %v394
    %v1099 = vunpack.c.h.s8.bf16 %v395
    %v1100 = vunpack.c.h.s8.bf16 %v396
    %v1101 = vunpack.c.l.s8.bf16 %v397
    %v1102 = vunpack.c.l.s8.bf16 %v398
    %v1103 = vunpack.c.l.s8.bf16 %v399
    %v1104 = vunpack.c.l.s8.bf16 %v400
    %v1105 = vunpack.c.l.s8.bf16 %v401
    %v1106 = vunpack.c.l.s8.bf16 %v402
    %v1107 = vunpack.c.l.s8.bf16 %v403
    %v1108 = vunpack.c.l.s8.bf16 %v404
    %v1109 = vunpack.c.h.s8.bf16 %v397
    %v1110 = vunpack.c.h.s8.bf16 %v398
    %v1111 = vunpack.c.h.s8.bf16 %v399
    %v1112 = vunpack.c.h.s8.bf16 %v400
    %v1113 = vunpack.c.h.s8.bf16 %v401
    %v1114 = vunpack.c.h.s8.bf16 %v402
    %v1115 = vunpack.c.h.s8.bf16 %v403
    %v1116 = vunpack.c.h.s8.bf16 %v404
    %v1117 = vunpack.c.l.s8.bf16 %v405
    %v1118 = vunpack.c.l.s8.bf16 %v406
    %v1119 = vunpack.c.l.s8.bf16 %v407
    %v1120 = vunpack.c.l.s8.bf16 %v408
    %v1121 = vunpack.c.l.s8.bf16 %v409
    %v1122 = vunpack.c.l.s8.bf16 %v410
    %v1123 = vunpack.c.l.s8.bf16 %v411
    %v1124 = vunpack.c.l.s8.bf16 %v412
    %v1125 = vunpack.c.h.s8.bf16 %v405
    %v1126 = vunpack.c.h.s8.bf16 %v406
    %v1127 = vunpack.c.h.s8.bf16 %v407
    %v1128 = vunpack.c.h.s8.bf16 %v408
    %v1129 = vunpack.c.h.s8.bf16 %v409
    %v1130 = vunpack.c.h.s8.bf16 %v410
    %v1131 = vunpack.c.h.s8.bf16 %v411
    %v1132 = vunpack.c.h.s8.bf16 %v412
    %v1133 = vunpack.c.l.s8.bf16 %v413
    %v1134 = vunpack.c.l.s8.bf16 %v414
    %v1135 = vunpack.c.l.s8.bf16 %v415
    %v1136 = vunpack.c.l.s8.bf16 %v416
    %v1137 = vunpack.c.l.s8.bf16 %v417
    %v1138 = vunpack.c.l.s8.bf16 %v418
    %v1139 = vunpack.c.l.s8.bf16 %v419
    %v1140 = vunpack.c.l.s8.bf16 %v420
    %v1141 = vunpack.c.h.s8.bf16 %v413
    %v1142 = vunpack.c.h.s8.bf16 %v414
    %v1143 = vunpack.c.h.s8.bf16 %v415
    %v1144 = vunpack.c.h.s8.bf16 %v416
    %v1145 = vunpack.c.h.s8.bf16 %v417
    %v1146 = vunpack.c.h.s8.bf16 %v418
    %v1147 = vunpack.c.h.s8.bf16 %v419
    %v1148 = vunpack.c.h.s8.bf16 %v420
    %v1149 = vunpack.c.l.s8.bf16 %v421
    %v1150 = vunpack.c.l.s8.bf16 %v422
    %v1151 = vunpack.c.l.s8.bf16 %v423
    %v1152 = vunpack.c.l.s8.bf16 %v424
    %v1153 = vunpack.c.l.s8.bf16 %v425
    %v1154 = vunpack.c.l.s8.bf16 %v426
    %v1155 = vunpack.c.l.s8.bf16 %v427
    %v1156 = vunpack.c.l.s8.bf16 %v428
    %v1157 = vunpack.c.h.s8.bf16 %v421
    %v1158 = vunpack.c.h.s8.bf16 %v422
    %v1159 = vunpack.c.h.s8.bf16 %v423
    %v1160 = vunpack.c.h.s8.bf16 %v424
    %v1161 = vunpack.c.h.s8.bf16 %v425
    %v1162 = vunpack.c.h.s8.bf16 %v426
    %v1163 = vunpack.c.h.s8.bf16 %v427
    %v1164 = vunpack.c.h.s8.bf16 %v428
    %v1165 = vunpack.c.l.s8.bf16 %v429
    %v1166 = vunpack.c.l.s8.bf16 %v430
    %v1167 = vunpack.c.l.s8.bf16 %v431
    %v1168 = vunpack.c.l.s8.bf16 %v432
    %v1169 = vunpack.c.l.s8.bf16 %v433
    %v1170 = vunpack.c.l.s8.bf16 %v434
    %v1171 = vunpack.c.l.s8.bf16 %v435
    %v1172 = vunpack.c.l.s8.bf16 %v436
    %v1173 = vunpack.c.h.s8.bf16 %v429
    %v1174 = vunpack.c.h.s8.bf16 %v430
    %v1175 = vunpack.c.h.s8.bf16 %v431
    %v1176 = vunpack.c.h.s8.bf16 %v432
    %v1177 = vunpack.c.h.s8.bf16 %v433
    %v1178 = vunpack.c.h.s8.bf16 %v434
    %v1179 = vunpack.c.h.s8.bf16 %v435
    %v1180 = vunpack.c.h.s8.bf16 %v436
    %v1181 = vunpack.c.l.s8.bf16 %v437
    %v1182 = vunpack.c.l.s8.bf16 %v438
    %v1183 = vunpack.c.l.s8.bf16 %v439
    %v1184 = vunpack.c.l.s8.bf16 %v440
    %v1185 = vunpack.c.l.s8.bf16 %v441
    %v1186 = vunpack.c.l.s8.bf16 %v442
    %v1187 = vunpack.c.l.s8.bf16 %v443
    %v1188 = vunpack.c.l.s8.bf16 %v444
    %v1189 = vunpack.c.h.s8.bf16 %v437
    %v1190 = vunpack.c.h.s8.bf16 %v438
    %v1191 = vunpack.c.h.s8.bf16 %v439
    %v1192 = vunpack.c.h.s8.bf16 %v440
    %v1193 = vunpack.c.h.s8.bf16 %v441
    %v1194 = vunpack.c.h.s8.bf16 %v442
    %v1195 = vunpack.c.h.s8.bf16 %v443
    %v1196 = vunpack.c.h.s8.bf16 %v444
    %v1197 = vunpack.c.l.s8.bf16 %v445
    %v1198 = vunpack.c.l.s8.bf16 %v446
    %v1199 = vunpack.c.l.s8.bf16 %v447
    %v1200 = vunpack.c.l.s8.bf16 %v448
    %v1201 = vunpack.c.l.s8.bf16 %v449
    %v1202 = vunpack.c.l.s8.bf16 %v450
    %v1203 = vunpack.c.l.s8.bf16 %v451
    %v1204 = vunpack.c.l.s8.bf16 %v452
    %v1205 = vunpack.c.h.s8.bf16 %v445
    %v1206 = vunpack.c.h.s8.bf16 %v446
    %v1207 = vunpack.c.h.s8.bf16 %v447
    %v1208 = vunpack.c.h.s8.bf16 %v448
    %v1209 = vunpack.c.h.s8.bf16 %v449
    %v1210 = vunpack.c.h.s8.bf16 %v450
    %v1211 = vunpack.c.h.s8.bf16 %v451
    %v1212 = vunpack.c.h.s8.bf16 %v452
    %v1213 = vunpack.c.l.s8.bf16 %v453
    %v1214 = vunpack.c.l.s8.bf16 %v454
    %v1215 = vunpack.c.l.s8.bf16 %v455
    %v1216 = vunpack.c.l.s8.bf16 %v456
    %v1217 = vunpack.c.l.s8.bf16 %v457
    %v1218 = vunpack.c.l.s8.bf16 %v458
    %v1219 = vunpack.c.l.s8.bf16 %v459
    %v1220 = vunpack.c.l.s8.bf16 %v460
    %v1221 = vunpack.c.h.s8.bf16 %v453
    %v1222 = vunpack.c.h.s8.bf16 %v454
    %v1223 = vunpack.c.h.s8.bf16 %v455
    %v1224 = vunpack.c.h.s8.bf16 %v456
    %v1225 = vunpack.c.h.s8.bf16 %v457
    %v1226 = vunpack.c.h.s8.bf16 %v458
    %v1227 = vunpack.c.h.s8.bf16 %v459
    %v1228 = vunpack.c.h.s8.bf16 %v460
    %v1229 = vunpack.c.l.s8.bf16 %v461
    %v1230 = vunpack.c.l.s8.bf16 %v462
    %v1231 = vunpack.c.l.s8.bf16 %v463
    %v1232 = vunpack.c.l.s8.bf16 %v464
    %v1233 = vunpack.c.l.s8.bf16 %v465
    %v1234 = vunpack.c.l.s8.bf16 %v466
    %v1235 = vunpack.c.l.s8.bf16 %v467
    %v1236 = vunpack.c.l.s8.bf16 %v468
    %v1237 = vunpack.c.h.s8.bf16 %v461
    %v1238 = vunpack.c.h.s8.bf16 %v462
    %v1239 = vunpack.c.h.s8.bf16 %v463
    %v1240 = vunpack.c.h.s8.bf16 %v464
    %v1241 = vunpack.c.h.s8.bf16 %v465
    %v1242 = vunpack.c.h.s8.bf16 %v466
    %v1243 = vunpack.c.h.s8.bf16 %v467
    %v1244 = vunpack.c.h.s8.bf16 %v468
    %v1245 = vunpack.c.l.s8.bf16 %v469
    %v1246 = vunpack.c.l.s8.bf16 %v470
    %v1247 = vunpack.c.l.s8.bf16 %v471
    %v1248 = vunpack.c.l.s8.bf16 %v472
    %v1249 = vunpack.c.l.s8.bf16 %v473
    %v1250 = vunpack.c.l.s8.bf16 %v474
    %v1251 = vunpack.c.l.s8.bf16 %v475
    %v1252 = vunpack.c.l.s8.bf16 %v476
    %v1253 = vunpack.c.h.s8.bf16 %v469
    %v1254 = vunpack.c.h.s8.bf16 %v470
    %v1255 = vunpack.c.h.s8.bf16 %v471
    %v1256 = vunpack.c.h.s8.bf16 %v472
    %v1257 = vunpack.c.h.s8.bf16 %v473
    %v1258 = vunpack.c.h.s8.bf16 %v474
    %v1259 = vunpack.c.h.s8.bf16 %v475
    %v1260 = vunpack.c.h.s8.bf16 %v476
    %v1261 = vunpack.c.l.s8.bf16 %v477
    %v1262 = vunpack.c.l.s8.bf16 %v478
    %v1263 = vunpack.c.l.s8.bf16 %v479
    %v1264 = vunpack.c.l.s8.bf16 %v480
    %v1265 = vunpack.c.l.s8.bf16 %v481
    %v1266 = vunpack.c.l.s8.bf16 %v482
    %v1267 = vunpack.c.l.s8.bf16 %v483
    %v1268 = vunpack.c.l.s8.bf16 %v484
    %v1269 = vunpack.c.h.s8.bf16 %v477
    %v1270 = vunpack.c.h.s8.bf16 %v478
    %v1271 = vunpack.c.h.s8.bf16 %v479
    %v1272 = vunpack.c.h.s8.bf16 %v480
    %v1273 = vunpack.c.h.s8.bf16 %v481
    %v1274 = vunpack.c.h.s8.bf16 %v482
    %v1275 = vunpack.c.h.s8.bf16 %v483
    %v1276 = vunpack.c.h.s8.bf16 %v484
    %v1277 = vunpack.c.l.s8.bf16 %v485
    %v1278 = vunpack.c.l.s8.bf16 %v486
    %v1279 = vunpack.c.l.s8.bf16 %v487
    %v1280 = vunpack.c.l.s8.bf16 %v488
    %v1281 = vunpack.c.l.s8.bf16 %v489
    %v1282 = vunpack.c.l.s8.bf16 %v490
    %v1283 = vunpack.c.l.s8.bf16 %v491
    %v1284 = vunpack.c.l.s8.bf16 %v492
    %v1285 = vunpack.c.h.s8.bf16 %v485
    %v1286 = vunpack.c.h.s8.bf16 %v486
    %v1287 = vunpack.c.h.s8.bf16 %v487
    %v1288 = vunpack.c.h.s8.bf16 %v488
    %v1289 = vunpack.c.h.s8.bf16 %v489
    %v1290 = vunpack.c.h.s8.bf16 %v490
    %v1291 = vunpack.c.h.s8.bf16 %v491
    %v1292 = vunpack.c.h.s8.bf16 %v492
    %v1293 = vunpack.c.l.s8.bf16 %v493
    %v1294 = vunpack.c.l.s8.bf16 %v494
    %v1295 = vunpack.c.l.s8.bf16 %v495
    %v1296 = vunpack.c.l.s8.bf16 %v496
    %v1297 = vunpack.c.l.s8.bf16 %v497
    %v1298 = vunpack.c.l.s8.bf16 %v498
    %v1299 = vunpack.c.l.s8.bf16 %v499
    %v1300 = vunpack.c.l.s8.bf16 %v500
    %v1301 = vunpack.c.h.s8.bf16 %v493
    %v1302 = vunpack.c.h.s8.bf16 %v494
    %v1303 = vunpack.c.h.s8.bf16 %v495
    %v1304 = vunpack.c.h.s8.bf16 %v496
    %v1305 = vunpack.c.h.s8.bf16 %v497
    %v1306 = vunpack.c.h.s8.bf16 %v498
    %v1307 = vunpack.c.h.s8.bf16 %v499
    %v1308 = vunpack.c.h.s8.bf16 %v500
    %v1309 = vunpack.c.l.s8.bf16 %v501
    %v1310 = vunpack.c.l.s8.bf16 %v502
    %v1311 = vunpack.c.l.s8.bf16 %v503
    %v1312 = vunpack.c.l.s8.bf16 %v504
    %v1313 = vunpack.c.l.s8.bf16 %v505
    %v1314 = vunpack.c.l.s8.bf16 %v506
    %v1315 = vunpack.c.l.s8.bf16 %v507
    %v1316 = vunpack.c.l.s8.bf16 %v508
    %v1317 = vunpack.c.h.s8.bf16 %v501
    %v1318 = vunpack.c.h.s8.bf16 %v502
    %v1319 = vunpack.c.h.s8.bf16 %v503
    %v1320 = vunpack.c.h.s8.bf16 %v504
    %v1321 = vunpack.c.h.s8.bf16 %v505
    %v1322 = vunpack.c.h.s8.bf16 %v506
    %v1323 = vunpack.c.h.s8.bf16 %v507
    %v1324 = vunpack.c.h.s8.bf16 %v508
    %v1325 = vunpack.c.l.s8.bf16 %v509
    %v1326 = vunpack.c.l.s8.bf16 %v510
    %v1327 = vunpack.c.l.s8.bf16 %v511
    %v1328 = vunpack.c.l.s8.bf16 %v512
    %v1329 = vunpack.c.l.s8.bf16 %v513
    %v1330 = vunpack.c.l.s8.bf16 %v514
    %v1331 = vunpack.c.l.s8.bf16 %v515
    %v1332 = vunpack.c.l.s8.bf16 %v516
    %v1333 = vunpack.c.h.s8.bf16 %v509
    %v1334 = vunpack.c.h.s8.bf16 %v510
    %v1335 = vunpack.c.h.s8.bf16 %v511
    %v1336 = vunpack.c.h.s8.bf16 %v512
    %v1337 = vunpack.c.h.s8.bf16 %v513
    %v1338 = vunpack.c.h.s8.bf16 %v514
    %v1339 = vunpack.c.h.s8.bf16 %v515
    %v1340 = vunpack.c.h.s8.bf16 %v516
    %v1341 = vunpack.c.l.s8.bf16 %v517
    %v1342 = vunpack.c.l.s8.bf16 %v518
    %v1343 = vunpack.c.l.s8.bf16 %v519
    %v1344 = vunpack.c.l.s8.bf16 %v520
    %v1345 = vunpack.c.l.s8.bf16 %v521
    %v1346 = vunpack.c.l.s8.bf16 %v522
    %v1347 = vunpack.c.l.s8.bf16 %v523
    %v1348 = vunpack.c.l.s8.bf16 %v524
    %v1349 = vunpack.c.h.s8.bf16 %v517
    %v1350 = vunpack.c.h.s8.bf16 %v518
    %v1351 = vunpack.c.h.s8.bf16 %v519
    %v1352 = vunpack.c.h.s8.bf16 %v520
    %v1353 = vunpack.c.h.s8.bf16 %v521
    %v1354 = vunpack.c.h.s8.bf16 %v522
    %v1355 = vunpack.c.h.s8.bf16 %v523
    %v1356 = vunpack.c.h.s8.bf16 %v524
    %v1357 = vunpack.c.l.s8.bf16 %v525
    %v1358 = vunpack.c.l.s8.bf16 %v526
    %v1359 = vunpack.c.l.s8.bf16 %v527
    %v1360 = vunpack.c.l.s8.bf16 %v528
    %v1361 = vunpack.c.l.s8.bf16 %v529
    %v1362 = vunpack.c.l.s8.bf16 %v530
    %v1363 = vunpack.c.l.s8.bf16 %v531
    %v1364 = vunpack.c.l.s8.bf16 %v532
    %v1365 = vunpack.c.h.s8.bf16 %v525
    %v1366 = vunpack.c.h.s8.bf16 %v526
    %v1367 = vunpack.c.h.s8.bf16 %v527
    %v1368 = vunpack.c.h.s8.bf16 %v528
    %v1369 = vunpack.c.h.s8.bf16 %v529
    %v1370 = vunpack.c.h.s8.bf16 %v530
    %v1371 = vunpack.c.h.s8.bf16 %v531
    %v1372 = vunpack.c.h.s8.bf16 %v532
    %v1373 = vunpack.c.l.s8.bf16 %v533
    %v1374 = vunpack.c.l.s8.bf16 %v534
    %v1375 = vunpack.c.l.s8.bf16 %v535
    %v1376 = vunpack.c.l.s8.bf16 %v536
    %v1377 = vunpack.c.l.s8.bf16 %v537
    %v1378 = vunpack.c.l.s8.bf16 %v538
    %v1379 = vunpack.c.l.s8.bf16 %v539
    %v1380 = vunpack.c.l.s8.bf16 %v540
    %v1381 = vunpack.c.h.s8.bf16 %v533
    %v1382 = vunpack.c.h.s8.bf16 %v534
    %v1383 = vunpack.c.h.s8.bf16 %v535
    %v1384 = vunpack.c.h.s8.bf16 %v536
    %v1385 = vunpack.c.h.s8.bf16 %v537
    %v1386 = vunpack.c.h.s8.bf16 %v538
    %v1387 = vunpack.c.h.s8.bf16 %v539
    %v1388 = vunpack.c.h.s8.bf16 %v540
    %v1389 = vunpack.c.l.s8.bf16 %v541
    %v1390 = vunpack.c.l.s8.bf16 %v542
    %v1391 = vunpack.c.l.s8.bf16 %v543
    %v1392 = vunpack.c.l.s8.bf16 %v544
    %v1393 = vunpack.c.l.s8.bf16 %v545
    %v1394 = vunpack.c.l.s8.bf16 %v546
    %v1395 = vunpack.c.l.s8.bf16 %v547
    %v1396 = vunpack.c.l.s8.bf16 %v548
    %v1397 = vunpack.c.h.s8.bf16 %v541
    %v1398 = vunpack.c.h.s8.bf16 %v542
    %v1399 = vunpack.c.h.s8.bf16 %v543
    %v1400 = vunpack.c.h.s8.bf16 %v544
    %v1401 = vunpack.c.h.s8.bf16 %v545
    %v1402 = vunpack.c.h.s8.bf16 %v546
    %v1403 = vunpack.c.h.s8.bf16 %v547
    %v1404 = vunpack.c.h.s8.bf16 %v548
    %v1405 = vunpack.c.l.s8.bf16 %v549
    %v1406 = vunpack.c.l.s8.bf16 %v550
    %v1407 = vunpack.c.l.s8.bf16 %v551
    %v1408 = vunpack.c.l.s8.bf16 %v552
    %v1409 = vunpack.c.l.s8.bf16 %v553
    %v1410 = vunpack.c.l.s8.bf16 %v554
    %v1411 = vunpack.c.l.s8.bf16 %v555
    %v1412 = vunpack.c.l.s8.bf16 %v556
    %v1413 = vunpack.c.h.s8.bf16 %v549
    %v1414 = vunpack.c.h.s8.bf16 %v550
    %v1415 = vunpack.c.h.s8.bf16 %v551
    %v1416 = vunpack.c.h.s8.bf16 %v552
    %v1417 = vunpack.c.h.s8.bf16 %v553
    %v1418 = vunpack.c.h.s8.bf16 %v554
    %v1419 = vunpack.c.h.s8.bf16 %v555
    %v1420 = vunpack.c.h.s8.bf16 %v556
    %v1421 = vunpack.c.l.s8.bf16 %v557
    %v1422 = vunpack.c.l.s8.bf16 %v558
    %v1423 = vunpack.c.l.s8.bf16 %v559
    %v1424 = vunpack.c.l.s8.bf16 %v560
    %v1425 = vunpack.c.l.s8.bf16 %v561
    %v1426 = vunpack.c.l.s8.bf16 %v562
    %v1427 = vunpack.c.l.s8.bf16 %v563
    %v1428 = vunpack.c.l.s8.bf16 %v564
    %v1429 = vunpack.c.h.s8.bf16 %v557
    %v1430 = vunpack.c.h.s8.bf16 %v558
    %v1431 = vunpack.c.h.s8.bf16 %v559
    %v1432 = vunpack.c.h.s8.bf16 %v560
    %v1433 = vunpack.c.h.s8.bf16 %v561
    %v1434 = vunpack.c.h.s8.bf16 %v562
    %v1435 = vunpack.c.h.s8.bf16 %v563
    %v1436 = vunpack.c.h.s8.bf16 %v564
    %v1437 = vunpack.c.l.s8.bf16 %v565
    %v1438 = vunpack.c.l.s8.bf16 %v566
    %v1439 = vunpack.c.l.s8.bf16 %v567
    %v1440 = vunpack.c.l.s8.bf16 %v568
    %v1441 = vunpack.c.l.s8.bf16 %v569
    %v1442 = vunpack.c.l.s8.bf16 %v570
    %v1443 = vunpack.c.l.s8.bf16 %v571
    %v1444 = vunpack.c.l.s8.bf16 %v572
    %v1445 = vunpack.c.h.s8.bf16 %v565
    %v1446 = vunpack.c.h.s8.bf16 %v566
    %v1447 = vunpack.c.h.s8.bf16 %v567
    %v1448 = vunpack.c.h.s8.bf16 %v568
    %v1449 = vunpack.c.h.s8.bf16 %v569
    %v1450 = vunpack.c.h.s8.bf16 %v570
    %v1451 = vunpack.c.h.s8.bf16 %v571
    %v1452 = vunpack.c.h.s8.bf16 %v572
    %v1453 = vunpack.c.l.s8.bf16 %v573
    %v1454 = vunpack.c.l.s8.bf16 %v574
    %v1455 = vunpack.c.l.s8.bf16 %v575
    %v1456 = vunpack.c.l.s8.bf16 %v576
    %v1457 = vunpack.c.l.s8.bf16 %v577
    %v1458 = vunpack.c.l.s8.bf16 %v578
    %v1459 = vunpack.c.l.s8.bf16 %v579
    %v1460 = vunpack.c.l.s8.bf16 %v580
    %v1461 = vunpack.c.h.s8.bf16 %v573
    %v1462 = vunpack.c.h.s8.bf16 %v574
    %v1463 = vunpack.c.h.s8.bf16 %v575
    %v1464 = vunpack.c.h.s8.bf16 %v576
    %v1465 = vunpack.c.h.s8.bf16 %v577
    %v1466 = vunpack.c.h.s8.bf16 %v578
    %v1467 = vunpack.c.h.s8.bf16 %v579
    %v1468 = vunpack.c.h.s8.bf16 %v580
    %v1469 = vunpack.c.l.s8.bf16 %v581
    %v1470 = vunpack.c.l.s8.bf16 %v582
    %v1471 = vunpack.c.l.s8.bf16 %v583
    %v1472 = vunpack.c.l.s8.bf16 %v584
    %v1473 = vunpack.c.l.s8.bf16 %v585
    %v1474 = vunpack.c.l.s8.bf16 %v586
    %v1475 = vunpack.c.l.s8.bf16 %v587
    %v1476 = vunpack.c.l.s8.bf16 %v588
    %v1477 = vunpack.c.h.s8.bf16 %v581
    %v1478 = vunpack.c.h.s8.bf16 %v582
    %v1479 = vunpack.c.h.s8.bf16 %v583
    %v1480 = vunpack.c.h.s8.bf16 %v584
    %v1481 = vunpack.c.h.s8.bf16 %v585
    %v1482 = vunpack.c.h.s8.bf16 %v586
    %v1483 = vunpack.c.h.s8.bf16 %v587
    %v1484 = vunpack.c.h.s8.bf16 %v588
    %v1485 = vunpack.c.l.s8.bf16 %v589
    %v1486 = vunpack.c.l.s8.bf16 %v590
    %v1487 = vunpack.c.l.s8.bf16 %v591
    %v1488 = vunpack.c.l.s8.bf16 %v592
    %v1489 = vunpack.c.l.s8.bf16 %v593
    %v1490 = vunpack.c.l.s8.bf16 %v594
    %v1491 = vunpack.c.l.s8.bf16 %v595
    %v1492 = vunpack.c.l.s8.bf16 %v596
    %v1493 = vunpack.c.h.s8.bf16 %v589
    %v1494 = vunpack.c.h.s8.bf16 %v590
    %v1495 = vunpack.c.h.s8.bf16 %v591
    %v1496 = vunpack.c.h.s8.bf16 %v592
    %v1497 = vunpack.c.h.s8.bf16 %v593
    %v1498 = vunpack.c.h.s8.bf16 %v594
    %v1499 = vunpack.c.h.s8.bf16 %v595
    %v1500 = vunpack.c.h.s8.bf16 %v596
    %v1501 = vunpack.c.l.s8.bf16 %v597
    %v1502 = vunpack.c.l.s8.bf16 %v598
    %v1503 = vunpack.c.l.s8.bf16 %v599
    %v1504 = vunpack.c.l.s8.bf16 %v600
    %v1505 = vunpack.c.l.s8.bf16 %v601
    %v1506 = vunpack.c.l.s8.bf16 %v602
    %v1507 = vunpack.c.l.s8.bf16 %v603
    %v1508 = vunpack.c.l.s8.bf16 %v604
    %v1509 = vunpack.c.h.s8.bf16 %v597
    %v1510 = vunpack.c.h.s8.bf16 %v598
    %v1511 = vunpack.c.h.s8.bf16 %v599
    %v1512 = vunpack.c.h.s8.bf16 %v600
    %v1513 = vunpack.c.h.s8.bf16 %v601
    %v1514 = vunpack.c.h.s8.bf16 %v602
    %v1515 = vunpack.c.h.s8.bf16 %v603
    %v1516 = vunpack.c.h.s8.bf16 %v604
    %v1517 = vunpack.c.l.s8.bf16 %v605
    %v1518 = vunpack.c.l.s8.bf16 %v606
    %v1519 = vunpack.c.l.s8.bf16 %v607
    %v1520 = vunpack.c.l.s8.bf16 %v608
    %v1521 = vunpack.c.l.s8.bf16 %v609
    %v1522 = vunpack.c.l.s8.bf16 %v610
    %v1523 = vunpack.c.l.s8.bf16 %v611
    %v1524 = vunpack.c.l.s8.bf16 %v612
    %v1525 = vunpack.c.h.s8.bf16 %v605
    %v1526 = vunpack.c.h.s8.bf16 %v606
    %v1527 = vunpack.c.h.s8.bf16 %v607
    %v1528 = vunpack.c.h.s8.bf16 %v608
    %v1529 = vunpack.c.h.s8.bf16 %v609
    %v1530 = vunpack.c.h.s8.bf16 %v610
    %v1531 = vunpack.c.h.s8.bf16 %v611
    %v1532 = vunpack.c.h.s8.bf16 %v612
    %v1533 = vunpack.c.l.s8.bf16 %v613
    %v1534 = vunpack.c.l.s8.bf16 %v614
    %v1535 = vunpack.c.l.s8.bf16 %v615
    %v1536 = vunpack.c.l.s8.bf16 %v616
    %v1537 = vunpack.c.l.s8.bf16 %v617
    %v1538 = vunpack.c.l.s8.bf16 %v618
    %v1539 = vunpack.c.l.s8.bf16 %v619
    %v1540 = vunpack.c.l.s8.bf16 %v620
    %v1541 = vunpack.c.h.s8.bf16 %v613
    %v1542 = vunpack.c.h.s8.bf16 %v614
    %v1543 = vunpack.c.h.s8.bf16 %v615
    %v1544 = vunpack.c.h.s8.bf16 %v616
    %v1545 = vunpack.c.h.s8.bf16 %v617
    %v1546 = vunpack.c.h.s8.bf16 %v618
    %v1547 = vunpack.c.h.s8.bf16 %v619
    %v1548 = vunpack.c.h.s8.bf16 %v620
    %v1549 = vunpack.c.l.s8.bf16 %v621
    %v1550 = vunpack.c.l.s8.bf16 %v622
    %v1551 = vunpack.c.l.s8.bf16 %v623
    %v1552 = vunpack.c.l.s8.bf16 %v624
    %v1553 = vunpack.c.l.s8.bf16 %v625
    %v1554 = vunpack.c.l.s8.bf16 %v626
    %v1555 = vunpack.c.l.s8.bf16 %v627
    %v1556 = vunpack.c.l.s8.bf16 %v628
    %v1557 = vunpack.c.h.s8.bf16 %v621
    %v1558 = vunpack.c.h.s8.bf16 %v622
    %v1559 = vunpack.c.h.s8.bf16 %v623
    %v1560 = vunpack.c.h.s8.bf16 %v624
    %v1561 = vunpack.c.h.s8.bf16 %v625
    %v1562 = vunpack.c.h.s8.bf16 %v626
    %v1563 = vunpack.c.h.s8.bf16 %v627
    %v1564 = vunpack.c.h.s8.bf16 %v628
    %v1565 = vunpack.c.l.s8.bf16 %v629
    %v1566 = vunpack.c.l.s8.bf16 %v630
    %v1567 = vunpack.c.l.s8.bf16 %v631
    %v1568 = vunpack.c.l.s8.bf16 %v632
    %v1569 = vunpack.c.l.s8.bf16 %v633
    %v1570 = vunpack.c.l.s8.bf16 %v634
    %v1571 = vunpack.c.l.s8.bf16 %v635
    %v1572 = vunpack.c.l.s8.bf16 %v636
    %v1573 = vunpack.c.h.s8.bf16 %v629
    %v1574 = vunpack.c.h.s8.bf16 %v630
    %v1575 = vunpack.c.h.s8.bf16 %v631
    %v1576 = vunpack.c.h.s8.bf16 %v632
    %v1577 = vunpack.c.h.s8.bf16 %v633
    %v1578 = vunpack.c.h.s8.bf16 %v634
    %v1579 = vunpack.c.h.s8.bf16 %v635
    %v1580 = vunpack.c.h.s8.bf16 %v636
    %v1581 = vunpack.c.l.s8.bf16 %v637
    %v1582 = vunpack.c.l.s8.bf16 %v638
    %v1583 = vunpack.c.l.s8.bf16 %v639
    %v1584 = vunpack.c.l.s8.bf16 %v640
    %v1585 = vunpack.c.l.s8.bf16 %v641
    %v1586 = vunpack.c.l.s8.bf16 %v642
    %v1587 = vunpack.c.l.s8.bf16 %v643
    %v1588 = vunpack.c.l.s8.bf16 %v644
    %v1589 = vunpack.c.h.s8.bf16 %v637
    %v1590 = vunpack.c.h.s8.bf16 %v638
    %v1591 = vunpack.c.h.s8.bf16 %v639
    %v1592 = vunpack.c.h.s8.bf16 %v640
    %v1593 = vunpack.c.h.s8.bf16 %v641
    %v1594 = vunpack.c.h.s8.bf16 %v642
    %v1595 = vunpack.c.h.s8.bf16 %v643
    %v1596 = vunpack.c.h.s8.bf16 %v644
    %v1597 = vunpack.c.l.s8.bf16 %v645
    %v1598 = vunpack.c.l.s8.bf16 %v646
    %v1599 = vunpack.c.l.s8.bf16 %v647
    %v1600 = vunpack.c.l.s8.bf16 %v648
    %v1601 = vunpack.c.l.s8.bf16 %v649
    %v1602 = vunpack.c.l.s8.bf16 %v650
    %v1603 = vunpack.c.l.s8.bf16 %v651
    %v1604 = vunpack.c.l.s8.bf16 %v652
    %v1605 = vunpack.c.h.s8.bf16 %v645
    %v1606 = vunpack.c.h.s8.bf16 %v646
    %v1607 = vunpack.c.h.s8.bf16 %v647
    %v1608 = vunpack.c.h.s8.bf16 %v648
    %v1609 = vunpack.c.h.s8.bf16 %v649
    %v1610 = vunpack.c.h.s8.bf16 %v650
    %v1611 = vunpack.c.h.s8.bf16 %v651
    %v1612 = vunpack.c.h.s8.bf16 %v652
    %v1613 = vunpack.c.l.s8.bf16 %v653
    %v1614 = vunpack.c.l.s8.bf16 %v654
    %v1615 = vunpack.c.l.s8.bf16 %v655
    %v1616 = vunpack.c.l.s8.bf16 %v656
    %v1617 = vunpack.c.l.s8.bf16 %v657
    %v1618 = vunpack.c.l.s8.bf16 %v658
    %v1619 = vunpack.c.l.s8.bf16 %v659
    %v1620 = vunpack.c.l.s8.bf16 %v660
    %v1621 = vunpack.c.h.s8.bf16 %v653
    %v1622 = vunpack.c.h.s8.bf16 %v654
    %v1623 = vunpack.c.h.s8.bf16 %v655
    %v1624 = vunpack.c.h.s8.bf16 %v656
    %v1625 = vunpack.c.h.s8.bf16 %v657
    %v1626 = vunpack.c.h.s8.bf16 %v658
    %v1627 = vunpack.c.h.s8.bf16 %v659
    %v1628 = vunpack.c.h.s8.bf16 %v660
    %v1629 = vunpack.c.l.s8.bf16 %v661
    %v1630 = vunpack.c.l.s8.bf16 %v662
    %v1631 = vunpack.c.l.s8.bf16 %v663
    %v1632 = vunpack.c.l.s8.bf16 %v664
    %v1633 = vunpack.c.l.s8.bf16 %v665
    %v1634 = vunpack.c.l.s8.bf16 %v666
    %v1635 = vunpack.c.l.s8.bf16 %v667
    %v1636 = vunpack.c.l.s8.bf16 %v668
    %v1637 = vunpack.c.h.s8.bf16 %v661
    %v1638 = vunpack.c.h.s8.bf16 %v662
    %v1639 = vunpack.c.h.s8.bf16 %v663
    %v1640 = vunpack.c.h.s8.bf16 %v664
    %v1641 = vunpack.c.h.s8.bf16 %v665
    %v1642 = vunpack.c.h.s8.bf16 %v666
    %v1643 = vunpack.c.h.s8.bf16 %v667
    %v1644 = vunpack.c.h.s8.bf16 %v668
    %v1645 = vunpack.c.l.s8.bf16 %v669
    %v1646 = vunpack.c.l.s8.bf16 %v670
    %v1647 = vunpack.c.l.s8.bf16 %v671
    %v1648 = vunpack.c.l.s8.bf16 %v672
    %v1649 = vunpack.c.l.s8.bf16 %v673
    %v1650 = vunpack.c.l.s8.bf16 %v674
    %v1651 = vunpack.c.l.s8.bf16 %v675
    %v1652 = vunpack.c.l.s8.bf16 %v676
    %v1653 = vunpack.c.h.s8.bf16 %v669
    %v1654 = vunpack.c.h.s8.bf16 %v670
    %v1655 = vunpack.c.h.s8.bf16 %v671
    %v1656 = vunpack.c.h.s8.bf16 %v672
    %v1657 = vunpack.c.h.s8.bf16 %v673
    %v1658 = vunpack.c.h.s8.bf16 %v674
    %v1659 = vunpack.c.h.s8.bf16 %v675
    %v1660 = vunpack.c.h.s8.bf16 %v676
    %v1661 = vunpack.c.l.s8.bf16 %v677
    %v1662 = vunpack.c.l.s8.bf16 %v678
    %v1663 = vunpack.c.l.s8.bf16 %v679
    %v1664 = vunpack.c.l.s8.bf16 %v680
    %v1665 = vunpack.c.l.s8.bf16 %v681
    %v1666 = vunpack.c.l.s8.bf16 %v682
    %v1667 = vunpack.c.l.s8.bf16 %v683
    %v1668 = vunpack.c.l.s8.bf16 %v684
    %v1669 = vunpack.c.h.s8.bf16 %v677
    %v1670 = vunpack.c.h.s8.bf16 %v678
    %v1671 = vunpack.c.h.s8.bf16 %v679
    %v1672 = vunpack.c.h.s8.bf16 %v680
    %v1673 = vunpack.c.h.s8.bf16 %v681
    %v1674 = vunpack.c.h.s8.bf16 %v682
    %v1675 = vunpack.c.h.s8.bf16 %v683
    %v1676 = vunpack.c.h.s8.bf16 %v684
    %v1677 = vunpack.c.l.s8.bf16 %v685
    %v1678 = vunpack.c.l.s8.bf16 %v686
    %v1679 = vunpack.c.l.s8.bf16 %v687
    %v1680 = vunpack.c.l.s8.bf16 %v688
    %v1681 = vunpack.c.l.s8.bf16 %v689
    %v1682 = vunpack.c.l.s8.bf16 %v690
    %v1683 = vunpack.c.l.s8.bf16 %v691
    %v1684 = vunpack.c.l.s8.bf16 %v692
    %v1685 = vunpack.c.h.s8.bf16 %v685
    %v1686 = vunpack.c.h.s8.bf16 %v686
    %v1687 = vunpack.c.h.s8.bf16 %v687
    %v1688 = vunpack.c.h.s8.bf16 %v688
    %v1689 = vunpack.c.h.s8.bf16 %v689
    %v1690 = vunpack.c.h.s8.bf16 %v690
    %v1691 = vunpack.c.h.s8.bf16 %v691
    %v1692 = vunpack.c.h.s8.bf16 %v692
    %v1693 = vunpack.c.l.s8.bf16 %v693
    %v1694 = vunpack.c.l.s8.bf16 %v694
    %v1695 = vunpack.c.l.s8.bf16 %v695
    %v1696 = vunpack.c.l.s8.bf16 %v696
    %v1697 = vunpack.c.l.s8.bf16 %v697
    %v1698 = vunpack.c.l.s8.bf16 %v698
    %v1699 = vunpack.c.l.s8.bf16 %v699
    %v1700 = vunpack.c.l.s8.bf16 %v700
    %v1701 = vunpack.c.h.s8.bf16 %v693
    %v1702 = vunpack.c.h.s8.bf16 %v694
    %v1703 = vunpack.c.h.s8.bf16 %v695
    %v1704 = vunpack.c.h.s8.bf16 %v696
    %v1705 = vunpack.c.h.s8.bf16 %v697
    %v1706 = vunpack.c.h.s8.bf16 %v698
    %v1707 = vunpack.c.h.s8.bf16 %v699
    %v1708 = vunpack.c.h.s8.bf16 %v700
    %v1709 = vunpack.c.l.s8.bf16 %v701
    %v1710 = vunpack.c.l.s8.bf16 %v702
    %v1711 = vunpack.c.l.s8.bf16 %v703
    %v1712 = vunpack.c.l.s8.bf16 %v704
    %v1713 = vunpack.c.l.s8.bf16 %v705
    %v1714 = vunpack.c.l.s8.bf16 %v706
    %v1715 = vunpack.c.l.s8.bf16 %v707
    %v1716 = vunpack.c.l.s8.bf16 %v708
    %v1717 = vunpack.c.h.s8.bf16 %v701
    %v1718 = vunpack.c.h.s8.bf16 %v702
    %v1719 = vunpack.c.h.s8.bf16 %v703
    %v1720 = vunpack.c.h.s8.bf16 %v704
    %v1721 = vunpack.c.h.s8.bf16 %v705
    %v1722 = vunpack.c.h.s8.bf16 %v706
    %v1723 = vunpack.c.h.s8.bf16 %v707
    %v1724 = vunpack.c.h.s8.bf16 %v708
    %v1725 = vunpack.c.l.s8.bf16 %v709
    %v1726 = vunpack.c.l.s8.bf16 %v710
    %v1727 = vunpack.c.l.s8.bf16 %v711
    %v1728 = vunpack.c.l.s8.bf16 %v712
    %v1729 = vunpack.c.l.s8.bf16 %v713
    %v1730 = vunpack.c.l.s8.bf16 %v714
    %v1731 = vunpack.c.l.s8.bf16 %v715
    %v1732 = vunpack.c.l.s8.bf16 %v716
    %v1733 = vunpack.c.h.s8.bf16 %v709
    %v1734 = vunpack.c.h.s8.bf16 %v710
    %v1735 = vunpack.c.h.s8.bf16 %v711
    %v1736 = vunpack.c.h.s8.bf16 %v712
    %v1737 = vunpack.c.h.s8.bf16 %v713
    %v1738 = vunpack.c.h.s8.bf16 %v714
    %v1739 = vunpack.c.h.s8.bf16 %v715
    %v1740 = vunpack.c.h.s8.bf16 %v716
    %1741 = vmatprep.subr.bf16.mxu0 %v718
    %1742 = vmatpush1.bf16.msra.mxu0 %v717
    %1743 = vmatprep.subr.bf16.mxu0 %v726
    %1744 = vmatpush1.bf16.msra.mxu0 %v725
    %1745 = vmatprep.subr.bf16.mxu0 %v734
    %1746 = vmatpush1.bf16.msra.mxu0 %v733
    %1747 = vmatprep.subr.bf16.mxu0 %v742
    %1748 = vmatpush1.bf16.msra.mxu0 %v741
    %1749 = vmatprep.subr.bf16.mxu0 %v750
    %1750 = vmatpush1.bf16.msra.mxu0 %v749
    %1751 = vmatprep.subr.bf16.mxu0 %v758
    %1752 = vmatpush1.bf16.msra.mxu0 %v757
    %1753 = vmatprep.subr.bf16.mxu0 %v766
    %1754 = vmatpush1.bf16.msra.mxu0 %v765
    %1755 = vmatprep.subr.bf16.mxu0 %v774
    %1756 = vmatpush1.bf16.msra.mxu0 %v773
    %1757 = vmatprep.subr.bf16.mxu0 %v782
    %1758 = vmatpush1.bf16.msra.mxu0 %v781
    %1759 = vmatprep.subr.bf16.mxu0 %v790
    %1760 = vmatpush1.bf16.msra.mxu0 %v789
    %1761 = vmatprep.subr.bf16.mxu0 %v798
    %1762 = vmatpush1.bf16.msra.mxu0 %v797
    %1763 = vmatprep.subr.bf16.mxu0 %v806
    %1764 = vmatpush1.bf16.msra.mxu0 %v805
    %1765 = vmatprep.subr.bf16.mxu0 %v814
    %1766 = vmatpush1.bf16.msra.mxu0 %v813
    %1767 = vmatprep.subr.bf16.mxu0 %v822
    %1768 = vmatpush1.bf16.msra.mxu0 %v821
    %1769 = vmatprep.subr.bf16.mxu0 %v830
    %1770 = vmatpush1.bf16.msra.mxu0 %v829
    %1771 = vmatprep.subr.bf16.mxu0 %v838
    %1772 = vmatpush1.bf16.msra.mxu0 %v837
    %1773 = vmatprep.mubr.bf16.mxu0 %v190
    %1774 = vmatmul.mubr.bf16.gmra.mrb[0].mxu0 %v189
    %v1775 = vpop.f32.mrb[0].mxu0
    %v1776 = vadd.f32 0.0, %v1775
    %v1777 = vpop.f32.mrb[0].mxu0
    %v1778 = vadd.f32 0.0, %v1777
    %v1779 = vpop.f32.mrb[0].mxu0
    %v1780 = vpop.f32.mrb[0].mxu0
    %1781 = vdwg.mxu0
    %1782 = vmatprep.subr.bf16.mxu0 %v846
    %1783 = vmatpush1.bf16.msra.mxu0 %v845
    %1784 = vmatprep.subr.bf16.mxu0 %v854
    %1785 = vmatpush1.bf16.msra.mxu0 %v853
    %1786 = vmatprep.subr.bf16.mxu0 %v862
    %1787 = vmatpush1.bf16.msra.mxu0 %v861
    %1788 = vmatprep.subr.bf16.mxu0 %v870
    %1789 = vmatpush1.bf16.msra.mxu0 %v869
    %1790 = vmatprep.subr.bf16.mxu0 %v878
    %1791 = vmatpush1.bf16.msra.mxu0 %v877
    %1792 = vmatprep.subr.bf16.mxu0 %v886
    %1793 = vmatpush1.bf16.msra.mxu0 %v885
    %1794 = vmatprep.subr.bf16.mxu0 %v894
    %1795 = vmatpush1.bf16.msra.mxu0 %v893
    %1796 = vmatprep.subr.bf16.mxu0 %v902
    %1797 = vmatpush1.bf16.msra.mxu0 %v901
    %1798 = vmatprep.subr.bf16.mxu0 %v910
    %1799 = vmatpush1.bf16.msra.mxu0 %v909
    %1800 = vmatprep.subr.bf16.mxu0 %v918
    %1801 = vmatpush1.bf16.msra.mxu0 %v917
    %1802 = vmatprep.subr.bf16.mxu0 %v926
    %1803 = vmatpush1.bf16.msra.mxu0 %v925
    %1804 = vmatprep.subr.bf16.mxu0 %v934
    %1805 = vmatpush1.bf16.msra.mxu0 %v933
    %1806 = vmatprep.subr.bf16.mxu0 %v942
    %1807 = vmatpush1.bf16.msra.mxu0 %v941
    %1808 = vmatprep.subr.bf16.mxu0 %v950
    %1809 = vmatpush1.bf16.msra.mxu0 %v949
    %1810 = vmatprep.subr.bf16.mxu0 %v958
    %1811 = vmatpush1.bf16.msra.mxu0 %v957
    %1812 = vmatprep.subr.bf16.mxu0 %v966
    %1813 = vmatpush1.bf16.msra.mxu0 %v965
    %1814 = vmatprep.mubr.bf16.mxu0 %v192
    %1815 = vmatmul.mubr.bf16.gmra.mrb[0].mxu0 %v191
    %v1816 = vpop.f32.mrb[0].mxu0
    %v1817 = vadd.f32 %v1776, %v1816
    %v1818 = vpop.f32.mrb[0].mxu0
    %v1819 = vadd.f32 %v1778, %v1818
    %v1820 = vpop.f32.mrb[0].mxu0
    %v1821 = vpop.f32.mrb[0].mxu0
    %1822 = vdwg.mxu0
    %1823 = vmatprep.subr.bf16.mxu0 %v974
    %1824 = vmatpush1.bf16.msra.mxu0 %v973
    %1825 = vmatprep.subr.bf16.mxu0 %v982
    %1826 = vmatpush1.bf16.msra.mxu0 %v981
    %1827 = vmatprep.subr.bf16.mxu0 %v990
    %1828 = vmatpush1.bf16.msra.mxu0 %v989
    %1829 = vmatprep.subr.bf16.mxu0 %v998
    %1830 = vmatpush1.bf16.msra.mxu0 %v997
    %1831 = vmatprep.subr.bf16.mxu0 %v1006
    %1832 = vmatpush1.bf16.msra.mxu0 %v1005
    %1833 = vmatprep.subr.bf16.mxu0 %v1014
    %1834 = vmatpush1.bf16.msra.mxu0 %v1013
    %1835 = vmatprep.subr.bf16.mxu0 %v1022
    %1836 = vmatpush1.bf16.msra.mxu0 %v1021
    %1837 = vmatprep.subr.bf16.mxu0 %v1030
    %1838 = vmatpush1.bf16.msra.mxu0 %v1029
    %1839 = vmatprep.subr.bf16.mxu0 %v1038
    %1840 = vmatpush1.bf16.msra.mxu0 %v1037
    %1841 = vmatprep.subr.bf16.mxu0 %v1046
    %1842 = vmatpush1.bf16.msra.mxu0 %v1045
    %1843 = vmatprep.subr.bf16.mxu0 %v1054
    %1844 = vmatpush1.bf16.msra.mxu0 %v1053
    %1845 = vmatprep.subr.bf16.mxu0 %v1062
    %1846 = vmatpush1.bf16.msra.mxu0 %v1061
    %1847 = vmatprep.subr.bf16.mxu0 %v1070
    %1848 = vmatpush1.bf16.msra.mxu0 %v1069
    %1849 = vmatprep.subr.bf16.mxu0 %v1078
    %1850 = vmatpush1.bf16.msra.mxu0 %v1077
    %1851 = vmatprep.subr.bf16.mxu0 %v1086
    %1852 = vmatpush1.bf16.msra.mxu0 %v1085
    %1853 = vmatprep.subr.bf16.mxu0 %v1094
    %1854 = vmatpush1.bf16.msra.mxu0 %v1093
    %1855 = vmatprep.mubr.bf16.mxu0 %v194
    %1856 = vmatmul.mubr.bf16.gmra.mrb[0].mxu0 %v193
    %v1857 = vpop.f32.mrb[0].mxu0
    %v1858 = vadd.f32 %v1817, %v1857
    %v1859 = vpop.f32.mrb[0].mxu0
    %v1860 = vadd.f32 %v1819, %v1859
    %v1861 = vpop.f32.mrb[0].mxu0
    %v1862 = vpop.f32.mrb[0].mxu0
    %1863 = vdwg.mxu0
    %1864 = vmatprep.subr.bf16.mxu0 %v1102
    %1865 = vmatpush1.bf16.msra.mxu0 %v1101
    %1866 = vmatprep.subr.bf16.mxu0 %v1110
    %1867 = vmatpush1.bf16.msra.mxu0 %v1109
    %1868 = vmatprep.subr.bf16.mxu0 %v1118
    %1869 = vmatpush1.bf16.msra.mxu0 %v1117
    %1870 = vmatprep.subr.bf16.mxu0 %v1126
    %1871 = vmatpush1.bf16.msra.mxu0 %v1125
    %1872 = vmatprep.subr.bf16.mxu0 %v1134
    %1873 = vmatpush1.bf16.msra.mxu0 %v1133
    %1874 = vmatprep.subr.bf16.mxu0 %v1142
    %1875 = vmatpush1.bf16.msra.mxu0 %v1141
    %1876 = vmatprep.subr.bf16.mxu0 %v1150
    %1877 = vmatpush1.bf16.msra.mxu0 %v1149
    %1878 = vmatprep.subr.bf16.mxu0 %v1158
    %1879 = vmatpush1.bf16.msra.mxu0 %v1157
    %1880 = vmatprep.subr.bf16.mxu0 %v1166
    %1881 = vmatpush1.bf16.msra.mxu0 %v1165
    %1882 = vmatprep.subr.bf16.mxu0 %v1174
    %1883 = vmatpush1.bf16.msra.mxu0 %v1173
    %1884 = vmatprep.subr.bf16.mxu0 %v1182
    %1885 = vmatpush1.bf16.msra.mxu0 %v1181
    %1886 = vmatprep.subr.bf16.mxu0 %v1190
    %1887 = vmatpush1.bf16.msra.mxu0 %v1189
    %1888 = vmatprep.subr.bf16.mxu0 %v1198
    %1889 = vmatpush1.bf16.msra.mxu0 %v1197
    %1890 = vmatprep.subr.bf16.mxu0 %v1206
    %1891 = vmatpush1.bf16.msra.mxu0 %v1205
    %1892 = vmatprep.subr.bf16.mxu0 %v1214
    %1893 = vmatpush1.bf16.msra.mxu0 %v1213
    %1894 = vmatprep.subr.bf16.mxu0 %v1222
    %1895 = vmatpush1.bf16.msra.mxu0 %v1221
    %1896 = vmatprep.mubr.bf16.mxu0 %v196
    %1897 = vmatmul.mubr.bf16.gmra.mrb[0].mxu0 %v195
    %v1898 = vpop.f32.mrb[0].mxu0
    %v1899 = vadd.f32 %v1858, %v1898
    %v1900 = vpop.f32.mrb[0].mxu0
    %v1901 = vadd.f32 %v1860, %v1900
    %v1902 = vpop.f32.mrb[0].mxu0
    %v1903 = vpop.f32.mrb[0].mxu0
    %1904 = vdwg.mxu0
    %1905 = vmatprep.subr.bf16.mxu0 %v1230
    %1906 = vmatpush1.bf16.msra.mxu0 %v1229
    %1907 = vmatprep.subr.bf16.mxu0 %v1238
    %1908 = vmatpush1.bf16.msra.mxu0 %v1237
    %1909 = vmatprep.subr.bf16.mxu0 %v1246
    %1910 = vmatpush1.bf16.msra.mxu0 %v1245
    %1911 = vmatprep.subr.bf16.mxu0 %v1254
    %1912 = vmatpush1.bf16.msra.mxu0 %v1253
    %1913 = vmatprep.subr.bf16.mxu0 %v1262
    %1914 = vmatpush1.bf16.msra.mxu0 %v1261
    %1915 = vmatprep.subr.bf16.mxu0 %v1270
    %1916 = vmatpush1.bf16.msra.mxu0 %v1269
    %1917 = vmatprep.subr.bf16.mxu0 %v1278
    %1918 = vmatpush1.bf16.msra.mxu0 %v1277
    %1919 = vmatprep.subr.bf16.mxu0 %v1286
    %1920 = vmatpush1.bf16.msra.mxu0 %v1285
    %1921 = vmatprep.subr.bf16.mxu0 %v1294
    %1922 = vmatpush1.bf16.msra.mxu0 %v1293
    %1923 = vmatprep.subr.bf16.mxu0 %v1302
    %1924 = vmatpush1.bf16.msra.mxu0 %v1301
    %1925 = vmatprep.subr.bf16.mxu0 %v1310
    %1926 = vmatpush1.bf16.msra.mxu0 %v1309
    %1927 = vmatprep.subr.bf16.mxu0 %v1318
    %1928 = vmatpush1.bf16.msra.mxu0 %v1317
    %1929 = vmatprep.subr.bf16.mxu0 %v1326
    %1930 = vmatpush1.bf16.msra.mxu0 %v1325
    %1931 = vmatprep.subr.bf16.mxu0 %v1334
    %1932 = vmatpush1.bf16.msra.mxu0 %v1333
    %1933 = vmatprep.subr.bf16.mxu0 %v1342
    %1934 = vmatpush1.bf16.msra.mxu0 %v1341
    %1935 = vmatprep.subr.bf16.mxu0 %v1350
    %1936 = vmatpush1.bf16.msra.mxu0 %v1349
    %1937 = vmatprep.mubr.bf16.mxu0 %v198
    %1938 = vmatmul.mubr.bf16.gmra.mrb[0].mxu0 %v197
    %v1939 = vpop.f32.mrb[0].mxu0
    %v1940 = vadd.f32 %v1899, %v1939
    %v1941 = vpop.f32.mrb[0].mxu0
    %v1942 = vadd.f32 %v1901, %v1941
    %v1943 = vpop.f32.mrb[0].mxu0
    %v1944 = vpop.f32.mrb[0].mxu0
    %1945 = vdwg.mxu0
    %1946 = vmatprep.subr.bf16.mxu0 %v1358
    %1947 = vmatpush1.bf16.msra.mxu0 %v1357
    %1948 = vmatprep.subr.bf16.mxu0 %v1366
    %1949 = vmatpush1.bf16.msra.mxu0 %v1365
    %1950 = vmatprep.subr.bf16.mxu0 %v1374
    %1951 = vmatpush1.bf16.msra.mxu0 %v1373
    %1952 = vmatprep.subr.bf16.mxu0 %v1382
    %1953 = vmatpush1.bf16.msra.mxu0 %v1381
    %1954 = vmatprep.subr.bf16.mxu0 %v1390
    %1955 = vmatpush1.bf16.msra.mxu0 %v1389
    %1956 = vmatprep.subr.bf16.mxu0 %v1398
    %1957 = vmatpush1.bf16.msra.mxu0 %v1397
    %1958 = vmatprep.subr.bf16.mxu0 %v1406
    %1959 = vmatpush1.bf16.msra.mxu0 %v1405
    %1960 = vmatprep.subr.bf16.mxu0 %v1414
    %1961 = vmatpush1.bf16.msra.mxu0 %v1413
    %1962 = vmatprep.subr.bf16.mxu0 %v1422
    %1963 = vmatpush1.bf16.msra.mxu0 %v1421
    %1964 = vmatprep.subr.bf16.mxu0 %v1430
    %1965 = vmatpush1.bf16.msra.mxu0 %v1429
    %1966 = vmatprep.subr.bf16.mxu0 %v1438
    %1967 = vmatpush1.bf16.msra.mxu0 %v1437
    %1968 = vmatprep.subr.bf16.mxu0 %v1446
    %1969 = vmatpush1.bf16.msra.mxu0 %v1445
    %1970 = vmatprep.subr.bf16.mxu0 %v1454
    %1971 = vmatpush1.bf16.msra.mxu0 %v1453
    %1972 = vmatprep.subr.bf16.mxu0 %v1462
    %1973 = vmatpush1.bf16.msra.mxu0 %v1461
    %1974 = vmatprep.subr.bf16.mxu0 %v1470
    %1975 = vmatpush1.bf16.msra.mxu0 %v1469
    %1976 = vmatprep.subr.bf16.mxu0 %v1478
    %1977 = vmatpush1.bf16.msra.mxu0 %v1477
    %1978 = vmatprep.mubr.bf16.mxu0 %v200
    %1979 = vmatmul.mubr.bf16.gmra.mrb[0].mxu0 %v199
    %v1980 = vpop.f32.mrb[0].mxu0
    %v1981 = vadd.f32 %v1940, %v1980
    %v1982 = vpop.f32.mrb[0].mxu0
    %v1983 = vadd.f32 %v1942, %v1982
    %v1984 = vpop.f32.mrb[0].mxu0
    %v1985 = vpop.f32.mrb[0].mxu0
    %1986 = vdwg.mxu0
    %1987 = vmatprep.subr.bf16.mxu0 %v1486
    %1988 = vmatpush1.bf16.msra.mxu0 %v1485
    %1989 = vmatprep.subr.bf16.mxu0 %v1494
    %1990 = vmatpush1.bf16.msra.mxu0 %v1493
    %1991 = vmatprep.subr.bf16.mxu0 %v1502
    %1992 = vmatpush1.bf16.msra.mxu0 %v1501
    %1993 = vmatprep.subr.bf16.mxu0 %v1510
    %1994 = vmatpush1.bf16.msra.mxu0 %v1509
    %1995 = vmatprep.subr.bf16.mxu0 %v1518
    %1996 = vmatpush1.bf16.msra.mxu0 %v1517
    %1997 = vmatprep.subr.bf16.mxu0 %v1526
    %1998 = vmatpush1.bf16.msra.mxu0 %v1525
    %1999 = vmatprep.subr.bf16.mxu0 %v1534
    %2000 = vmatpush1.bf16.msra.mxu0 %v1533
    %2001 = vmatprep.subr.bf16.mxu0 %v1542
    %2002 = vmatpush1.bf16.msra.mxu0 %v1541
    %2003 = vmatprep.subr.bf16.mxu0 %v1550
    %2004 = vmatpush1.bf16.msra.mxu0 %v1549
    %2005 = vmatprep.subr.bf16.mxu0 %v1558
    %2006 = vmatpush1.bf16.msra.mxu0 %v1557
    %2007 = vmatprep.subr.bf16.mxu0 %v1566
    %2008 = vmatpush1.bf16.msra.mxu0 %v1565
    %2009 = vmatprep.subr.bf16.mxu0 %v1574
    %2010 = vmatpush1.bf16.msra.mxu0 %v1573
    %2011 = vmatprep.subr.bf16.mxu0 %v1582
    %2012 = vmatpush1.bf16.msra.mxu0 %v1581
    %2013 = vmatprep.subr.bf16.mxu0 %v1590
    %2014 = vmatpush1.bf16.msra.mxu0 %v1589
    %2015 = vmatprep.subr.bf16.mxu0 %v1598
    %2016 = vmatpush1.bf16.msra.mxu0 %v1597
    %2017 = vmatprep.subr.bf16.mxu0 %v1606
    %2018 = vmatpush1.bf16.msra.mxu0 %v1605
    %2019 = vmatprep.mubr.bf16.mxu0 %v202
    %2020 = vmatmul.mubr.bf16.gmra.mrb[0].mxu0 %v201
    %v2021 = vpop.f32.mrb[0].mxu0
    %v2022 = vadd.f32 %v1981, %v2021
    %v2023 = vpop.f32.mrb[0].mxu0
    %v2024 = vadd.f32 %v1983, %v2023
    %v2025 = vpop.f32.mrb[0].mxu0
    %v2026 = vpop.f32.mrb[0].mxu0
    %2027 = vdwg.mxu0
    %2028 = vmatprep.subr.bf16.mxu0 %v1614
    %2029 = vmatpush1.bf16.msra.mxu0 %v1613
    %2030 = vmatprep.subr.bf16.mxu0 %v1622
    %2031 = vmatpush1.bf16.msra.mxu0 %v1621
    %2032 = vmatprep.subr.bf16.mxu0 %v1630
    %2033 = vmatpush1.bf16.msra.mxu0 %v1629
    %2034 = vmatprep.subr.bf16.mxu0 %v1638
    %2035 = vmatpush1.bf16.msra.mxu0 %v1637
    %2036 = vmatprep.subr.bf16.mxu0 %v1646
    %2037 = vmatpush1.bf16.msra.mxu0 %v1645
    %2038 = vmatprep.subr.bf16.mxu0 %v1654
    %2039 = vmatpush1.bf16.msra.mxu0 %v1653
    %2040 = vmatprep.subr.bf16.mxu0 %v1662
    %2041 = vmatpush1.bf16.msra.mxu0 %v1661
    %2042 = vmatprep.subr.bf16.mxu0 %v1670
    %2043 = vmatpush1.bf16.msra.mxu0 %v1669
    %2044 = vmatprep.subr.bf16.mxu0 %v1678
    %2045 = vmatpush1.bf16.msra.mxu0 %v1677
    %2046 = vmatprep.subr.bf16.mxu0 %v1686
    %2047 = vmatpush1.bf16.msra.mxu0 %v1685
    %2048 = vmatprep.subr.bf16.mxu0 %v1694
    %2049 = vmatpush1.bf16.msra.mxu0 %v1693
    %2050 = vmatprep.subr.bf16.mxu0 %v1702
    %2051 = vmatpush1.bf16.msra.mxu0 %v1701
    %2052 = vmatprep.subr.bf16.mxu0 %v1710
    %2053 = vmatpush1.bf16.msra.mxu0 %v1709
    %2054 = vmatprep.subr.bf16.mxu0 %v1718
    %2055 = vmatpush1.bf16.msra.mxu0 %v1717
    %2056 = vmatprep.subr.bf16.mxu0 %v1726
    %2057 = vmatpush1.bf16.msra.mxu0 %v1725
    %2058 = vmatprep.subr.bf16.mxu0 %v1734
    %2059 = vmatpush1.bf16.msra.mxu0 %v1733
    %2060 = vmatprep.mubr.bf16.mxu0 %v204
    %2061 = vmatmul.mubr.bf16.gmra.mrb[0].mxu0 %v203
    %v2062 = vpop.f32.mrb[0].mxu0
    %v2063 = vadd.f32 %v2022, %v2062
    %v2064 = vpop.f32.mrb[0].mxu0
    %v2065 = vadd.f32 %v2024, %v2064
    %v2066 = vpop.f32.mrb[0].mxu0
    %v2067 = vpop.f32.mrb[0].mxu0
    %2068 = vdwg.mxu0
    %2069 = vmatprep.subr.bf16.mxu0 %v720
    %2070 = vmatpush1.bf16.msra.mxu0 %v719
    %2071 = vmatprep.subr.bf16.mxu0 %v728
    %2072 = vmatpush1.bf16.msra.mxu0 %v727
    %2073 = vmatprep.subr.bf16.mxu0 %v736
    %2074 = vmatpush1.bf16.msra.mxu0 %v735
    %2075 = vmatprep.subr.bf16.mxu0 %v744
    %2076 = vmatpush1.bf16.msra.mxu0 %v743
    %2077 = vmatprep.subr.bf16.mxu0 %v752
    %2078 = vmatpush1.bf16.msra.mxu0 %v751
    %2079 = vmatprep.subr.bf16.mxu0 %v760
    %2080 = vmatpush1.bf16.msra.mxu0 %v759
    %2081 = vmatprep.subr.bf16.mxu0 %v768
    %2082 = vmatpush1.bf16.msra.mxu0 %v767
    %2083 = vmatprep.subr.bf16.mxu0 %v776
    %2084 = vmatpush1.bf16.msra.mxu0 %v775
    %2085 = vmatprep.subr.bf16.mxu0 %v784
    %2086 = vmatpush1.bf16.msra.mxu0 %v783
    %2087 = vmatprep.subr.bf16.mxu0 %v792
    %2088 = vmatpush1.bf16.msra.mxu0 %v791
    %2089 = vmatprep.subr.bf16.mxu0 %v800
    %2090 = vmatpush1.bf16.msra.mxu0 %v799
    %2091 = vmatprep.subr.bf16.mxu0 %v808
    %2092 = vmatpush1.bf16.msra.mxu0 %v807
    %2093 = vmatprep.subr.bf16.mxu0 %v816
    %2094 = vmatpush1.bf16.msra.mxu0 %v815
    %2095 = vmatprep.subr.bf16.mxu0 %v824
    %2096 = vmatpush1.bf16.msra.mxu0 %v823
    %2097 = vmatprep.subr.bf16.mxu0 %v832
    %2098 = vmatpush1.bf16.msra.mxu0 %v831
    %2099 = vmatprep.subr.bf16.mxu0 %v840
    %2100 = vmatpush1.bf16.msra.mxu0 %v839
    %2101 = vmatprep.mubr.bf16.mxu0 %v190
    %2102 = vmatmul.mubr.bf16.gmra.mrb[0].mxu0 %v189
    %v2103 = vpop.f32.mrb[0].mxu0
    %v2104 = vadd.f32 0.0, %v2103
    %v2105 = vpop.f32.mrb[0].mxu0
    %v2106 = vadd.f32 0.0, %v2105
    %v2107 = vpop.f32.mrb[0].mxu0
    %v2108 = vpop.f32.mrb[0].mxu0
    %2109 = vdwg.mxu0
    %2110 = vmatprep.subr.bf16.mxu0 %v848
    %2111 = vmatpush1.bf16.msra.mxu0 %v847
    %2112 = vmatprep.subr.bf16.mxu0 %v856
    %2113 = vmatpush1.bf16.msra.mxu0 %v855
    %2114 = vmatprep.subr.bf16.mxu0 %v864
    %2115 = vmatpush1.bf16.msra.mxu0 %v863
    %2116 = vmatprep.subr.bf16.mxu0 %v872
    %2117 = vmatpush1.bf16.msra.mxu0 %v871
    %2118 = vmatprep.subr.bf16.mxu0 %v880
    %2119 = vmatpush1.bf16.msra.mxu0 %v879
    %2120 = vmatprep.subr.bf16.mxu0 %v888
    %2121 = vmatpush1.bf16.msra.mxu0 %v887
    %2122 = vmatprep.subr.bf16.mxu0 %v896
    %2123 = vmatpush1.bf16.msra.mxu0 %v895
    %2124 = vmatprep.subr.bf16.mxu0 %v904
    %2125 = vmatpush1.bf16.msra.mxu0 %v903
    %2126 = vmatprep.subr.bf16.mxu0 %v912
    %2127 = vmatpush1.bf16.msra.mxu0 %v911
    %2128 = vmatprep.subr.bf16.mxu0 %v920
    %2129 = vmatpush1.bf16.msra.mxu0 %v919
    %2130 = vmatprep.subr.bf16.mxu0 %v928
    %2131 = vmatpush1.bf16.msra.mxu0 %v927
    %2132 = vmatprep.subr.bf16.mxu0 %v936
    %2133 = vmatpush1.bf16.msra.mxu0 %v935
    %2134 = vmatprep.subr.bf16.mxu0 %v944
    %2135 = vmatpush1.bf16.msra.mxu0 %v943
    %2136 = vmatprep.subr.bf16.mxu0 %v952
    %2137 = vmatpush1.bf16.msra.mxu0 %v951
    %2138 = vmatprep.subr.bf16.mxu0 %v960
    %2139 = vmatpush1.bf16.msra.mxu0 %v959
    %2140 = vmatprep.subr.bf16.mxu0 %v968
    %2141 = vmatpush1.bf16.msra.mxu0 %v967
    %2142 = vmatprep.mubr.bf16.mxu0 %v192
    %2143 = vmatmul.mubr.bf16.gmra.mrb[0].mxu0 %v191
    %v2144 = vpop.f32.mrb[0].mxu0
    %v2145 = vadd.f32 %v2104, %v2144
    %v2146 = vpop.f32.mrb[0].mxu0
    %v2147 = vadd.f32 %v2106, %v2146
    %v2148 = vpop.f32.mrb[0].mxu0
    %v2149 = vpop.f32.mrb[0].mxu0
    %2150 = vdwg.mxu0
    %2151 = vmatprep.subr.bf16.mxu0 %v976
    %2152 = vmatpush1.bf16.msra.mxu0 %v975
    %2153 = vmatprep.subr.bf16.mxu0 %v984
    %2154 = vmatpush1.bf16.msra.mxu0 %v983
    %2155 = vmatprep.subr.bf16.mxu0 %v992
    %2156 = vmatpush1.bf16.msra.mxu0 %v991
    %2157 = vmatprep.subr.bf16.mxu0 %v1000
    %2158 = vmatpush1.bf16.msra.mxu0 %v999
    %2159 = vmatprep.subr.bf16.mxu0 %v1008
    %2160 = vmatpush1.bf16.msra.mxu0 %v1007
    %2161 = vmatprep.subr.bf16.mxu0 %v1016
    %2162 = vmatpush1.bf16.msra.mxu0 %v1015
    %2163 = vmatprep.subr.bf16.mxu0 %v1024
    %2164 = vmatpush1.bf16.msra.mxu0 %v1023
    %2165 = vmatprep.subr.bf16.mxu0 %v1032
    %2166 = vmatpush1.bf16.msra.mxu0 %v1031
    %2167 = vmatprep.subr.bf16.mxu0 %v1040
    %2168 = vmatpush1.bf16.msra.mxu0 %v1039
    %2169 = vmatprep.subr.bf16.mxu0 %v1048
    %2170 = vmatpush1.bf16.msra.mxu0 %v1047
    %2171 = vmatprep.subr.bf16.mxu0 %v1056
    %2172 = vmatpush1.bf16.msra.mxu0 %v1055
    %2173 = vmatprep.subr.bf16.mxu0 %v1064
    %2174 = vmatpush1.bf16.msra.mxu0 %v1063
    %2175 = vmatprep.subr.bf16.mxu0 %v1072
    %2176 = vmatpush1.bf16.msra.mxu0 %v1071
    %2177 = vmatprep.subr.bf16.mxu0 %v1080
    %2178 = vmatpush1.bf16.msra.mxu0 %v1079
    %2179 = vmatprep.subr.bf16.mxu0 %v1088
    %2180 = vmatpush1.bf16.msra.mxu0 %v1087
    %2181 = vmatprep.subr.bf16.mxu0 %v1096
    %2182 = vmatpush1.bf16.msra.mxu0 %v1095
    %2183 = vmatprep.mubr.bf16.mxu0 %v194
    %2184 = vmatmul.mubr.bf16.gmra.mrb[0].mxu0 %v193
    %v2185 = vpop.f32.mrb[0].mxu0
    %v2186 = vadd.f32 %v2145, %v2185
    %v2187 = vpop.f32.mrb[0].mxu0
    %v2188 = vadd.f32 %v2147, %v2187
    %v2189 = vpop.f32.mrb[0].mxu0
    %v2190 = vpop.f32.mrb[0].mxu0
    %2191 = vdwg.mxu0
    %2192 = vmatprep.subr.bf16.mxu0 %v1104
    %2193 = vmatpush1.bf16.msra.mxu0 %v1103
    %2194 = vmatprep.subr.bf16.mxu0 %v1112
    %2195 = vmatpush1.bf16.msra.mxu0 %v1111
    %2196 = vmatprep.subr.bf16.mxu0 %v1120
    %2197 = vmatpush1.bf16.msra.mxu0 %v1119
    %2198 = vmatprep.subr.bf16.mxu0 %v1128
    %2199 = vmatpush1.bf16.msra.mxu0 %v1127
    %2200 = vmatprep.subr.bf16.mxu0 %v1136
    %2201 = vmatpush1.bf16.msra.mxu0 %v1135
    %2202 = vmatprep.subr.bf16.mxu0 %v1144
    %2203 = vmatpush1.bf16.msra.mxu0 %v1143
    %2204 = vmatprep.subr.bf16.mxu0 %v1152
    %2205 = vmatpush1.bf16.msra.mxu0 %v1151
    %2206 = vmatprep.subr.bf16.mxu0 %v1160
    %2207 = vmatpush1.bf16.msra.mxu0 %v1159
    %2208 = vmatprep.subr.bf16.mxu0 %v1168
    %2209 = vmatpush1.bf16.msra.mxu0 %v1167
    %2210 = vmatprep.subr.bf16.mxu0 %v1176
    %2211 = vmatpush1.bf16.msra.mxu0 %v1175
    %2212 = vmatprep.subr.bf16.mxu0 %v1184
    %2213 = vmatpush1.bf16.msra.mxu0 %v1183
    %2214 = vmatprep.subr.bf16.mxu0 %v1192
    %2215 = vmatpush1.bf16.msra.mxu0 %v1191
    %2216 = vmatprep.subr.bf16.mxu0 %v1200
    %2217 = vmatpush1.bf16.msra.mxu0 %v1199
    %2218 = vmatprep.subr.bf16.mxu0 %v1208
    %2219 = vmatpush1.bf16.msra.mxu0 %v1207
    %2220 = vmatprep.subr.bf16.mxu0 %v1216
    %2221 = vmatpush1.bf16.msra.mxu0 %v1215
    %2222 = vmatprep.subr.bf16.mxu0 %v1224
    %2223 = vmatpush1.bf16.msra.mxu0 %v1223
    %2224 = vmatprep.mubr.bf16.mxu0 %v196
    %2225 = vmatmul.mubr.bf16.gmra.mrb[0].mxu0 %v195
    %v2226 = vpop.f32.mrb[0].mxu0
    %v2227 = vadd.f32 %v2186, %v2226
    %v2228 = vpop.f32.mrb[0].mxu0
    %v2229 = vadd.f32 %v2188, %v2228
    %v2230 = vpop.f32.mrb[0].mxu0
    %v2231 = vpop.f32.mrb[0].mxu0
    %2232 = vdwg.mxu0
    %2233 = vmatprep.subr.bf16.mxu0 %v1232
    %2234 = vmatpush1.bf16.msra.mxu0 %v1231
    %2235 = vmatprep.subr.bf16.mxu0 %v1240
    %2236 = vmatpush1.bf16.msra.mxu0 %v1239
    %2237 = vmatprep.subr.bf16.mxu0 %v1248
    %2238 = vmatpush1.bf16.msra.mxu0 %v1247
    %2239 = vmatprep.subr.bf16.mxu0 %v1256
    %2240 = vmatpush1.bf16.msra.mxu0 %v1255
    %2241 = vmatprep.subr.bf16.mxu0 %v1264
    %2242 = vmatpush1.bf16.msra.mxu0 %v1263
    %2243 = vmatprep.subr.bf16.mxu0 %v1272
    %2244 = vmatpush1.bf16.msra.mxu0 %v1271
    %2245 = vmatprep.subr.bf16.mxu0 %v1280
    %2246 = vmatpush1.bf16.msra.mxu0 %v1279
    %2247 = vmatprep.subr.bf16.mxu0 %v1288
    %2248 = vmatpush1.bf16.msra.mxu0 %v1287
    %2249 = vmatprep.subr.bf16.mxu0 %v1296
    %2250 = vmatpush1.bf16.msra.mxu0 %v1295
    %2251 = vmatprep.subr.bf16.mxu0 %v1304
    %2252 = vmatpush1.bf16.msra.mxu0 %v1303
    %2253 = vmatprep.subr.bf16.mxu0 %v1312
    %2254 = vmatpush1.bf16.msra.mxu0 %v1311
    %2255 = vmatprep.subr.bf16.mxu0 %v1320
    %2256 = vmatpush1.bf16.msra.mxu0 %v1319
    %2257 = vmatprep.subr.bf16.mxu0 %v1328
    %2258 = vmatpush1.bf16.msra.mxu0 %v1327
    %2259 = vmatprep.subr.bf16.mxu0 %v1336
    %2260 = vmatpush1.bf16.msra.mxu0 %v1335
    %2261 = vmatprep.subr.bf16.mxu0 %v1344
    %2262 = vmatpush1.bf16.msra.mxu0 %v1343
    %2263 = vmatprep.subr.bf16.mxu0 %v1352
    %2264 = vmatpush1.bf16.msra.mxu0 %v1351
    %2265 = vmatprep.mubr.bf16.mxu0 %v198
    %2266 = vmatmul.mubr.bf16.gmra.mrb[0].mxu0 %v197
    %v2267 = vpop.f32.mrb[0].mxu0
    %v2268 = vadd.f32 %v2227, %v2267
    %v2269 = vpop.f32.mrb[0].mxu0
    %v2270 = vadd.f32 %v2229, %v2269
    %v2271 = vpop.f32.mrb[0].mxu0
    %v2272 = vpop.f32.mrb[0].mxu0
    %2273 = vdwg.mxu0
    %2274 = vmatprep.subr.bf16.mxu0 %v1360
    %2275 = vmatpush1.bf16.msra.mxu0 %v1359
    %2276 = vmatprep.subr.bf16.mxu0 %v1368
    %2277 = vmatpush1.bf16.msra.mxu0 %v1367
    %2278 = vmatprep.subr.bf16.mxu0 %v1376
    %2279 = vmatpush1.bf16.msra.mxu0 %v1375
    %2280 = vmatprep.subr.bf16.mxu0 %v1384
    %2281 = vmatpush1.bf16.msra.mxu0 %v1383
    %2282 = vmatprep.subr.bf16.mxu0 %v1392
    %2283 = vmatpush1.bf16.msra.mxu0 %v1391
    %2284 = vmatprep.subr.bf16.mxu0 %v1400
    %2285 = vmatpush1.bf16.msra.mxu0 %v1399
    %2286 = vmatprep.subr.bf16.mxu0 %v1408
    %2287 = vmatpush1.bf16.msra.mxu0 %v1407
    %2288 = vmatprep.subr.bf16.mxu0 %v1416
    %2289 = vmatpush1.bf16.msra.mxu0 %v1415
    %2290 = vmatprep.subr.bf16.mxu0 %v1424
    %2291 = vmatpush1.bf16.msra.mxu0 %v1423
    %2292 = vmatprep.subr.bf16.mxu0 %v1432
    %2293 = vmatpush1.bf16.msra.mxu0 %v1431
    %2294 = vmatprep.subr.bf16.mxu0 %v1440
    %2295 = vmatpush1.bf16.msra.mxu0 %v1439
    %2296 = vmatprep.subr.bf16.mxu0 %v1448
    %2297 = vmatpush1.bf16.msra.mxu0 %v1447
    %2298 = vmatprep.subr.bf16.mxu0 %v1456
    %2299 = vmatpush1.bf16.msra.mxu0 %v1455
    %2300 = vmatprep.subr.bf16.mxu0 %v1464
    %2301 = vmatpush1.bf16.msra.mxu0 %v1463
    %2302 = vmatprep.subr.bf16.mxu0 %v1472
    %2303 = vmatpush1.bf16.msra.mxu0 %v1471
    %2304 = vmatprep.subr.bf16.mxu0 %v1480
    %2305 = vmatpush1.bf16.msra.mxu0 %v1479
    %2306 = vmatprep.mubr.bf16.mxu0 %v200
    %2307 = vmatmul.mubr.bf16.gmra.mrb[0].mxu0 %v199
    %v2308 = vpop.f32.mrb[0].mxu0
    %v2309 = vadd.f32 %v2268, %v2308
    %v2310 = vpop.f32.mrb[0].mxu0
    %v2311 = vadd.f32 %v2270, %v2310
    %v2312 = vpop.f32.mrb[0].mxu0
    %v2313 = vpop.f32.mrb[0].mxu0
    %2314 = vdwg.mxu0
    %2315 = vmatprep.subr.bf16.mxu0 %v1488
    %2316 = vmatpush1.bf16.msra.mxu0 %v1487
    %2317 = vmatprep.subr.bf16.mxu0 %v1496
    %2318 = vmatpush1.bf16.msra.mxu0 %v1495
    %2319 = vmatprep.subr.bf16.mxu0 %v1504
    %2320 = vmatpush1.bf16.msra.mxu0 %v1503
    %2321 = vmatprep.subr.bf16.mxu0 %v1512
    %2322 = vmatpush1.bf16.msra.mxu0 %v1511
    %2323 = vmatprep.subr.bf16.mxu0 %v1520
    %2324 = vmatpush1.bf16.msra.mxu0 %v1519
    %2325 = vmatprep.subr.bf16.mxu0 %v1528
    %2326 = vmatpush1.bf16.msra.mxu0 %v1527
    %2327 = vmatprep.subr.bf16.mxu0 %v1536
    %2328 = vmatpush1.bf16.msra.mxu0 %v1535
    %2329 = vmatprep.subr.bf16.mxu0 %v1544
    %2330 = vmatpush1.bf16.msra.mxu0 %v1543
    %2331 = vmatprep.subr.bf16.mxu0 %v1552
    %2332 = vmatpush1.bf16.msra.mxu0 %v1551
    %2333 = vmatprep.subr.bf16.mxu0 %v1560
    %2334 = vmatpush1.bf16.msra.mxu0 %v1559
    %2335 = vmatprep.subr.bf16.mxu0 %v1568
    %2336 = vmatpush1.bf16.msra.mxu0 %v1567
    %2337 = vmatprep.subr.bf16.mxu0 %v1576
    %2338 = vmatpush1.bf16.msra.mxu0 %v1575
    %2339 = vmatprep.subr.bf16.mxu0 %v1584
    %2340 = vmatpush1.bf16.msra.mxu0 %v1583
    %2341 = vmatprep.subr.bf16.mxu0 %v1592
    %2342 = vmatpush1.bf16.msra.mxu0 %v1591
    %2343 = vmatprep.subr.bf16.mxu0 %v1600
    %2344 = vmatpush1.bf16.msra.mxu0 %v1599
    %2345 = vmatprep.subr.bf16.mxu0 %v1608
    %2346 = vmatpush1.bf16.msra.mxu0 %v1607
    %2347 = vmatprep.mubr.bf16.mxu0 %v202
    %2348 = vmatmul.mubr.bf16.gmra.mrb[0].mxu0 %v201
    %v2349 = vpop.f32.mrb[0].mxu0
    %v2350 = vadd.f32 %v2309, %v2349
    %v2351 = vpop.f32.mrb[0].mxu0
    %v2352 = vadd.f32 %v2311, %v2351
    %v2353 = vpop.f32.mrb[0].mxu0
    %v2354 = vpop.f32.mrb[0].mxu0
    %2355 = vdwg.mxu0
    %2356 = vmatprep.subr.bf16.mxu0 %v1616
    %2357 = vmatpush1.bf16.msra.mxu0 %v1615
    %2358 = vmatprep.subr.bf16.mxu0 %v1624
    %2359 = vmatpush1.bf16.msra.mxu0 %v1623
    %2360 = vmatprep.subr.bf16.mxu0 %v1632
    %2361 = vmatpush1.bf16.msra.mxu0 %v1631
    %2362 = vmatprep.subr.bf16.mxu0 %v1640
    %2363 = vmatpush1.bf16.msra.mxu0 %v1639
    %2364 = vmatprep.subr.bf16.mxu0 %v1648
    %2365 = vmatpush1.bf16.msra.mxu0 %v1647
    %2366 = vmatprep.subr.bf16.mxu0 %v1656
    %2367 = vmatpush1.bf16.msra.mxu0 %v1655
    %2368 = vmatprep.subr.bf16.mxu0 %v1664
    %2369 = vmatpush1.bf16.msra.mxu0 %v1663
    %2370 = vmatprep.subr.bf16.mxu0 %v1672
    %2371 = vmatpush1.bf16.msra.mxu0 %v1671
    %2372 = vmatprep.subr.bf16.mxu0 %v1680
    %2373 = vmatpush1.bf16.msra.mxu0 %v1679
    %2374 = vmatprep.subr.bf16.mxu0 %v1688
    %2375 = vmatpush1.bf16.msra.mxu0 %v1687
    %2376 = vmatprep.subr.bf16.mxu0 %v1696
    %2377 = vmatpush1.bf16.msra.mxu0 %v1695
    %2378 = vmatprep.subr.bf16.mxu0 %v1704
    %2379 = vmatpush1.bf16.msra.mxu0 %v1703
    %2380 = vmatprep.subr.bf16.mxu0 %v1712
    %2381 = vmatpush1.bf16.msra.mxu0 %v1711
    %2382 = vmatprep.subr.bf16.mxu0 %v1720
    %2383 = vmatpush1.bf16.msra.mxu0 %v1719
    %2384 = vmatprep.subr.bf16.mxu0 %v1728
    %2385 = vmatpush1.bf16.msra.mxu0 %v1727
    %2386 = vmatprep.subr.bf16.mxu0 %v1736
    %2387 = vmatpush1.bf16.msra.mxu0 %v1735
    %2388 = vmatprep.mubr.bf16.mxu0 %v204
    %2389 = vmatmul.mubr.bf16.gmra.mrb[0].mxu0 %v203
    %v2390 = vpop.f32.mrb[0].mxu0
    %v2391 = vadd.f32 %v2350, %v2390
    %v2392 = vpop.f32.mrb[0].mxu0
    %v2393 = vadd.f32 %v2352, %v2392
    %v2394 = vpop.f32.mrb[0].mxu0
    %v2395 = vpop.f32.mrb[0].mxu0
    %2396 = vdwg.mxu0
    %2397 = vmatprep.subr.bf16.mxu0 %v722
    %2398 = vmatpush1.bf16.msra.mxu0 %v721
    %2399 = vmatprep.subr.bf16.mxu0 %v730
    %2400 = vmatpush1.bf16.msra.mxu0 %v729
    %2401 = vmatprep.subr.bf16.mxu0 %v738
    %2402 = vmatpush1.bf16.msra.mxu0 %v737
    %2403 = vmatprep.subr.bf16.mxu0 %v746
    %2404 = vmatpush1.bf16.msra.mxu0 %v745
    %2405 = vmatprep.subr.bf16.mxu0 %v754
    %2406 = vmatpush1.bf16.msra.mxu0 %v753
    %2407 = vmatprep.subr.bf16.mxu0 %v762
    %2408 = vmatpush1.bf16.msra.mxu0 %v761
    %2409 = vmatprep.subr.bf16.mxu0 %v770
    %2410 = vmatpush1.bf16.msra.mxu0 %v769
    %2411 = vmatprep.subr.bf16.mxu0 %v778
    %2412 = vmatpush1.bf16.msra.mxu0 %v777
    %2413 = vmatprep.subr.bf16.mxu0 %v786
    %2414 = vmatpush1.bf16.msra.mxu0 %v785
    %2415 = vmatprep.subr.bf16.mxu0 %v794
    %2416 = vmatpush1.bf16.msra.mxu0 %v793
    %2417 = vmatprep.subr.bf16.mxu0 %v802
    %2418 = vmatpush1.bf16.msra.mxu0 %v801
    %2419 = vmatprep.subr.bf16.mxu0 %v810
    %2420 = vmatpush1.bf16.msra.mxu0 %v809
    %2421 = vmatprep.subr.bf16.mxu0 %v818
    %2422 = vmatpush1.bf16.msra.mxu0 %v817
    %2423 = vmatprep.subr.bf16.mxu0 %v826
    %2424 = vmatpush1.bf16.msra.mxu0 %v825
    %2425 = vmatprep.subr.bf16.mxu0 %v834
    %2426 = vmatpush1.bf16.msra.mxu0 %v833
    %2427 = vmatprep.subr.bf16.mxu0 %v842
    %2428 = vmatpush1.bf16.msra.mxu0 %v841
    %2429 = vmatprep.mubr.bf16.mxu0 %v190
    %2430 = vmatmul.mubr.bf16.gmra.mrb[0].mxu0 %v189
    %v2431 = vpop.f32.mrb[0].mxu0
    %v2432 = vadd.f32 0.0, %v2431
    %v2433 = vpop.f32.mrb[0].mxu0
    %v2434 = vadd.f32 0.0, %v2433
    %v2435 = vpop.f32.mrb[0].mxu0
    %v2436 = vpop.f32.mrb[0].mxu0
    %2437 = vdwg.mxu0
    %2438 = vmatprep.subr.bf16.mxu0 %v850
    %2439 = vmatpush1.bf16.msra.mxu0 %v849
    %2440 = vmatprep.subr.bf16.mxu0 %v858
    %2441 = vmatpush1.bf16.msra.mxu0 %v857
    %2442 = vmatprep.subr.bf16.mxu0 %v866
    %2443 = vmatpush1.bf16.msra.mxu0 %v865
    %2444 = vmatprep.subr.bf16.mxu0 %v874
    %2445 = vmatpush1.bf16.msra.mxu0 %v873
    %2446 = vmatprep.subr.bf16.mxu0 %v882
    %2447 = vmatpush1.bf16.msra.mxu0 %v881
    %2448 = vmatprep.subr.bf16.mxu0 %v890
    %2449 = vmatpush1.bf16.msra.mxu0 %v889
    %2450 = vmatprep.subr.bf16.mxu0 %v898
    %2451 = vmatpush1.bf16.msra.mxu0 %v897
    %2452 = vmatprep.subr.bf16.mxu0 %v906
    %2453 = vmatpush1.bf16.msra.mxu0 %v905
    %2454 = vmatprep.subr.bf16.mxu0 %v914
    %2455 = vmatpush1.bf16.msra.mxu0 %v913
    %2456 = vmatprep.subr.bf16.mxu0 %v922
    %2457 = vmatpush1.bf16.msra.mxu0 %v921
    %2458 = vmatprep.subr.bf16.mxu0 %v930
    %2459 = vmatpush1.bf16.msra.mxu0 %v929
    %2460 = vmatprep.subr.bf16.mxu0 %v938
    %2461 = vmatpush1.bf16.msra.mxu0 %v937
    %2462 = vmatprep.subr.bf16.mxu0 %v946
    %2463 = vmatpush1.bf16.msra.mxu0 %v945
    %2464 = vmatprep.subr.bf16.mxu0 %v954
    %2465 = vmatpush1.bf16.msra.mxu0 %v953
    %2466 = vmatprep.subr.bf16.mxu0 %v962
    %2467 = vmatpush1.bf16.msra.mxu0 %v961
    %2468 = vmatprep.subr.bf16.mxu0 %v970
    %2469 = vmatpush1.bf16.msra.mxu0 %v969
    %2470 = vmatprep.mubr.bf16.mxu0 %v192
    %2471 = vmatmul.mubr.bf16.gmra.mrb[0].mxu0 %v191
    %v2472 = vpop.f32.mrb[0].mxu0
    %v2473 = vadd.f32 %v2432, %v2472
    %v2474 = vpop.f32.mrb[0].mxu0
    %v2475 = vadd.f32 %v2434, %v2474
    %v2476 = vpop.f32.mrb[0].mxu0
    %v2477 = vpop.f32.mrb[0].mxu0
    %2478 = vdwg.mxu0
    %2479 = vmatprep.subr.bf16.mxu0 %v978
    %2480 = vmatpush1.bf16.msra.mxu0 %v977
    %2481 = vmatprep.subr.bf16.mxu0 %v986
    %2482 = vmatpush1.bf16.msra.mxu0 %v985
    %2483 = vmatprep.subr.bf16.mxu0 %v994
    %2484 = vmatpush1.bf16.msra.mxu0 %v993
    %2485 = vmatprep.subr.bf16.mxu0 %v1002
    %2486 = vmatpush1.bf16.msra.mxu0 %v1001
    %2487 = vmatprep.subr.bf16.mxu0 %v1010
    %2488 = vmatpush1.bf16.msra.mxu0 %v1009
    %2489 = vmatprep.subr.bf16.mxu0 %v1018
    %2490 = vmatpush1.bf16.msra.mxu0 %v1017
    %2491 = vmatprep.subr.bf16.mxu0 %v1026
    %2492 = vmatpush1.bf16.msra.mxu0 %v1025
    %2493 = vmatprep.subr.bf16.mxu0 %v1034
    %2494 = vmatpush1.bf16.msra.mxu0 %v1033
    %2495 = vmatprep.subr.bf16.mxu0 %v1042
    %2496 = vmatpush1.bf16.msra.mxu0 %v1041
    %2497 = vmatprep.subr.bf16.mxu0 %v1050
    %2498 = vmatpush1.bf16.msra.mxu0 %v1049
    %2499 = vmatprep.subr.bf16.mxu0 %v1058
    %2500 = vmatpush1.bf16.msra.mxu0 %v1057
    %2501 = vmatprep.subr.bf16.mxu0 %v1066
    %2502 = vmatpush1.bf16.msra.mxu0 %v1065
    %2503 = vmatprep.subr.bf16.mxu0 %v1074
    %2504 = vmatpush1.bf16.msra.mxu0 %v1073
    %2505 = vmatprep.subr.bf16.mxu0 %v1082
    %2506 = vmatpush1.bf16.msra.mxu0 %v1081
    %2507 = vmatprep.subr.bf16.mxu0 %v1090
    %2508 = vmatpush1.bf16.msra.mxu0 %v1089
    %2509 = vmatprep.subr.bf16.mxu0 %v1098
    %2510 = vmatpush1.bf16.msra.mxu0 %v1097
    %2511 = vmatprep.mubr.bf16.mxu0 %v194
    %2512 = vmatmul.mubr.bf16.gmra.mrb[0].mxu0 %v193
    %v2513 = vpop.f32.mrb[0].mxu0
    %v2514 = vadd.f32 %v2473, %v2513
    %v2515 = vpop.f32.mrb[0].mxu0
    %v2516 = vadd.f32 %v2475, %v2515
    %v2517 = vpop.f32.mrb[0].mxu0
    %v2518 = vpop.f32.mrb[0].mxu0
    %2519 = vdwg.mxu0
    %2520 = vmatprep.subr.bf16.mxu0 %v1106
    %2521 = vmatpush1.bf16.msra.mxu0 %v1105
    %2522 = vmatprep.subr.bf16.mxu0 %v1114
    %2523 = vmatpush1.bf16.msra.mxu0 %v1113
    %2524 = vmatprep.subr.bf16.mxu0 %v1122
    %2525 = vmatpush1.bf16.msra.mxu0 %v1121
    %2526 = vmatprep.subr.bf16.mxu0 %v1130
    %2527 = vmatpush1.bf16.msra.mxu0 %v1129
    %2528 = vmatprep.subr.bf16.mxu0 %v1138
    %2529 = vmatpush1.bf16.msra.mxu0 %v1137
    %2530 = vmatprep.subr.bf16.mxu0 %v1146
    %2531 = vmatpush1.bf16.msra.mxu0 %v1145
    %2532 = vmatprep.subr.bf16.mxu0 %v1154
    %2533 = vmatpush1.bf16.msra.mxu0 %v1153
    %2534 = vmatprep.subr.bf16.mxu0 %v1162
    %2535 = vmatpush1.bf16.msra.mxu0 %v1161
    %2536 = vmatprep.subr.bf16.mxu0 %v1170
    %2537 = vmatpush1.bf16.msra.mxu0 %v1169
    %2538 = vmatprep.subr.bf16.mxu0 %v1178
    %2539 = vmatpush1.bf16.msra.mxu0 %v1177
    %2540 = vmatprep.subr.bf16.mxu0 %v1186
    %2541 = vmatpush1.bf16.msra.mxu0 %v1185
    %2542 = vmatprep.subr.bf16.mxu0 %v1194
    %2543 = vmatpush1.bf16.msra.mxu0 %v1193
    %2544 = vmatprep.subr.bf16.mxu0 %v1202
    %2545 = vmatpush1.bf16.msra.mxu0 %v1201
    %2546 = vmatprep.subr.bf16.mxu0 %v1210
    %2547 = vmatpush1.bf16.msra.mxu0 %v1209
    %2548 = vmatprep.subr.bf16.mxu0 %v1218
    %2549 = vmatpush1.bf16.msra.mxu0 %v1217
    %2550 = vmatprep.subr.bf16.mxu0 %v1226
    %2551 = vmatpush1.bf16.msra.mxu0 %v1225
    %2552 = vmatprep.mubr.bf16.mxu0 %v196
    %2553 = vmatmul.mubr.bf16.gmra.mrb[0].mxu0 %v195
    %v2554 = vpop.f32.mrb[0].mxu0
    %v2555 = vadd.f32 %v2514, %v2554
    %v2556 = vpop.f32.mrb[0].mxu0
    %v2557 = vadd.f32 %v2516, %v2556
    %v2558 = vpop.f32.mrb[0].mxu0
    %v2559 = vpop.f32.mrb[0].mxu0
    %2560 = vdwg.mxu0
    %2561 = vmatprep.subr.bf16.mxu0 %v1234
    %2562 = vmatpush1.bf16.msra.mxu0 %v1233
    %2563 = vmatprep.subr.bf16.mxu0 %v1242
    %2564 = vmatpush1.bf16.msra.mxu0 %v1241
    %2565 = vmatprep.subr.bf16.mxu0 %v1250
    %2566 = vmatpush1.bf16.msra.mxu0 %v1249
    %2567 = vmatprep.subr.bf16.mxu0 %v1258
    %2568 = vmatpush1.bf16.msra.mxu0 %v1257
    %2569 = vmatprep.subr.bf16.mxu0 %v1266
    %2570 = vmatpush1.bf16.msra.mxu0 %v1265
    %2571 = vmatprep.subr.bf16.mxu0 %v1274
    %2572 = vmatpush1.bf16.msra.mxu0 %v1273
    %2573 = vmatprep.subr.bf16.mxu0 %v1282
    %2574 = vmatpush1.bf16.msra.mxu0 %v1281
    %2575 = vmatprep.subr.bf16.mxu0 %v1290
    %2576 = vmatpush1.bf16.msra.mxu0 %v1289
    %2577 = vmatprep.subr.bf16.mxu0 %v1298
    %2578 = vmatpush1.bf16.msra.mxu0 %v1297
    %2579 = vmatprep.subr.bf16.mxu0 %v1306
    %2580 = vmatpush1.bf16.msra.mxu0 %v1305
    %2581 = vmatprep.subr.bf16.mxu0 %v1314
    %2582 = vmatpush1.bf16.msra.mxu0 %v1313
    %2583 = vmatprep.subr.bf16.mxu0 %v1322
    %2584 = vmatpush1.bf16.msra.mxu0 %v1321
    %2585 = vmatprep.subr.bf16.mxu0 %v1330
    %2586 = vmatpush1.bf16.msra.mxu0 %v1329
    %2587 = vmatprep.subr.bf16.mxu0 %v1338
    %2588 = vmatpush1.bf16.msra.mxu0 %v1337
    %2589 = vmatprep.subr.bf16.mxu0 %v1346
    %2590 = vmatpush1.bf16.msra.mxu0 %v1345
    %2591 = vmatprep.subr.bf16.mxu0 %v1354
    %2592 = vmatpush1.bf16.msra.mxu0 %v1353
    %2593 = vmatprep.mubr.bf16.mxu0 %v198
    %2594 = vmatmul.mubr.bf16.gmra.mrb[0].mxu0 %v197
    %v2595 = vpop.f32.mrb[0].mxu0
    %v2596 = vadd.f32 %v2555, %v2595
    %v2597 = vpop.f32.mrb[0].mxu0
    %v2598 = vadd.f32 %v2557, %v2597
    %v2599 = vpop.f32.mrb[0].mxu0
    %v2600 = vpop.f32.mrb[0].mxu0
    %2601 = vdwg.mxu0
    %2602 = vmatprep.subr.bf16.mxu0 %v1362
    %2603 = vmatpush1.bf16.msra.mxu0 %v1361
    %2604 = vmatprep.subr.bf16.mxu0 %v1370
    %2605 = vmatpush1.bf16.msra.mxu0 %v1369
    %2606 = vmatprep.subr.bf16.mxu0 %v1378
    %2607 = vmatpush1.bf16.msra.mxu0 %v1377
    %2608 = vmatprep.subr.bf16.mxu0 %v1386
    %2609 = vmatpush1.bf16.msra.mxu0 %v1385
    %2610 = vmatprep.subr.bf16.mxu0 %v1394
    %2611 = vmatpush1.bf16.msra.mxu0 %v1393
    %2612 = vmatprep.subr.bf16.mxu0 %v1402
    %2613 = vmatpush1.bf16.msra.mxu0 %v1401
    %2614 = vmatprep.subr.bf16.mxu0 %v1410
    %2615 = vmatpush1.bf16.msra.mxu0 %v1409
    %2616 = vmatprep.subr.bf16.mxu0 %v1418
    %2617 = vmatpush1.bf16.msra.mxu0 %v1417
    %2618 = vmatprep.subr.bf16.mxu0 %v1426
    %2619 = vmatpush1.bf16.msra.mxu0 %v1425
    %2620 = vmatprep.subr.bf16.mxu0 %v1434
    %2621 = vmatpush1.bf16.msra.mxu0 %v1433
    %2622 = vmatprep.subr.bf16.mxu0 %v1442
    %2623 = vmatpush1.bf16.msra.mxu0 %v1441
    %2624 = vmatprep.subr.bf16.mxu0 %v1450
    %2625 = vmatpush1.bf16.msra.mxu0 %v1449
    %2626 = vmatprep.subr.bf16.mxu0 %v1458
    %2627 = vmatpush1.bf16.msra.mxu0 %v1457
    %2628 = vmatprep.subr.bf16.mxu0 %v1466
    %2629 = vmatpush1.bf16.msra.mxu0 %v1465
    %2630 = vmatprep.subr.bf16.mxu0 %v1474
    %2631 = vmatpush1.bf16.msra.mxu0 %v1473
    %2632 = vmatprep.subr.bf16.mxu0 %v1482
    %2633 = vmatpush1.bf16.msra.mxu0 %v1481
    %2634 = vmatprep.mubr.bf16.mxu0 %v200
    %2635 = vmatmul.mubr.bf16.gmra.mrb[0].mxu0 %v199
    %v2636 = vpop.f32.mrb[0].mxu0
    %v2637 = vadd.f32 %v2596, %v2636
    %v2638 = vpop.f32.mrb[0].mxu0
    %v2639 = vadd.f32 %v2598, %v2638
    %v2640 = vpop.f32.mrb[0].mxu0
    %v2641 = vpop.f32.mrb[0].mxu0
    %2642 = vdwg.mxu0
    %2643 = vmatprep.subr.bf16.mxu0 %v1490
    %2644 = vmatpush1.bf16.msra.mxu0 %v1489
    %2645 = vmatprep.subr.bf16.mxu0 %v1498
    %2646 = vmatpush1.bf16.msra.mxu0 %v1497
    %2647 = vmatprep.subr.bf16.mxu0 %v1506
    %2648 = vmatpush1.bf16.msra.mxu0 %v1505
    %2649 = vmatprep.subr.bf16.mxu0 %v1514
    %2650 = vmatpush1.bf16.msra.mxu0 %v1513
    %2651 = vmatprep.subr.bf16.mxu0 %v1522
    %2652 = vmatpush1.bf16.msra.mxu0 %v1521
    %2653 = vmatprep.subr.bf16.mxu0 %v1530
    %2654 = vmatpush1.bf16.msra.mxu0 %v1529
    %2655 = vmatprep.subr.bf16.mxu0 %v1538
    %2656 = vmatpush1.bf16.msra.mxu0 %v1537
    %2657 = vmatprep.subr.bf16.mxu0 %v1546
    %2658 = vmatpush1.bf16.msra.mxu0 %v1545
    %2659 = vmatprep.subr.bf16.mxu0 %v1554
    %2660 = vmatpush1.bf16.msra.mxu0 %v1553
    %2661 = vmatprep.subr.bf16.mxu0 %v1562
    %2662 = vmatpush1.bf16.msra.mxu0 %v1561
    %2663 = vmatprep.subr.bf16.mxu0 %v1570
    %2664 = vmatpush1.bf16.msra.mxu0 %v1569
    %2665 = vmatprep.subr.bf16.mxu0 %v1578
    %2666 = vmatpush1.bf16.msra.mxu0 %v1577
    %2667 = vmatprep.subr.bf16.mxu0 %v1586
    %2668 = vmatpush1.bf16.msra.mxu0 %v1585
    %2669 = vmatprep.subr.bf16.mxu0 %v1594
    %2670 = vmatpush1.bf16.msra.mxu0 %v1593
    %2671 = vmatprep.subr.bf16.mxu0 %v1602
    %2672 = vmatpush1.bf16.msra.mxu0 %v1601
    %2673 = vmatprep.subr.bf16.mxu0 %v1610
    %2674 = vmatpush1.bf16.msra.mxu0 %v1609
    %2675 = vmatprep.mubr.bf16.mxu0 %v202
    %2676 = vmatmul.mubr.bf16.gmra.mrb[0].mxu0 %v201
    %v2677 = vpop.f32.mrb[0].mxu0
    %v2678 = vadd.f32 %v2637, %v2677
    %v2679 = vpop.f32.mrb[0].mxu0
    %v2680 = vadd.f32 %v2639, %v2679
    %v2681 = vpop.f32.mrb[0].mxu0
    %v2682 = vpop.f32.mrb[0].mxu0
    %2683 = vdwg.mxu0
    %2684 = vmatprep.subr.bf16.mxu0 %v1618
    %2685 = vmatpush1.bf16.msra.mxu0 %v1617
    %2686 = vmatprep.subr.bf16.mxu0 %v1626
    %2687 = vmatpush1.bf16.msra.mxu0 %v1625
    %2688 = vmatprep.subr.bf16.mxu0 %v1634
    %2689 = vmatpush1.bf16.msra.mxu0 %v1633
    %2690 = vmatprep.subr.bf16.mxu0 %v1642
    %2691 = vmatpush1.bf16.msra.mxu0 %v1641
    %2692 = vmatprep.subr.bf16.mxu0 %v1650
    %2693 = vmatpush1.bf16.msra.mxu0 %v1649
    %2694 = vmatprep.subr.bf16.mxu0 %v1658
    %2695 = vmatpush1.bf16.msra.mxu0 %v1657
    %2696 = vmatprep.subr.bf16.mxu0 %v1666
    %2697 = vmatpush1.bf16.msra.mxu0 %v1665
    %2698 = vmatprep.subr.bf16.mxu0 %v1674
    %2699 = vmatpush1.bf16.msra.mxu0 %v1673
    %2700 = vmatprep.subr.bf16.mxu0 %v1682
    %2701 = vmatpush1.bf16.msra.mxu0 %v1681
    %2702 = vmatprep.subr.bf16.mxu0 %v1690
    %2703 = vmatpush1.bf16.msra.mxu0 %v1689
    %2704 = vmatprep.subr.bf16.mxu0 %v1698
    %2705 = vmatpush1.bf16.msra.mxu0 %v1697
    %2706 = vmatprep.subr.bf16.mxu0 %v1706
    %2707 = vmatpush1.bf16.msra.mxu0 %v1705
    %2708 = vmatprep.subr.bf16.mxu0 %v1714
    %2709 = vmatpush1.bf16.msra.mxu0 %v1713
    %2710 = vmatprep.subr.bf16.mxu0 %v1722
    %2711 = vmatpush1.bf16.msra.mxu0 %v1721
    %2712 = vmatprep.subr.bf16.mxu0 %v1730
    %2713 = vmatpush1.bf16.msra.mxu0 %v1729
    %2714 = vmatprep.subr.bf16.mxu0 %v1738
    %2715 = vmatpush1.bf16.msra.mxu0 %v1737
    %2716 = vmatprep.mubr.bf16.mxu0 %v204
    %2717 = vmatmul.mubr.bf16.gmra.mrb[0].mxu0 %v203
    %v2718 = vpop.f32.mrb[0].mxu0
    %v2719 = vadd.f32 %v2678, %v2718
    %v2720 = vpop.f32.mrb[0].mxu0
    %v2721 = vadd.f32 %v2680, %v2720
    %v2722 = vpop.f32.mrb[0].mxu0
    %v2723 = vpop.f32.mrb[0].mxu0
    %2724 = vdwg.mxu0
    %2725 = vmatprep.subr.bf16.mxu0 %v724
    %2726 = vmatpush1.bf16.msra.mxu0 %v723
    %2727 = vmatprep.subr.bf16.mxu0 %v732
    %2728 = vmatpush1.bf16.msra.mxu0 %v731
    %2729 = vmatprep.subr.bf16.mxu0 %v740
    %2730 = vmatpush1.bf16.msra.mxu0 %v739
    %2731 = vmatprep.subr.bf16.mxu0 %v748
    %2732 = vmatpush1.bf16.msra.mxu0 %v747
    %2733 = vmatprep.subr.bf16.mxu0 %v756
    %2734 = vmatpush1.bf16.msra.mxu0 %v755
    %2735 = vmatprep.subr.bf16.mxu0 %v764
    %2736 = vmatpush1.bf16.msra.mxu0 %v763
    %2737 = vmatprep.subr.bf16.mxu0 %v772
    %2738 = vmatpush1.bf16.msra.mxu0 %v771
    %2739 = vmatprep.subr.bf16.mxu0 %v780
    %2740 = vmatpush1.bf16.msra.mxu0 %v779
    %2741 = vmatprep.subr.bf16.mxu0 %v788
    %2742 = vmatpush1.bf16.msra.mxu0 %v787
    %2743 = vmatprep.subr.bf16.mxu0 %v796
    %2744 = vmatpush1.bf16.msra.mxu0 %v795
    %2745 = vmatprep.subr.bf16.mxu0 %v804
    %2746 = vmatpush1.bf16.msra.mxu0 %v803
    %2747 = vmatprep.subr.bf16.mxu0 %v812
    %2748 = vmatpush1.bf16.msra.mxu0 %v811
    %2749 = vmatprep.subr.bf16.mxu0 %v820
    %2750 = vmatpush1.bf16.msra.mxu0 %v819
    %2751 = vmatprep.subr.bf16.mxu0 %v828
    %2752 = vmatpush1.bf16.msra.mxu0 %v827
    %2753 = vmatprep.subr.bf16.mxu0 %v836
    %2754 = vmatpush1.bf16.msra.mxu0 %v835
    %2755 = vmatprep.subr.bf16.mxu0 %v844
    %2756 = vmatpush1.bf16.msra.mxu0 %v843
    %2757 = vmatprep.mubr.bf16.mxu0 %v190
    %2758 = vmatmul.mubr.bf16.gmra.mrb[0].mxu0 %v189
    %v2759 = vpop.f32.mrb[0].mxu0
    %v2760 = vadd.f32 0.0, %v2759
    %v2761 = vpop.f32.mrb[0].mxu0
    %v2762 = vadd.f32 0.0, %v2761
    %v2763 = vpop.f32.mrb[0].mxu0
    %v2764 = vpop.f32.mrb[0].mxu0
    %2765 = vdwg.mxu0
    %2766 = vmatprep.subr.bf16.mxu0 %v852
    %2767 = vmatpush1.bf16.msra.mxu0 %v851
    %2768 = vmatprep.subr.bf16.mxu0 %v860
    %2769 = vmatpush1.bf16.msra.mxu0 %v859
    %2770 = vmatprep.subr.bf16.mxu0 %v868
    %2771 = vmatpush1.bf16.msra.mxu0 %v867
    %2772 = vmatprep.subr.bf16.mxu0 %v876
    %2773 = vmatpush1.bf16.msra.mxu0 %v875
    %2774 = vmatprep.subr.bf16.mxu0 %v884
    %2775 = vmatpush1.bf16.msra.mxu0 %v883
    %2776 = vmatprep.subr.bf16.mxu0 %v892
    %2777 = vmatpush1.bf16.msra.mxu0 %v891
    %2778 = vmatprep.subr.bf16.mxu0 %v900
    %2779 = vmatpush1.bf16.msra.mxu0 %v899
    %2780 = vmatprep.subr.bf16.mxu0 %v908
    %2781 = vmatpush1.bf16.msra.mxu0 %v907
    %2782 = vmatprep.subr.bf16.mxu0 %v916
    %2783 = vmatpush1.bf16.msra.mxu0 %v915
    %2784 = vmatprep.subr.bf16.mxu0 %v924
    %2785 = vmatpush1.bf16.msra.mxu0 %v923
    %2786 = vmatprep.subr.bf16.mxu0 %v932
    %2787 = vmatpush1.bf16.msra.mxu0 %v931
    %2788 = vmatprep.subr.bf16.mxu0 %v940
    %2789 = vmatpush1.bf16.msra.mxu0 %v939
    %2790 = vmatprep.subr.bf16.mxu0 %v948
    %2791 = vmatpush1.bf16.msra.mxu0 %v947
    %2792 = vmatprep.subr.bf16.mxu0 %v956
    %2793 = vmatpush1.bf16.msra.mxu0 %v955
    %2794 = vmatprep.subr.bf16.mxu0 %v964
    %2795 = vmatpush1.bf16.msra.mxu0 %v963
    %2796 = vmatprep.subr.bf16.mxu0 %v972
    %2797 = vmatpush1.bf16.msra.mxu0 %v971
    %2798 = vmatprep.mubr.bf16.mxu0 %v192
    %2799 = vmatmul.mubr.bf16.gmra.mrb[0].mxu0 %v191
    %v2800 = vpop.f32.mrb[0].mxu0
    %v2801 = vadd.f32 %v2760, %v2800
    %v2802 = vpop.f32.mrb[0].mxu0
    %v2803 = vadd.f32 %v2762, %v2802
    %v2804 = vpop.f32.mrb[0].mxu0
    %v2805 = vpop.f32.mrb[0].mxu0
    %2806 = vdwg.mxu0
    %2807 = vmatprep.subr.bf16.mxu0 %v980
    %2808 = vmatpush1.bf16.msra.mxu0 %v979
    %2809 = vmatprep.subr.bf16.mxu0 %v988
    %2810 = vmatpush1.bf16.msra.mxu0 %v987
    %2811 = vmatprep.subr.bf16.mxu0 %v996
    %2812 = vmatpush1.bf16.msra.mxu0 %v995
    %2813 = vmatprep.subr.bf16.mxu0 %v1004
    %2814 = vmatpush1.bf16.msra.mxu0 %v1003
    %2815 = vmatprep.subr.bf16.mxu0 %v1012
    %2816 = vmatpush1.bf16.msra.mxu0 %v1011
    %2817 = vmatprep.subr.bf16.mxu0 %v1020
    %2818 = vmatpush1.bf16.msra.mxu0 %v1019
    %2819 = vmatprep.subr.bf16.mxu0 %v1028
    %2820 = vmatpush1.bf16.msra.mxu0 %v1027
    %2821 = vmatprep.subr.bf16.mxu0 %v1036
    %2822 = vmatpush1.bf16.msra.mxu0 %v1035
    %2823 = vmatprep.subr.bf16.mxu0 %v1044
    %2824 = vmatpush1.bf16.msra.mxu0 %v1043
    %2825 = vmatprep.subr.bf16.mxu0 %v1052
    %2826 = vmatpush1.bf16.msra.mxu0 %v1051
    %2827 = vmatprep.subr.bf16.mxu0 %v1060
    %2828 = vmatpush1.bf16.msra.mxu0 %v1059
    %2829 = vmatprep.subr.bf16.mxu0 %v1068
    %2830 = vmatpush1.bf16.msra.mxu0 %v1067
    %2831 = vmatprep.subr.bf16.mxu0 %v1076
    %2832 = vmatpush1.bf16.msra.mxu0 %v1075
    %2833 = vmatprep.subr.bf16.mxu0 %v1084
    %2834 = vmatpush1.bf16.msra.mxu0 %v1083
    %2835 = vmatprep.subr.bf16.mxu0 %v1092
    %2836 = vmatpush1.bf16.msra.mxu0 %v1091
    %2837 = vmatprep.subr.bf16.mxu0 %v1100
    %2838 = vmatpush1.bf16.msra.mxu0 %v1099
    %2839 = vmatprep.mubr.bf16.mxu0 %v194
    %2840 = vmatmul.mubr.bf16.gmra.mrb[0].mxu0 %v193
    %v2841 = vpop.f32.mrb[0].mxu0
    %v2842 = vadd.f32 %v2801, %v2841
    %v2843 = vpop.f32.mrb[0].mxu0
    %v2844 = vadd.f32 %v2803, %v2843
    %v2845 = vpop.f32.mrb[0].mxu0
    %v2846 = vpop.f32.mrb[0].mxu0
    %2847 = vdwg.mxu0
    %2848 = vmatprep.subr.bf16.mxu0 %v1108
    %2849 = vmatpush1.bf16.msra.mxu0 %v1107
    %2850 = vmatprep.subr.bf16.mxu0 %v1116
    %2851 = vmatpush1.bf16.msra.mxu0 %v1115
    %2852 = vmatprep.subr.bf16.mxu0 %v1124
    %2853 = vmatpush1.bf16.msra.mxu0 %v1123
    %2854 = vmatprep.subr.bf16.mxu0 %v1132
    %2855 = vmatpush1.bf16.msra.mxu0 %v1131
    %2856 = vmatprep.subr.bf16.mxu0 %v1140
    %2857 = vmatpush1.bf16.msra.mxu0 %v1139
    %2858 = vmatprep.subr.bf16.mxu0 %v1148
    %2859 = vmatpush1.bf16.msra.mxu0 %v1147
    %2860 = vmatprep.subr.bf16.mxu0 %v1156
    %2861 = vmatpush1.bf16.msra.mxu0 %v1155
    %2862 = vmatprep.subr.bf16.mxu0 %v1164
    %2863 = vmatpush1.bf16.msra.mxu0 %v1163
    %2864 = vmatprep.subr.bf16.mxu0 %v1172
    %2865 = vmatpush1.bf16.msra.mxu0 %v1171
    %2866 = vmatprep.subr.bf16.mxu0 %v1180
    %2867 = vmatpush1.bf16.msra.mxu0 %v1179
    %2868 = vmatprep.subr.bf16.mxu0 %v1188
    %2869 = vmatpush1.bf16.msra.mxu0 %v1187
    %2870 = vmatprep.subr.bf16.mxu0 %v1196
    %2871 = vmatpush1.bf16.msra.mxu0 %v1195
    %2872 = vmatprep.subr.bf16.mxu0 %v1204
    %2873 = vmatpush1.bf16.msra.mxu0 %v1203
    %2874 = vmatprep.subr.bf16.mxu0 %v1212
    %2875 = vmatpush1.bf16.msra.mxu0 %v1211
    %2876 = vmatprep.subr.bf16.mxu0 %v1220
    %2877 = vmatpush1.bf16.msra.mxu0 %v1219
    %2878 = vmatprep.subr.bf16.mxu0 %v1228
    %2879 = vmatpush1.bf16.msra.mxu0 %v1227
    %2880 = vmatprep.mubr.bf16.mxu0 %v196
    %2881 = vmatmul.mubr.bf16.gmra.mrb[0].mxu0 %v195
    %v2882 = vpop.f32.mrb[0].mxu0
    %v2883 = vadd.f32 %v2842, %v2882
    %v2884 = vpop.f32.mrb[0].mxu0
    %v2885 = vadd.f32 %v2844, %v2884
    %v2886 = vpop.f32.mrb[0].mxu0
    %v2887 = vpop.f32.mrb[0].mxu0
    %2888 = vdwg.mxu0
    %2889 = vmatprep.subr.bf16.mxu0 %v1236
    %2890 = vmatpush1.bf16.msra.mxu0 %v1235
    %2891 = vmatprep.subr.bf16.mxu0 %v1244
    %2892 = vmatpush1.bf16.msra.mxu0 %v1243
    %2893 = vmatprep.subr.bf16.mxu0 %v1252
    %2894 = vmatpush1.bf16.msra.mxu0 %v1251
    %2895 = vmatprep.subr.bf16.mxu0 %v1260
    %2896 = vmatpush1.bf16.msra.mxu0 %v1259
    %2897 = vmatprep.subr.bf16.mxu0 %v1268
    %2898 = vmatpush1.bf16.msra.mxu0 %v1267
    %2899 = vmatprep.subr.bf16.mxu0 %v1276
    %2900 = vmatpush1.bf16.msra.mxu0 %v1275
    %2901 = vmatprep.subr.bf16.mxu0 %v1284
    %2902 = vmatpush1.bf16.msra.mxu0 %v1283
    %2903 = vmatprep.subr.bf16.mxu0 %v1292
    %2904 = vmatpush1.bf16.msra.mxu0 %v1291
    %2905 = vmatprep.subr.bf16.mxu0 %v1300
    %2906 = vmatpush1.bf16.msra.mxu0 %v1299
    %2907 = vmatprep.subr.bf16.mxu0 %v1308
    %2908 = vmatpush1.bf16.msra.mxu0 %v1307
    %2909 = vmatprep.subr.bf16.mxu0 %v1316
    %2910 = vmatpush1.bf16.msra.mxu0 %v1315
    %2911 = vmatprep.subr.bf16.mxu0 %v1324
    %2912 = vmatpush1.bf16.msra.mxu0 %v1323
    %2913 = vmatprep.subr.bf16.mxu0 %v1332
    %2914 = vmatpush1.bf16.msra.mxu0 %v1331
    %2915 = vmatprep.subr.bf16.mxu0 %v1340
    %2916 = vmatpush1.bf16.msra.mxu0 %v1339
    %2917 = vmatprep.subr.bf16.mxu0 %v1348
    %2918 = vmatpush1.bf16.msra.mxu0 %v1347
    %2919 = vmatprep.subr.bf16.mxu0 %v1356
    %2920 = vmatpush1.bf16.msra.mxu0 %v1355
    %2921 = vmatprep.mubr.bf16.mxu0 %v198
    %2922 = vmatmul.mubr.bf16.gmra.mrb[0].mxu0 %v197
    %v2923 = vpop.f32.mrb[0].mxu0
    %v2924 = vadd.f32 %v2883, %v2923
    %v2925 = vpop.f32.mrb[0].mxu0
    %v2926 = vadd.f32 %v2885, %v2925
    %v2927 = vpop.f32.mrb[0].mxu0
    %v2928 = vpop.f32.mrb[0].mxu0
    %2929 = vdwg.mxu0
    %2930 = vmatprep.subr.bf16.mxu0 %v1364
    %2931 = vmatpush1.bf16.msra.mxu0 %v1363
    %2932 = vmatprep.subr.bf16.mxu0 %v1372
    %2933 = vmatpush1.bf16.msra.mxu0 %v1371
    %2934 = vmatprep.subr.bf16.mxu0 %v1380
    %2935 = vmatpush1.bf16.msra.mxu0 %v1379
    %2936 = vmatprep.subr.bf16.mxu0 %v1388
    %2937 = vmatpush1.bf16.msra.mxu0 %v1387
    %2938 = vmatprep.subr.bf16.mxu0 %v1396
    %2939 = vmatpush1.bf16.msra.mxu0 %v1395
    %2940 = vmatprep.subr.bf16.mxu0 %v1404
    %2941 = vmatpush1.bf16.msra.mxu0 %v1403
    %2942 = vmatprep.subr.bf16.mxu0 %v1412
    %2943 = vmatpush1.bf16.msra.mxu0 %v1411
    %2944 = vmatprep.subr.bf16.mxu0 %v1420
    %2945 = vmatpush1.bf16.msra.mxu0 %v1419
    %2946 = vmatprep.subr.bf16.mxu0 %v1428
    %2947 = vmatpush1.bf16.msra.mxu0 %v1427
    %2948 = vmatprep.subr.bf16.mxu0 %v1436
    %2949 = vmatpush1.bf16.msra.mxu0 %v1435
    %2950 = vmatprep.subr.bf16.mxu0 %v1444
    %2951 = vmatpush1.bf16.msra.mxu0 %v1443
    %2952 = vmatprep.subr.bf16.mxu0 %v1452
    %2953 = vmatpush1.bf16.msra.mxu0 %v1451
    %2954 = vmatprep.subr.bf16.mxu0 %v1460
    %2955 = vmatpush1.bf16.msra.mxu0 %v1459
    %2956 = vmatprep.subr.bf16.mxu0 %v1468
    %2957 = vmatpush1.bf16.msra.mxu0 %v1467
    %2958 = vmatprep.subr.bf16.mxu0 %v1476
    %2959 = vmatpush1.bf16.msra.mxu0 %v1475
    %2960 = vmatprep.subr.bf16.mxu0 %v1484
    %2961 = vmatpush1.bf16.msra.mxu0 %v1483
    %2962 = vmatprep.mubr.bf16.mxu0 %v200
    %2963 = vmatmul.mubr.bf16.gmra.mrb[0].mxu0 %v199
    %v2964 = vpop.f32.mrb[0].mxu0
    %v2965 = vadd.f32 %v2924, %v2964
    %v2966 = vpop.f32.mrb[0].mxu0
    %v2967 = vadd.f32 %v2926, %v2966
    %v2968 = vpop.f32.mrb[0].mxu0
    %v2969 = vpop.f32.mrb[0].mxu0
    %2970 = vdwg.mxu0
    %2971 = vmatprep.subr.bf16.mxu0 %v1492
    %2972 = vmatpush1.bf16.msra.mxu0 %v1491
    %2973 = vmatprep.subr.bf16.mxu0 %v1500
    %2974 = vmatpush1.bf16.msra.mxu0 %v1499
    %2975 = vmatprep.subr.bf16.mxu0 %v1508
    %2976 = vmatpush1.bf16.msra.mxu0 %v1507
    %2977 = vmatprep.subr.bf16.mxu0 %v1516
    %2978 = vmatpush1.bf16.msra.mxu0 %v1515
    %2979 = vmatprep.subr.bf16.mxu0 %v1524
    %2980 = vmatpush1.bf16.msra.mxu0 %v1523
    %2981 = vmatprep.subr.bf16.mxu0 %v1532
    %2982 = vmatpush1.bf16.msra.mxu0 %v1531
    %2983 = vmatprep.subr.bf16.mxu0 %v1540
    %2984 = vmatpush1.bf16.msra.mxu0 %v1539
    %2985 = vmatprep.subr.bf16.mxu0 %v1548
    %2986 = vmatpush1.bf16.msra.mxu0 %v1547
    %2987 = vmatprep.subr.bf16.mxu0 %v1556
    %2988 = vmatpush1.bf16.msra.mxu0 %v1555
    %2989 = vmatprep.subr.bf16.mxu0 %v1564
    %2990 = vmatpush1.bf16.msra.mxu0 %v1563
    %2991 = vmatprep.subr.bf16.mxu0 %v1572
    %2992 = vmatpush1.bf16.msra.mxu0 %v1571
    %2993 = vmatprep.subr.bf16.mxu0 %v1580
    %2994 = vmatpush1.bf16.msra.mxu0 %v1579
    %2995 = vmatprep.subr.bf16.mxu0 %v1588
    %2996 = vmatpush1.bf16.msra.mxu0 %v1587
    %2997 = vmatprep.subr.bf16.mxu0 %v1596
    %2998 = vmatpush1.bf16.msra.mxu0 %v1595
    %2999 = vmatprep.subr.bf16.mxu0 %v1604
    %3000 = vmatpush1.bf16.msra.mxu0 %v1603
    %3001 = vmatprep.subr.bf16.mxu0 %v1612
    %3002 = vmatpush1.bf16.msra.mxu0 %v1611
    %3003 = vmatprep.mubr.bf16.mxu0 %v202
    %3004 = vmatmul.mubr.bf16.gmra.mrb[0].mxu0 %v201
    %v3005 = vpop.f32.mrb[0].mxu0
    %v3006 = vadd.f32 %v2965, %v3005
    %v3007 = vpop.f32.mrb[0].mxu0
    %v3008 = vadd.f32 %v2967, %v3007
    %v3009 = vpop.f32.mrb[0].mxu0
    %v3010 = vpop.f32.mrb[0].mxu0
    %3011 = vdwg.mxu0
    %3012 = vmatprep.subr.bf16.mxu0 %v1620
    %3013 = vmatpush1.bf16.msra.mxu0 %v1619
    %3014 = vmatprep.subr.bf16.mxu0 %v1628
    %3015 = vmatpush1.bf16.msra.mxu0 %v1627
    %3016 = vmatprep.subr.bf16.mxu0 %v1636
    %3017 = vmatpush1.bf16.msra.mxu0 %v1635
    %3018 = vmatprep.subr.bf16.mxu0 %v1644
    %3019 = vmatpush1.bf16.msra.mxu0 %v1643
    %3020 = vmatprep.subr.bf16.mxu0 %v1652
    %3021 = vmatpush1.bf16.msra.mxu0 %v1651
    %3022 = vmatprep.subr.bf16.mxu0 %v1660
    %3023 = vmatpush1.bf16.msra.mxu0 %v1659
    %3024 = vmatprep.subr.bf16.mxu0 %v1668
    %3025 = vmatpush1.bf16.msra.mxu0 %v1667
    %3026 = vmatprep.subr.bf16.mxu0 %v1676
    %3027 = vmatpush1.bf16.msra.mxu0 %v1675
    %3028 = vmatprep.subr.bf16.mxu0 %v1684
    %3029 = vmatpush1.bf16.msra.mxu0 %v1683
    %3030 = vmatprep.subr.bf16.mxu0 %v1692
    %3031 = vmatpush1.bf16.msra.mxu0 %v1691
    %3032 = vmatprep.subr.bf16.mxu0 %v1700
    %3033 = vmatpush1.bf16.msra.mxu0 %v1699
    %3034 = vmatprep.subr.bf16.mxu0 %v1708
    %3035 = vmatpush1.bf16.msra.mxu0 %v1707
    %3036 = vmatprep.subr.bf16.mxu0 %v1716
    %3037 = vmatpush1.bf16.msra.mxu0 %v1715
    %3038 = vmatprep.subr.bf16.mxu0 %v1724
    %3039 = vmatpush1.bf16.msra.mxu0 %v1723
    %3040 = vmatprep.subr.bf16.mxu0 %v1732
    %3041 = vmatpush1.bf16.msra.mxu0 %v1731
    %3042 = vmatprep.subr.bf16.mxu0 %v1740
    %3043 = vmatpush1.bf16.msra.mxu0 %v1739
    %3044 = vmatprep.mubr.bf16.mxu0 %v204
    %3045 = vmatmul.mubr.bf16.gmra.mrb[0].mxu0 %v203
    %v3046 = vpop.f32.mrb[0].mxu0
    %v3047 = vadd.f32 %v3006, %v3046
    %v3048 = vpop.f32.mrb[0].mxu0
    %v3049 = vadd.f32 %v3008, %v3048
    %v3050 = vpop.f32.mrb[0].mxu0
    %v3051 = vpop.f32.mrb[0].mxu0
    %3052 = vdwg.mxu0
    %v3053 = vld [vmem:[#allocation7] sm:$0xff]
    %v3055 = vlaneseq
    %v3056 = vshrl.u32 %v3055, 7
    %v3057 = vsub.s32 0, %v3056
    %v3058 = vrot.slane %v3053, %v3057
    %v3059 = vlaneseq
    %v3060 = vshrl.u32 %v3059, 7
    %v3061 = vsub.s32 1, %v3060
    %v3062 = vrot.slane %v3053, %v3061
    %v3063 = vlaneseq
    %v3064 = vshrl.u32 %v3063, 7
    %v3065 = vsub.s32 2, %v3064
    %v3066 = vrot.slane %v3053, %v3065
    %v3067 = vlaneseq
    %v3068 = vshrl.u32 %v3067, 7
    %v3069 = vsub.s32 3, %v3068
    %v3070 = vrot.slane %v3053, %v3069
    %v3071 = vlaneseq
    %v3072 = vshrl.u32 %v3071, 7
    %v3073 = vsub.s32 4, %v3072
    %v3074 = vrot.slane %v3053, %v3073
    %v3075 = vlaneseq
    %v3076 = vshrl.u32 %v3075, 7
    %v3077 = vsub.s32 5, %v3076
    %v3078 = vrot.slane %v3053, %v3077
    %v3079 = vlaneseq
    %v3080 = vshrl.u32 %v3079, 7
    %v3081 = vsub.s32 6, %v3080
    %v3082 = vrot.slane %v3053, %v3081
    %v3083 = vlaneseq
    %v3084 = vshrl.u32 %v3083, 7
    %v3085 = vsub.s32 7, %v3084
    %v3086 = vrot.slane %v3053, %v3085
    %v3095 = vmul.f32 %v2063, %v3058
    %v3096 = vmul.f32 %v2065, %v3062
    %v3097 = vmul.f32 %v2391, %v3066
    %v3098 = vmul.f32 %v2393, %v3070
    %v3099 = vmul.f32 %v2719, %v3074
    %v3100 = vmul.f32 %v2721, %v3078
    %v3101 = vmul.f32 %v3047, %v3082
    %v3102 = vmul.f32 %v3049, %v3086
    %v3103 = vrot.slane %v3095, 4
    %v3104 = vadd.f32 %v3095, %v3103
    %v3105 = vrot.slane %v3104, 2
    %v3106 = vadd.f32 %v3104, %v3105
    %v3107 = vrot.slane %v3106, 1
    %v3108 = vadd.f32 %v3106, %v3107
    %v3109 = vrot.slane %v3096, 4
    %v3110 = vadd.f32 %v3096, %v3109
    %v3111 = vrot.slane %v3110, 2
    %v3112 = vadd.f32 %v3110, %v3111
    %v3113 = vrot.slane %v3112, 1
    %v3114 = vadd.f32 %v3112, %v3113
    %v3115 = vrot.slane %v3097, 4
    %v3116 = vadd.f32 %v3097, %v3115
    %v3117 = vrot.slane %v3116, 2
    %v3118 = vadd.f32 %v3116, %v3117
    %v3119 = vrot.slane %v3118, 1
    %v3120 = vadd.f32 %v3118, %v3119
    %v3121 = vrot.slane %v3098, 4
    %v3122 = vadd.f32 %v3098, %v3121
    %v3123 = vrot.slane %v3122, 2
    %v3124 = vadd.f32 %v3122, %v3123
    %v3125 = vrot.slane %v3124, 1
    %v3126 = vadd.f32 %v3124, %v3125
    %v3127 = vrot.slane %v3099, 4
    %v3128 = vadd.f32 %v3099, %v3127
    %v3129 = vrot.slane %v3128, 2
    %v3130 = vadd.f32 %v3128, %v3129
    %v3131 = vrot.slane %v3130, 1
    %v3132 = vadd.f32 %v3130, %v3131
    %v3133 = vrot.slane %v3100, 4
    %v3134 = vadd.f32 %v3100, %v3133
    %v3135 = vrot.slane %v3134, 2
    %v3136 = vadd.f32 %v3134, %v3135
    %v3137 = vrot.slane %v3136, 1
    %v3138 = vadd.f32 %v3136, %v3137
    %v3139 = vrot.slane %v3101, 4
    %v3140 = vadd.f32 %v3101, %v3139
    %v3141 = vrot.slane %v3140, 2
    %v3142 = vadd.f32 %v3140, %v3141
    %v3143 = vrot.slane %v3142, 1
    %v3144 = vadd.f32 %v3142, %v3143
    %v3145 = vrot.slane %v3102, 4
    %v3146 = vadd.f32 %v3102, %v3145
    %v3147 = vrot.slane %v3146, 2
    %v3148 = vadd.f32 %v3146, %v3147
    %v3149 = vrot.slane %v3148, 1
    %v3150 = vadd.f32 %v3148, %v3149
    %v3151 = vrcp.pop 8.0
    %v3152 = vmul.f32 %v3108, %v3151
    %v3153 = vmul.f32 %v3114, %v3151
    %v3154 = vmul.f32 %v3120, %v3151
    %v3155 = vmul.f32 %v3126, %v3151
    %v3156 = vmul.f32 %v3132, %v3151
    %v3157 = vmul.f32 %v3138, %v3151
    %v3158 = vmul.f32 %v3144, %v3151
    %v3159 = vmul.f32 %v3150, %v3151
    %v3160 = vsub.f32 %v3095, %v3152
    %v3161 = vsub.f32 %v3096, %v3153
    %v3162 = vsub.f32 %v3097, %v3154
    %v3163 = vsub.f32 %v3098, %v3155
    %v3164 = vsub.f32 %v3099, %v3156
    %v3165 = vsub.f32 %v3100, %v3157
    %v3166 = vsub.f32 %v3101, %v3158
    %v3167 = vsub.f32 %v3102, %v3159
    %v3168 = vmul.f32 %v3160, %v3160
    %v3169 = vmul.f32 %v3161, %v3161
    %v3170 = vmul.f32 %v3162, %v3162
    %v3171 = vmul.f32 %v3163, %v3163
    %v3172 = vmul.f32 %v3164, %v3164
    %v3173 = vmul.f32 %v3165, %v3165
    %v3174 = vmul.f32 %v3166, %v3166
    %v3175 = vmul.f32 %v3167, %v3167
    %v3176 = vrot.slane %v3168, 4
    %v3177 = vadd.f32 %v3168, %v3176
    %v3178 = vrot.slane %v3177, 2
    %v3179 = vadd.f32 %v3177, %v3178
    %v3180 = vrot.slane %v3179, 1
    %v3181 = vadd.f32 %v3179, %v3180
    %v3182 = vrot.slane %v3169, 4
    %v3183 = vadd.f32 %v3169, %v3182
    %v3184 = vrot.slane %v3183, 2
    %v3185 = vadd.f32 %v3183, %v3184
    %v3186 = vrot.slane %v3185, 1
    %v3187 = vadd.f32 %v3185, %v3186
    %v3188 = vrot.slane %v3170, 4
    %v3189 = vadd.f32 %v3170, %v3188
    %v3190 = vrot.slane %v3189, 2
    %v3191 = vadd.f32 %v3189, %v3190
    %v3192 = vrot.slane %v3191, 1
    %v3193 = vadd.f32 %v3191, %v3192
    %v3194 = vrot.slane %v3171, 4
    %v3195 = vadd.f32 %v3171, %v3194
    %v3196 = vrot.slane %v3195, 2
    %v3197 = vadd.f32 %v3195, %v3196
    %v3198 = vrot.slane %v3197, 1
    %v3199 = vadd.f32 %v3197, %v3198
    %v3200 = vrot.slane %v3172, 4
    %v3201 = vadd.f32 %v3172, %v3200
    %v3202 = vrot.slane %v3201, 2
    %v3203 = vadd.f32 %v3201, %v3202
    %v3204 = vrot.slane %v3203, 1
    %v3205 = vadd.f32 %v3203, %v3204
    %v3206 = vrot.slane %v3173, 4
    %v3207 = vadd.f32 %v3173, %v3206
    %v3208 = vrot.slane %v3207, 2
    %v3209 = vadd.f32 %v3207, %v3208
    %v3210 = vrot.slane %v3209, 1
    %v3211 = vadd.f32 %v3209, %v3210
    %v3212 = vrot.slane %v3174, 4
    %v3213 = vadd.f32 %v3174, %v3212
    %v3214 = vrot.slane %v3213, 2
    %v3215 = vadd.f32 %v3213, %v3214
    %v3216 = vrot.slane %v3215, 1
    %v3217 = vadd.f32 %v3215, %v3216
    %v3218 = vrot.slane %v3175, 4
    %v3219 = vadd.f32 %v3175, %v3218
    %v3220 = vrot.slane %v3219, 2
    %v3221 = vadd.f32 %v3219, %v3220
    %v3222 = vrot.slane %v3221, 1
    %v3223 = vadd.f32 %v3221, %v3222
    %v3224 = vmul.f32 %v3181, %v3151
    %v3225 = vmul.f32 %v3187, %v3151
    %v3226 = vmul.f32 %v3193, %v3151
    %v3227 = vmul.f32 %v3199, %v3151
    %v3228 = vmul.f32 %v3205, %v3151
    %v3229 = vmul.f32 %v3211, %v3151
    %v3230 = vmul.f32 %v3217, %v3151
    %v3231 = vmul.f32 %v3223, %v3151
    %v3232 = vld [vmem:[#allocation8] sm:$0xff]
    %v3234 = vlaneseq
    %v3235 = vshrl.u32 %v3234, 7
    %v3236 = vsub.s32 0, %v3235
    %v3237 = vrot.slane %v3232, %v3236
    %v3238 = vlaneseq
    %v3239 = vshrl.u32 %v3238, 7
    %v3240 = vsub.s32 1, %v3239
    %v3241 = vrot.slane %v3232, %v3240
    %v3242 = vlaneseq
    %v3243 = vshrl.u32 %v3242, 7
    %v3244 = vsub.s32 2, %v3243
    %v3245 = vrot.slane %v3232, %v3244
    %v3246 = vlaneseq
    %v3247 = vshrl.u32 %v3246, 7
    %v3248 = vsub.s32 3, %v3247
    %v3249 = vrot.slane %v3232, %v3248
    %v3250 = vlaneseq
    %v3251 = vshrl.u32 %v3250, 7
    %v3252 = vsub.s32 4, %v3251
    %v3253 = vrot.slane %v3232, %v3252
    %v3254 = vlaneseq
    %v3255 = vshrl.u32 %v3254, 7
    %v3256 = vsub.s32 5, %v3255
    %v3257 = vrot.slane %v3232, %v3256
    %v3258 = vlaneseq
    %v3259 = vshrl.u32 %v3258, 7
    %v3260 = vsub.s32 6, %v3259
    %v3261 = vrot.slane %v3232, %v3260
    %v3262 = vlaneseq
    %v3263 = vshrl.u32 %v3262, 7
    %v3264 = vsub.s32 7, %v3263
    %v3265 = vrot.slane %v3232, %v3264
    %v3274 = vmul.f32 %v3237, %v3160
    %v3275 = vmul.f32 %v3241, %v3161
    %v3276 = vmul.f32 %v3245, %v3162
    %v3277 = vmul.f32 %v3249, %v3163
    %v3278 = vmul.f32 %v3253, %v3164
    %v3279 = vmul.f32 %v3257, %v3165
    %v3280 = vmul.f32 %v3261, %v3166
    %v3281 = vmul.f32 %v3265, %v3167
    %v3282 = vadd.f32 %v3224, 1e-05
    %v3283 = vadd.f32 %v3225, 1e-05
    %v3284 = vadd.f32 %v3226, 1e-05
    %v3285 = vadd.f32 %v3227, 1e-05
    %v3286 = vadd.f32 %v3228, 1e-05
    %v3287 = vadd.f32 %v3229, 1e-05
    %v3288 = vadd.f32 %v3230, 1e-05
    %v3289 = vadd.f32 %v3231, 1e-05
    %v3290 = vrsqrt.pop %v3282
    %v3291 = vrsqrt.pop %v3283
    %v3292 = vrsqrt.pop %v3284
    %v3293 = vrsqrt.pop %v3285
    %v3294 = vrsqrt.pop %v3286
    %v3295 = vrsqrt.pop %v3287
    %v3296 = vrsqrt.pop %v3288
    %v3297 = vrsqrt.pop %v3289
    %v3298 = vmul.f32 %v3274, %v3290
    %v3299 = vmul.f32 %v3275, %v3291
    %v3300 = vmul.f32 %v3276, %v3292
    %v3301 = vmul.f32 %v3277, %v3293
    %v3302 = vmul.f32 %v3278, %v3294
    %v3303 = vmul.f32 %v3279, %v3295
    %v3304 = vmul.f32 %v3280, %v3296
    %v3305 = vmul.f32 %v3281, %v3297
    %v3306 = vld [vmem:[#allocation10] sm:$0xff]
    %v3308 = vlaneseq
    %v3309 = vshrl.u32 %v3308, 7
    %v3310 = vsub.s32 0, %v3309
    %v3311 = vrot.slane %v3306, %v3310
    %v3312 = vlaneseq
    %v3313 = vshrl.u32 %v3312, 7
    %v3314 = vsub.s32 1, %v3313
    %v3315 = vrot.slane %v3306, %v3314
    %v3316 = vlaneseq
    %v3317 = vshrl.u32 %v3316, 7
    %v3318 = vsub.s32 2, %v3317
    %v3319 = vrot.slane %v3306, %v3318
    %v3320 = vlaneseq
    %v3321 = vshrl.u32 %v3320, 7
    %v3322 = vsub.s32 3, %v3321
    %v3323 = vrot.slane %v3306, %v3322
    %v3324 = vlaneseq
    %v3325 = vshrl.u32 %v3324, 7
    %v3326 = vsub.s32 4, %v3325
    %v3327 = vrot.slane %v3306, %v3326
    %v3328 = vlaneseq
    %v3329 = vshrl.u32 %v3328, 7
    %v3330 = vsub.s32 5, %v3329
    %v3331 = vrot.slane %v3306, %v3330
    %v3332 = vlaneseq
    %v3333 = vshrl.u32 %v3332, 7
    %v3334 = vsub.s32 6, %v3333
    %v3335 = vrot.slane %v3306, %v3334
    %v3336 = vlaneseq
    %v3337 = vshrl.u32 %v3336, 7
    %v3338 = vsub.s32 7, %v3337
    %v3339 = vrot.slane %v3306, %v3338
    %v3348 = vadd.f32 %v3298, %v3311
    %v3349 = vadd.f32 %v3299, %v3315
    %v3350 = vadd.f32 %v3300, %v3319
    %v3351 = vadd.f32 %v3301, %v3323
    %v3352 = vadd.f32 %v3302, %v3327
    %v3353 = vadd.f32 %v3303, %v3331
    %v3354 = vadd.f32 %v3304, %v3335
    %v3355 = vadd.f32 %v3305, %v3339
    %v3356 = vmax.f32 %v3348, 0.0
    %v3357 = vmax.f32 %v3349, 0.0
    %v3358 = vmax.f32 %v3350, 0.0
    %v3359 = vmax.f32 %v3351, 0.0
    %v3360 = vmax.f32 %v3352, 0.0
    %v3361 = vmax.f32 %v3353, 0.0
    %v3362 = vmax.f32 %v3354, 0.0
    %v3363 = vmax.f32 %v3355, 0.0
    %v3364 = vpack.c.bf16 %v3356, %v3356
    %v3365 = vpack.c.bf16 %v3357, %v3357
    %v3366 = vpack.c.bf16 %v3358, %v3358
    %v3367 = vpack.c.bf16 %v3359, %v3359
    %v3368 = vpack.c.bf16 %v3360, %v3360
    %v3369 = vpack.c.bf16 %v3361, %v3361
    %v3370 = vpack.c.bf16 %v3362, %v3362
    %v3371 = vpack.c.bf16 %v3363, %v3363
    %v3372 = vld [vmem:[#allocation11] sm:$0xff]
    %v3373 = vld [vmem:[#allocation11 + $0x8] sm:$0xff]
    %v3374 = vld [vmem:[#allocation11 + $0x10] sm:$0xff]
    %v3375 = vld [vmem:[#allocation11 + $0x18] sm:$0xff]
    %v3376 = vld [vmem:[#allocation11 + $0x20] sm:$0xff]
    %v3377 = vld [vmem:[#allocation11 + $0x28] sm:$0xff]
    %v3378 = vld [vmem:[#allocation11 + $0x30] sm:$0xff]
    %v3379 = vld [vmem:[#allocation11 + $0x38] sm:$0xff]
    %v3380 = vld [vmem:[#allocation11 + $0x40] sm:$0xff]
    %v3381 = vld [vmem:[#allocation11 + $0x48] sm:$0xff]
    %v3382 = vld [vmem:[#allocation11 + $0x50] sm:$0xff]
    %v3383 = vld [vmem:[#allocation11 + $0x58] sm:$0xff]
    %v3384 = vld [vmem:[#allocation11 + $0x60] sm:$0xff]
    %v3385 = vld [vmem:[#allocation11 + $0x68] sm:$0xff]
    %v3386 = vld [vmem:[#allocation11 + $0x70] sm:$0xff]
    %v3387 = vld [vmem:[#allocation11 + $0x78] sm:$0xff]
    %v3388 = vld [vmem:[#allocation11 + $0x80] sm:$0xff]
    %v3389 = vld [vmem:[#allocation11 + $0x88] sm:$0xff]
    %v3390 = vld [vmem:[#allocation11 + $0x90] sm:$0xff]
    %v3391 = vld [vmem:[#allocation11 + $0x98] sm:$0xff]
    %v3392 = vld [vmem:[#allocation11 + $0xa0] sm:$0xff]
    %v3393 = vld [vmem:[#allocation11 + $0xa8] sm:$0xff]
    %v3394 = vld [vmem:[#allocation11 + $0xb0] sm:$0xff]
    %v3395 = vld [vmem:[#allocation11 + $0xb8] sm:$0xff]
    %v3396 = vld [vmem:[#allocation11 + $0xc0] sm:$0xff]
    %v3397 = vld [vmem:[#allocation11 + $0xc8] sm:$0xff]
    %v3398 = vld [vmem:[#allocation11 + $0xd0] sm:$0xff]
    %v3399 = vld [vmem:[#allocation11 + $0xd8] sm:$0xff]
    %v3400 = vld [vmem:[#allocation11 + $0xe0] sm:$0xff]
    %v3401 = vld [vmem:[#allocation11 + $0xe8] sm:$0xff]
    %v3402 = vld [vmem:[#allocation11 + $0xf0] sm:$0xff]
    %v3403 = vld [vmem:[#allocation11 + $0xf8] sm:$0xff]
    %v3404 = vunpack.c.l.s8.bf16 %v3372
    %v3405 = vunpack.c.h.s8.bf16 %v3372
    %v3406 = vunpack.c.l.s8.bf16 %v3373
    %v3407 = vunpack.c.h.s8.bf16 %v3373
    %v3408 = vunpack.c.l.s8.bf16 %v3374
    %v3409 = vunpack.c.h.s8.bf16 %v3374
    %v3410 = vunpack.c.l.s8.bf16 %v3375
    %v3411 = vunpack.c.h.s8.bf16 %v3375
    %v3412 = vunpack.c.l.s8.bf16 %v3376
    %v3413 = vunpack.c.h.s8.bf16 %v3376
    %v3414 = vunpack.c.l.s8.bf16 %v3377
    %v3415 = vunpack.c.h.s8.bf16 %v3377
    %v3416 = vunpack.c.l.s8.bf16 %v3378
    %v3417 = vunpack.c.h.s8.bf16 %v3378
    %v3418 = vunpack.c.l.s8.bf16 %v3379
    %v3419 = vunpack.c.h.s8.bf16 %v3379
    %v3420 = vunpack.c.l.s8.bf16 %v3380
    %v3421 = vunpack.c.h.s8.bf16 %v3380
    %v3422 = vunpack.c.l.s8.bf16 %v3381
    %v3423 = vunpack.c.h.s8.bf16 %v3381
    %v3424 = vunpack.c.l.s8.bf16 %v3382
    %v3425 = vunpack.c.h.s8.bf16 %v3382
    %v3426 = vunpack.c.l.s8.bf16 %v3383
    %v3427 = vunpack.c.h.s8.bf16 %v3383
    %v3428 = vunpack.c.l.s8.bf16 %v3384
    %v3429 = vunpack.c.h.s8.bf16 %v3384
    %v3430 = vunpack.c.l.s8.bf16 %v3385
    %v3431 = vunpack.c.h.s8.bf16 %v3385
    %v3432 = vunpack.c.l.s8.bf16 %v3386
    %v3433 = vunpack.c.h.s8.bf16 %v3386
    %v3434 = vunpack.c.l.s8.bf16 %v3387
    %v3435 = vunpack.c.h.s8.bf16 %v3387
    %v3436 = vunpack.c.l.s8.bf16 %v3388
    %v3437 = vunpack.c.h.s8.bf16 %v3388
    %v3438 = vunpack.c.l.s8.bf16 %v3389
    %v3439 = vunpack.c.h.s8.bf16 %v3389
    %v3440 = vunpack.c.l.s8.bf16 %v3390
    %v3441 = vunpack.c.h.s8.bf16 %v3390
    %v3442 = vunpack.c.l.s8.bf16 %v3391
    %v3443 = vunpack.c.h.s8.bf16 %v3391
    %v3444 = vunpack.c.l.s8.bf16 %v3392
    %v3445 = vunpack.c.h.s8.bf16 %v3392
    %v3446 = vunpack.c.l.s8.bf16 %v3393
    %v3447 = vunpack.c.h.s8.bf16 %v3393
    %v3448 = vunpack.c.l.s8.bf16 %v3394
    %v3449 = vunpack.c.h.s8.bf16 %v3394
    %v3450 = vunpack.c.l.s8.bf16 %v3395
    %v3451 = vunpack.c.h.s8.bf16 %v3395
    %v3452 = vunpack.c.l.s8.bf16 %v3396
    %v3453 = vunpack.c.h.s8.bf16 %v3396
    %v3454 = vunpack.c.l.s8.bf16 %v3397
    %v3455 = vunpack.c.h.s8.bf16 %v3397
    %v3456 = vunpack.c.l.s8.bf16 %v3398
    %v3457 = vunpack.c.h.s8.bf16 %v3398
    %v3458 = vunpack.c.l.s8.bf16 %v3399
    %v3459 = vunpack.c.h.s8.bf16 %v3399
    %v3460 = vunpack.c.l.s8.bf16 %v3400
    %v3461 = vunpack.c.h.s8.bf16 %v3400
    %v3462 = vunpack.c.l.s8.bf16 %v3401
    %v3463 = vunpack.c.h.s8.bf16 %v3401
    %v3464 = vunpack.c.l.s8.bf16 %v3402
    %v3465 = vunpack.c.h.s8.bf16 %v3402
    %v3466 = vunpack.c.l.s8.bf16 %v3403
    %v3467 = vunpack.c.h.s8.bf16 %v3403
    %3468 = vmatprep.subr.bf16.mxu0 0
    %3469 = vmatpush1.bf16.msra.mxu0 %v3404
    %3470 = vmatprep.subr.bf16.mxu0 0
    %3471 = vmatpush1.bf16.msra.mxu0 %v3405
    %3472 = vmatprep.subr.bf16.mxu0 0
    %3473 = vmatpush1.bf16.msra.mxu0 %v3406
    %3474 = vmatprep.subr.bf16.mxu0 0
    %3475 = vmatpush1.bf16.msra.mxu0 %v3407
    %3476 = vmatprep.subr.bf16.mxu0 0
    %3477 = vmatpush1.bf16.msra.mxu0 %v3408
    %3478 = vmatprep.subr.bf16.mxu0 0
    %3479 = vmatpush1.bf16.msra.mxu0 %v3409
    %3480 = vmatprep.subr.bf16.mxu0 0
    %3481 = vmatpush1.bf16.msra.mxu0 %v3410
    %3482 = vmatprep.subr.bf16.mxu0 0
    %3483 = vmatpush1.bf16.msra.mxu0 %v3411
    %3484 = vmatprep.subr.bf16.mxu0 0
    %3485 = vmatpush1.bf16.msra.mxu0 %v3412
    %3486 = vmatprep.subr.bf16.mxu0 0
    %3487 = vmatpush1.bf16.msra.mxu0 %v3413
    %3488 = vmatprep.subr.bf16.mxu0 0
    %3489 = vmatpush1.bf16.msra.mxu0 %v3414
    %3490 = vmatprep.subr.bf16.mxu0 0
    %3491 = vmatpush1.bf16.msra.mxu0 %v3415
    %3492 = vmatprep.subr.bf16.mxu0 0
    %3493 = vmatpush1.bf16.msra.mxu0 %v3416
    %3494 = vmatprep.subr.bf16.mxu0 0
    %3495 = vmatpush1.bf16.msra.mxu0 %v3417
    %3496 = vmatprep.subr.bf16.mxu0 0
    %3497 = vmatpush1.bf16.msra.mxu0 %v3418
    %3498 = vmatprep.subr.bf16.mxu0 0
    %3499 = vmatpush1.bf16.msra.mxu0 %v3419
    %3500 = vmatprep.mubr.bf16.mxu0 %v3365
    %3501 = vmatmul.mubr.bf16.gmra.mrb[0].mxu0 %v3364
    %v3502 = vpop.f32.mrb[0].mxu0
    %v3503 = vadd.f32 0.0, %v3502
    %v3504 = vpop.f32.mrb[0].mxu0
    %v3505 = vpop.f32.mrb[0].mxu0
    %v3506 = vpop.f32.mrb[0].mxu0
    %3507 = vdwg.mxu0
    %3508 = vmatprep.subr.bf16.mxu0 0
    %3509 = vmatpush1.bf16.msra.mxu0 %v3420
    %3510 = vmatprep.subr.bf16.mxu0 0
    %3511 = vmatpush1.bf16.msra.mxu0 %v3421
    %3512 = vmatprep.subr.bf16.mxu0 0
    %3513 = vmatpush1.bf16.msra.mxu0 %v3422
    %3514 = vmatprep.subr.bf16.mxu0 0
    %3515 = vmatpush1.bf16.msra.mxu0 %v3423
    %3516 = vmatprep.subr.bf16.mxu0 0
    %3517 = vmatpush1.bf16.msra.mxu0 %v3424
    %3518 = vmatprep.subr.bf16.mxu0 0
    %3519 = vmatpush1.bf16.msra.mxu0 %v3425
    %3520 = vmatprep.subr.bf16.mxu0 0
    %3521 = vmatpush1.bf16.msra.mxu0 %v3426
    %3522 = vmatprep.subr.bf16.mxu0 0
    %3523 = vmatpush1.bf16.msra.mxu0 %v3427
    %3524 = vmatprep.subr.bf16.mxu0 0
    %3525 = vmatpush1.bf16.msra.mxu0 %v3428
    %3526 = vmatprep.subr.bf16.mxu0 0
    %3527 = vmatpush1.bf16.msra.mxu0 %v3429
    %3528 = vmatprep.subr.bf16.mxu0 0
    %3529 = vmatpush1.bf16.msra.mxu0 %v3430
    %3530 = vmatprep.subr.bf16.mxu0 0
    %3531 = vmatpush1.bf16.msra.mxu0 %v3431
    %3532 = vmatprep.subr.bf16.mxu0 0
    %3533 = vmatpush1.bf16.msra.mxu0 %v3432
    %3534 = vmatprep.subr.bf16.mxu0 0
    %3535 = vmatpush1.bf16.msra.mxu0 %v3433
    %3536 = vmatprep.subr.bf16.mxu0 0
    %3537 = vmatpush1.bf16.msra.mxu0 %v3434
    %3538 = vmatprep.subr.bf16.mxu0 0
    %3539 = vmatpush1.bf16.msra.mxu0 %v3435
    %3540 = vmatprep.mubr.bf16.mxu0 %v3367
    %3541 = vmatmul.mubr.bf16.gmra.mrb[0].mxu0 %v3366
    %v3542 = vpop.f32.mrb[0].mxu0
    %v3543 = vadd.f32 %v3503, %v3542
    %v3544 = vpop.f32.mrb[0].mxu0
    %v3545 = vpop.f32.mrb[0].mxu0
    %v3546 = vpop.f32.mrb[0].mxu0
    %3547 = vdwg.mxu0
    %3548 = vmatprep.subr.bf16.mxu0 0
    %3549 = vmatpush1.bf16.msra.mxu0 %v3436
    %3550 = vmatprep.subr.bf16.mxu0 0
    %3551 = vmatpush1.bf16.msra.mxu0 %v3437
    %3552 = vmatprep.subr.bf16.mxu0 0
    %3553 = vmatpush1.bf16.msra.mxu0 %v3438
    %3554 = vmatprep.subr.bf16.mxu0 0
    %3555 = vmatpush1.bf16.msra.mxu0 %v3439
    %3556 = vmatprep.subr.bf16.mxu0 0
    %3557 = vmatpush1.bf16.msra.mxu0 %v3440
    %3558 = vmatprep.subr.bf16.mxu0 0
    %3559 = vmatpush1.bf16.msra.mxu0 %v3441
    %3560 = vmatprep.subr.bf16.mxu0 0
    %3561 = vmatpush1.bf16.msra.mxu0 %v3442
    %3562 = vmatprep.subr.bf16.mxu0 0
    %3563 = vmatpush1.bf16.msra.mxu0 %v3443
    %3564 = vmatprep.subr.bf16.mxu0 0
    %3565 = vmatpush1.bf16.msra.mxu0 %v3444
    %3566 = vmatprep.subr.bf16.mxu0 0
    %3567 = vmatpush1.bf16.msra.mxu0 %v3445
    %3568 = vmatprep.subr.bf16.mxu0 0
    %3569 = vmatpush1.bf16.msra.mxu0 %v3446
    %3570 = vmatprep.subr.bf16.mxu0 0
    %3571 = vmatpush1.bf16.msra.mxu0 %v3447
    %3572 = vmatprep.subr.bf16.mxu0 0
    %3573 = vmatpush1.bf16.msra.mxu0 %v3448
    %3574 = vmatprep.subr.bf16.mxu0 0
    %3575 = vmatpush1.bf16.msra.mxu0 %v3449
    %3576 = vmatprep.subr.bf16.mxu0 0
    %3577 = vmatpush1.bf16.msra.mxu0 %v3450
    %3578 = vmatprep.subr.bf16.mxu0 0
    %3579 = vmatpush1.bf16.msra.mxu0 %v3451
    %3580 = vmatprep.mubr.bf16.mxu0 %v3369
    %3581 = vmatmul.mubr.bf16.gmra.mrb[0].mxu0 %v3368
    %v3582 = vpop.f32.mrb[0].mxu0
    %v3583 = vadd.f32 %v3543, %v3582
    %v3584 = vpop.f32.mrb[0].mxu0
    %v3585 = vpop.f32.mrb[0].mxu0
    %v3586 = vpop.f32.mrb[0].mxu0
    %3587 = vdwg.mxu0
    %3588 = vmatprep.subr.bf16.mxu0 0
    %3589 = vmatpush1.bf16.msra.mxu0 %v3452
    %3590 = vmatprep.subr.bf16.mxu0 0
    %3591 = vmatpush1.bf16.msra.mxu0 %v3453
    %3592 = vmatprep.subr.bf16.mxu0 0
    %3593 = vmatpush1.bf16.msra.mxu0 %v3454
    %3594 = vmatprep.subr.bf16.mxu0 0
    %3595 = vmatpush1.bf16.msra.mxu0 %v3455
    %3596 = vmatprep.subr.bf16.mxu0 0
    %3597 = vmatpush1.bf16.msra.mxu0 %v3456
    %3598 = vmatprep.subr.bf16.mxu0 0
    %3599 = vmatpush1.bf16.msra.mxu0 %v3457
    %3600 = vmatprep.subr.bf16.mxu0 0
    %3601 = vmatpush1.bf16.msra.mxu0 %v3458
    %3602 = vmatprep.subr.bf16.mxu0 0
    %3603 = vmatpush1.bf16.msra.mxu0 %v3459
    %3604 = vmatprep.subr.bf16.mxu0 0
    %3605 = vmatpush1.bf16.msra.mxu0 %v3460
    %3606 = vmatprep.subr.bf16.mxu0 0
    %3607 = vmatpush1.bf16.msra.mxu0 %v3461
    %3608 = vmatprep.subr.bf16.mxu0 0
    %3609 = vmatpush1.bf16.msra.mxu0 %v3462
    %3610 = vmatprep.subr.bf16.mxu0 0
    %3611 = vmatpush1.bf16.msra.mxu0 %v3463
    %3612 = vmatprep.subr.bf16.mxu0 0
    %3613 = vmatpush1.bf16.msra.mxu0 %v3464
    %3614 = vmatprep.subr.bf16.mxu0 0
    %3615 = vmatpush1.bf16.msra.mxu0 %v3465
    %3616 = vmatprep.subr.bf16.mxu0 0
    %3617 = vmatpush1.bf16.msra.mxu0 %v3466
    %3618 = vmatprep.subr.bf16.mxu0 0
    %3619 = vmatpush1.bf16.msra.mxu0 %v3467
    %3620 = vmatprep.mubr.bf16.mxu0 %v3371
    %3621 = vmatmul.mubr.bf16.gmra.mrb[0].mxu0 %v3370
    %v3622 = vpop.f32.mrb[0].mxu0
    %v3623 = vadd.f32 %v3583, %v3622
    %v3624 = vpop.f32.mrb[0].mxu0
    %v3625 = vpop.f32.mrb[0].mxu0
    %v3626 = vpop.f32.mrb[0].mxu0
    %3627 = vdwg.mxu0
    %v3628 = vld [vmem:[#allocation13] sm:$0x1]
    %v3630 = vlaneseq
    %v3631 = vshrl.u32 %v3630, 7
    %v3632 = vsub.s32 0, %v3631
    %v3633 = vrot.slane %v3628, %v3632
    %v3635 = vmul.f32 %v3623, %v3633
    %v3636 = vrot.slane %v3635, 4
    %v3637 = vadd.f32 %v3635, %v3636
    %v3638 = vrot.slane %v3637, 2
    %v3639 = vadd.f32 %v3637, %v3638
    %v3640 = vrot.slane %v3639, 1
    %v3641 = vadd.f32 %v3639, %v3640
    %v3642 = vmul.f32 %v3641, %v3151
    %v3643 = vsub.f32 %v3635, %v3642
    %v3644 = vmul.f32 %v3643, %v3643
    %v3645 = vrot.slane %v3644, 4
    %v3646 = vadd.f32 %v3644, %v3645
    %v3647 = vrot.slane %v3646, 2
    %v3648 = vadd.f32 %v3646, %v3647
    %v3649 = vrot.slane %v3648, 1
    %v3650 = vadd.f32 %v3648, %v3649
    %v3651 = vmul.f32 %v3650, %v3151
    %v3652 = vld [vmem:[#allocation14] sm:$0x1]
    %v3654 = vlaneseq
    %v3655 = vshrl.u32 %v3654, 7
    %v3656 = vsub.s32 0, %v3655
    %v3657 = vrot.slane %v3652, %v3656
    %v3659 = vmul.f32 %v3657, %v3643
    %v3660 = vadd.f32 %v3651, 1e-05
    %v3661 = vrsqrt.pop %v3660
    %v3662 = vmul.f32 %v3659, %v3661
    %v3663 = vld [vmem:[#allocation16] sm:$0x1]
    %v3665 = vlaneseq
    %v3666 = vshrl.u32 %v3665, 7
    %v3667 = vsub.s32 0, %v3666
    %v3668 = vrot.slane %v3663, %v3667
    %v3670 = vadd.f32 %v3662, %v3668
    %v3671 = vmax.f32 %v3670, 0.0
    %v3672 = vpack.c.bf16 %v3671, %v3671
    %v3673 = vld [vmem:[#allocation17] sm:$0xf]
    %v3674 = vld [vmem:[#allocation17 + $0x4] sm:$0xf]
    %v3675 = vld [vmem:[#allocation17 + $0x8] sm:$0xf]
    %v3676 = vld [vmem:[#allocation17 + $0xc] sm:$0xf]
    %v3677 = vld [vmem:[#allocation17 + $0x10] sm:$0xf]
    %v3678 = vld [vmem:[#allocation17 + $0x14] sm:$0xf]
    %v3679 = vld [vmem:[#allocation17 + $0x18] sm:$0xf]
    %v3680 = vld [vmem:[#allocation17 + $0x1c] sm:$0xf]
    %v3681 = vld [vmem:[#allocation17 + $0x20] sm:$0xf]
    %v3682 = vld [vmem:[#allocation17 + $0x24] sm:$0xf]
    %v3683 = vld [vmem:[#allocation17 + $0x28] sm:$0xf]
    %v3684 = vld [vmem:[#allocation17 + $0x2c] sm:$0xf]
    %v3685 = vld [vmem:[#allocation17 + $0x30] sm:$0xf]
    %v3686 = vld [vmem:[#allocation17 + $0x34] sm:$0xf]
    %v3687 = vld [vmem:[#allocation17 + $0x38] sm:$0xf]
    %v3688 = vld [vmem:[#allocation17 + $0x3c] sm:$0xf]
    %v3689 = vld [vmem:[#allocation19] sm:$0x1]
    %v3691 = vlaneseq
    %v3692 = vshrl.u32 %v3691, 7
    %v3693 = vsub.s32 0, %v3692
    %v3694 = vrot.slane %v3689, %v3693
    %v3712 = vunpack.c.l.b16 %v3673
    %v3713 = vunpack.c.l.b16 %v3674
    %v3714 = vunpack.c.l.b16 %v3675
    %v3715 = vunpack.c.l.b16 %v3676
    %v3716 = vunpack.c.l.b16 %v3677
    %v3717 = vunpack.c.l.b16 %v3678
    %v3718 = vunpack.c.l.b16 %v3679
    %v3719 = vunpack.c.l.b16 %v3680
    %v3720 = vunpack.c.l.b16 %v3681
    %v3721 = vunpack.c.l.b16 %v3682
    %v3722 = vunpack.c.l.b16 %v3683
    %v3723 = vunpack.c.l.b16 %v3684
    %v3724 = vunpack.c.l.b16 %v3685
    %v3725 = vunpack.c.l.b16 %v3686
    %v3726 = vunpack.c.l.b16 %v3687
    %v3727 = vunpack.c.l.b16 %v3688
    %v3728 = vpack.c.b16 %v3713, %v3712
    %v3729 = vpack.c.b16 %v3715, %v3714
    %v3730 = vpack.c.b16 %v3717, %v3716
    %v3731 = vpack.c.b16 %v3719, %v3718
    %v3732 = vpack.c.b16 %v3721, %v3720
    %v3733 = vpack.c.b16 %v3723, %v3722
    %v3734 = vpack.c.b16 %v3725, %v3724
    %v3735 = vpack.c.b16 %v3727, %v3726
    %3744 = vmatprep.subr.bf16.mxu0 0
    %3745 = vmatpush1.bf16.msra.mxu0 %v3728
    %3746 = vmatprep.subr.bf16.mxu0 0
    %3747 = vmatpush1.bf16.msra.mxu0 %v3729
    %3748 = vmatprep.subr.bf16.mxu0 0
    %3749 = vmatpush1.bf16.msra.mxu0 %v3730
    %3750 = vmatprep.subr.bf16.mxu0 0
    %3751 = vmatpush1.bf16.msra.mxu0 %v3731
    %3752 = vmatprep.subr.bf16.mxu0 0
    %3753 = vmatpush1.bf16.msra.mxu0 %v3732
    %3754 = vmatprep.subr.bf16.mxu0 0
    %3755 = vmatpush1.bf16.msra.mxu0 %v3733
    %3756 = vmatprep.subr.bf16.mxu0 0
    %3757 = vmatpush1.bf16.msra.mxu0 %v3734
    %3758 = vmatprep.subr.bf16.mxu0 0
    %3759 = vmatpush1.bf16.msra.mxu0 %v3735
    %3760 = vmatprep.subr.bf16.mxu0 0
    %3761 = vmatpush1.bf16.msra.mxu0 0
    %3762 = vmatprep.subr.bf16.mxu0 0
    %3763 = vmatpush1.bf16.msra.mxu0 0
    %3764 = vmatprep.subr.bf16.mxu0 0
    %3765 = vmatpush1.bf16.msra.mxu0 0
    %3766 = vmatprep.subr.bf16.mxu0 0
    %3767 = vmatpush1.bf16.msra.mxu0 0
    %3768 = vmatprep.subr.bf16.mxu0 0
    %3769 = vmatpush1.bf16.msra.mxu0 0
    %3770 = vmatprep.subr.bf16.mxu0 0
    %3771 = vmatpush1.bf16.msra.mxu0 0
    %3772 = vmatprep.subr.bf16.mxu0 0
    %3773 = vmatpush1.bf16.msra.mxu0 0
    %3774 = vmatprep.subr.bf16.mxu0 0
    %3775 = vmatpush1.bf16.msra.mxu0 0
    %3776 = vmatprep.mubr.bf16.mxu0 0
    %3777 = vmatmul.mubr.bf16.gmra.mrb[0].mxu0 %v3672
    %v3778 = vpop.f32.mrb[0].mxu0
    %v3779 = vadd.f32 %v3694, %v3778
    %v3780 = vpop.f32.mrb[0].mxu0
    %v3781 = vpop.f32.mrb[0].mxu0
    %v3782 = vpop.f32.mrb[0].mxu0
    %3783 = vdwg.mxu0
    %3784 = vst [vmem:[#allocation20] sm:$0xff] %v3779
    // Predicated region
    $region90: #{predictor1_forward.1} parent=1 // pred_check
      _
    $region91: #{predictor1_forward.1} parent=1 // pred_check_branch
      %3786 = sbr.rel (0) target = $region93
    $region92: #{predictor1_forward.1} parent=1 // pred_region
      %s3788 = ssub.s32 128, 128
      %3789 = vsyncadd [#allocation4], %s3788
      %s3791 = sshll.u32 [#allocation20], 4
      %s3792 = int_to_ptr.vmem [resolvable:$true] %s3791
      %3794 = dma.vmem_to_hbm [thread:$0]  %s3792, 128, %s11, [#allocation4]
    $region93: #{predictor1_forward.1} parent=1 // pred_fallthru
      _
    // Predicated region
    $region94: #{predictor1_forward.1} parent=1 // pred_check
      _
    $region95: #{predictor1_forward.1} parent=1 // pred_check_branch
      %3796 = sbr.rel (0) target = $region97
    $region96: #{predictor1_forward.1} parent=1 // pred_region
      %3797 = dma.done [#allocation4], 128
    $region97: #{predictor1_forward.1} parent=1 // pred_fallthru
      _
    %3798 = vsyncpa [#allocation3], 1
    %3799 = vsyncpa [#allocation6], 1
    %3800 = vsyncpa [#allocation9], 1
    %3801 = vsyncpa [#allocation12], 1
    %3802 = vsyncpa [#allocation15], 1
    %3803 = vsyncpa [#allocation18], 1
    %3804 = vsyncpa [#allocation4], 1

</llo_original>
